<compile_context>
chip_gen: v5e
topology: v5e:2x2
jax: 0.10.0
libtpu: 0.0.40
codegen_flags: <defaults>
</compile_context>

<pallas_src>
import math
import functools

import jax
import jax.numpy as jnp
from jax.experimental import pallas as pl
from jax.experimental.pallas import tpu as pltpu


# ---------------------------------------------------------------------------
# Fused kernel
# ---------------------------------------------------------------------------

def _layer_norm_c(y, g, b, eps):
    """LayerNorm over the channel (sublane) axis of a [C, T] slab."""
    mean = jnp.mean(y, axis=0, keepdims=True)
    var = jnp.mean(jnp.square(y - mean), axis=0, keepdims=True)
    return (y - mean) * jax.lax.rsqrt(var + eps) * g + b


def _diffusion_kernel(len_ref,
                      feat_ref, encs_ref, step_ref,
                      pre_w, pre_b, pre_g, pre_bt,
                      ep_w, ep_b, f1_w, f1_b, f2_w, f2_b, en_g, en_bt,
                      wcat_ref, bcat_ref, post_w, post_b,
                      o_ref,
                      x_sc, c_sc,
                      *, stack, K, dilation, pad, T, Tp, D, eps):
    """Whole Diffusion_Network trunk for one batch element; state stays in vregs."""
    b = pl.program_id(0)
    length = len_ref[b]                                         # scalar from SMEM

    col = jax.lax.broadcasted_iota(jnp.int32, (1, Tp), 1)
    lmask = (col < length).astype(jnp.float32)                  # torch `masks`
    tvm = (col < T).astype(jnp.float32)                         # conv zero-padding mask

    # ---- prenet: Conv1d(codec->D, k=1) -> channel LayerNorm -> SiLU ----------
    f = feat_ref[0].astype(jnp.bfloat16)                        # [codec, T]
    y = jnp.dot(pre_w[...], f, preferred_element_type=jnp.float32) + pre_b[...]
    y = _layer_norm_c(y, pre_g[...], pre_bt[...], eps)
    y = y * jax.nn.sigmoid(y)                                   # SiLU
    x_sc[...] = jnp.zeros_like(x_sc)                            # zero-pad T -> Tp in VMEM
    x_sc[:, :T] = y
    x = x_sc[...]                                               # [D, Tp] f32 residual

    # ---- encoding branch: prenet -> FFN(SiLU) -> +residual -> LayerNorm ------
    e = encs_ref[0].astype(jnp.bfloat16)                        # [E, T]
    r = jnp.dot(ep_w[...], e, preferred_element_type=jnp.float32) + ep_b[...]
    h = jnp.dot(f1_w[...], r.astype(jnp.bfloat16),
                preferred_element_type=jnp.float32) + f1_b[...]
    h = h * jax.nn.sigmoid(h)                                   # SiLU
    h = jnp.dot(f2_w[...], h.astype(jnp.bfloat16),
                preferred_element_type=jnp.float32) + f2_b[...]
    yc = _layer_norm_c(h + r, en_g[...], en_bt[...], eps)
    c_sc[...] = jnp.zeros_like(c_sc)
    c_sc[:, :T] = yc
    enc_bf = c_sc[...].astype(jnp.bfloat16)                     # loop-invariant X_cat rows

    step_all = step_ref[0]                                      # [D, stack]  f32
    bcat_all = bcat_ref[...]                                    # [2D, stack] f32

    # ---- WaveNet stack (statically unrolled, everything in vregs) ------------
    skip_acc = jnp.zeros((D, Tp), jnp.float32)
    for l in range(stack):
        s_l = step_all[:, l:l + 1]                              # hoisted per-layer consts
        b_l = bcat_all[:, l:l + 1]
        q = (x + s_l) * tvm                                     # masked cols act as 0-pad
        taps = []
        for k in range(K):                                      # dilated taps via XLU roll
            shift = (pad - k * dilation) % Tp
            tap = pltpu.roll(q, shift=shift, axis=1) if shift else q
            taps.append(tap.astype(jnp.bfloat16))
        # X_cat built in registers: [tap_0; ...; tap_{K-1}; conditions]
        xcat = jnp.concatenate(taps + [enc_bf], axis=0)         # [(K+1)*D, Tp] bf16
        # single fused MXU contraction: dilated conv taps + condition 1x1 conv
        acc = jnp.dot(wcat_ref[l], xcat, preferred_element_type=jnp.float32) + b_l
        gate = jnp.tanh(acc[:D]) * jax.nn.sigmoid(acc[D:])      # Fused_Gate chunk order
        skip = gate * lmask                                     # masked gate feeds both
        skip_acc = skip_acc + skip                              # skip and residual paths
        x = x + skip

    # ---- postnet: SiLU -> Conv1d(D->codec, k=1) -> mask ----------------------
    y = skip_acc * (1.0 / math.sqrt(stack))
    y = y * jax.nn.sigmoid(y)
    out = jnp.dot(post_w[...], y.astype(jnp.bfloat16),
                  preferred_element_type=jnp.float32) + post_b[...]
    o_ref[0] = (out * lmask)[:, :T]                             # store only valid columns


# ---------------------------------------------------------------------------
# Forward pass
# ---------------------------------------------------------------------------

def diffusion_network_forward(params, features, encodings, lengths,
                              speech_prompts, diffusion_steps, *, hp):
    # TODO(synk): LinearAttention/FiLM (and the pre_attention whose output only feeds
    # it) is inactive for Apply_in_Stack > Stack; it is skipped rather than faked.
    del speech_prompts

    B, codec, T = features.shape
    E = encodings.shape[1]
    D = hp['Diffusion_Size']
    K = hp['Kernel_Size']
    dil = hp['Dilation']
    stack = hp['Stack']
    H = params['enc_ffn_w1'].shape[0]
    pad = (K - 1) * dil // 2
    assert 2 * pad == (K - 1) * dil, "kernel assumes symmetric 'same' padding"
    Tp = 128 * pl.cdiv(T + pad, 128)            # lane-dense internal width (>= conv halo)
    assert Tp >= T + pad

    # ---- diffusion-step branch (time length 1 -> plain JAX, no kernel) -------
    s = (diffusion_steps.astype(jnp.float32) / hp['Max_Step'])[:, None]       # [B, 1]
    emb = s * params['step_emb_w'][None, :] * (2.0 * math.pi)
    step_emb = jnp.concatenate([s, jnp.sin(emb), jnp.cos(emb)], axis=1)       # [B, D+1]
    step_res = step_emb[:, 1:]
    h = step_emb @ params['step_ffn_w1'].T + params['step_ffn_b1']
    h = h * jax.nn.sigmoid(h)                                                 # SiLU
    h = h @ params['step_ffn_w2'].T + params['step_ffn_b2']
    st = h + step_res
    mean = jnp.mean(st, axis=1, keepdims=True)
    var = jnp.mean(jnp.square(st - mean), axis=1, keepdims=True)
    st = (st - mean) * jax.lax.rsqrt(var + 1e-5)
    st = st * params['step_ln_g'][None, :] + params['step_ln_b'][None, :]     # [B, D]
    # per-layer diffusion_step 1x1 convs hoisted out of the kernel
    step_out = (jnp.einsum('ldc,bc->bdl', params['wn_w_step'], st)
                + params['wn_b_step'].T[None])                                # [B, D, stack]

    kern = functools.partial(_diffusion_kernel, stack=stack, K=K, dilation=dil,
                             pad=pad, T=T, Tp=Tp, D=D, eps=1e-5)

    per_b = lambda i, lens: (i, 0, 0)
    full2 = lambda i, lens: (0, 0)
    full3 = lambda i, lens: (0, 0, 0)

    grid_spec = pltpu.PrefetchScalarGridSpec(
        num_scalar_prefetch=1,                               # lengths -> SMEM
        grid=(B,),
        in_specs=[
            pl.BlockSpec((1, codec, T), per_b),              # features (unpadded)
            pl.BlockSpec((1, E, T), per_b),                  # encodings (unpadded)
            pl.BlockSpec((1, D, stack), per_b),              # per-layer step vectors
            pl.BlockSpec((D, codec), full2),                 # prenet conv W  (bf16)
            pl.BlockSpec((D, 1), full2),                     # prenet conv b
            pl.BlockSpec((D, 1), full2),                     # prenet LN gamma
            pl.BlockSpec((D, 1), full2),                     # prenet LN beta
            pl.BlockSpec((D, E), full2),                     # encoding_prenet W (bf16)
            pl.BlockSpec((D, 1), full2),                     # encoding_prenet b
            pl.BlockSpec((H, D), full2),                     # encoding_ffn W1 (bf16)
            pl.BlockSpec((H, 1), full2),                     # encoding_ffn b1
            pl.BlockSpec((D, H), full2),                     # encoding_ffn W2 (bf16)
            pl.BlockSpec((D, 1), full2),                     # encoding_ffn b2
            pl.BlockSpec((D, 1), full2),                     # encoding LN gamma
            pl.BlockSpec((D, 1), full2),                     # encoding LN beta
            pl.BlockSpec((stack, 2 * D, (K + 1) * D), full3),  # W_cat (bf16)
            pl.BlockSpec((2 * D, stack), full2),             # conv+condition biases
            pl.BlockSpec((codec, D), full2),                 # postnet W (bf16)
            pl.BlockSpec((codec, 1), full2),                 # postnet b
        ],
        out_specs=pl.BlockSpec((1, codec, T), per_b),
        scratch_shapes=[pltpu.VMEM((D, Tp), jnp.float32),    # lane-padded residual x
                        pltpu.VMEM((D, Tp), jnp.float32)],   # lane-padded conditions
    )

    return pl.pallas_call(
        kern,
        out_shape=jax.ShapeDtypeStruct((B, codec, T), jnp.float32),
        grid_spec=grid_spec,
        compiler_params=pltpu.CompilerParams(
            dimension_semantics=("parallel",),
            vmem_limit_bytes=32 * 1024 * 1024),
    )(lengths.astype(jnp.int32), features, encodings, step_out,
      params['prenet_w'], params['prenet_b'], params['prenet_ln_g'], params['prenet_ln_b'],
      params['enc_prenet_w'], params['enc_prenet_b'],
      params['enc_ffn_w1'], params['enc_ffn_b1'],
      params['enc_ffn_w2'], params['enc_ffn_b2'],
      params['enc_ln_g'], params['enc_ln_b'],
      params['wn_w_cat'], params['wn_b_cat'],
      params['post_w'], params['post_b'])


# ---------------------------------------------------------------------------
# Deterministic parameter init (weights pre-packed / pre-cast for the kernel)
# ---------------------------------------------------------------------------

def init_params(key, hp):
    D = hp['Diffusion_Size']
    codec = hp['Audio_Codec_Size']
    E = hp['Encoder_Size']
    K = hp['Kernel_Size']
    stack = hp['Stack']

    keys = iter(jax.random.split(key, 64))

    def nrm(shape, scale=0.1):
        return scale * jax.random.normal(next(keys), shape, dtype=jnp.float32)

    def bf16(x):
        return x.astype(jnp.bfloat16)

    # WaveNet weights packed for the fused kernel:
    #   wn_w_cat[l][:, k*D:(k+1)*D] <-> torch conv.weight[:, :, k] of layer l
    #   wn_w_cat[l][:, K*D:]        <-> torch condition.weight[:, :, 0]
    #   wn_b_cat[:, l]              <-> conv.bias + condition.bias of layer l
    return {
        'prenet_w': bf16(nrm((D, codec))), 'prenet_b': nrm((D, 1)),
        'prenet_ln_g': jnp.ones((D, 1), jnp.float32),
        'prenet_ln_b': jnp.zeros((D, 1), jnp.float32),
        'enc_prenet_w': bf16(nrm((D, E))), 'enc_prenet_b': nrm((D, 1)),
        'enc_ffn_w1': bf16(nrm((4 * D, D))), 'enc_ffn_b1': nrm((4 * D, 1)),
        'enc_ffn_w2': bf16(nrm((D, 4 * D))), 'enc_ffn_b2': nrm((D, 1)),
        'enc_ln_g': jnp.ones((D, 1), jnp.float32),
        'enc_ln_b': jnp.zeros((D, 1), jnp.float32),
        # diffusion-step branch (plain JAX, f32)
        'step_emb_w': nrm((D // 2,), scale=1.0),
        'step_ffn_w1': nrm((4 * D, D + 1)), 'step_ffn_b1': nrm((4 * D,)),
        'step_ffn_w2': nrm((D, 4 * D)), 'step_ffn_b2': nrm((D,)),
        'step_ln_g': jnp.ones((D,), jnp.float32),
        'step_ln_b': jnp.zeros((D,), jnp.float32),
        'wn_w_cat': bf16(nrm((stack, 2 * D, (K + 1) * D))),
        'wn_b_cat': nrm((2 * D, stack)),
        'wn_w_step': nrm((stack, D, D)),
        'wn_b_step': nrm((stack, D)),
        # NOTE: reference postnet conv is zero-initialized; random here so the
        # runtime check is non-trivial.
        'post_w': bf16(nrm((codec, D))), 'post_b': nrm((codec, 1)),
    }


# ---------------------------------------------------------------------------

if __name__ == "__main__":
    hp = dict(
        Audio_Codec_Size=8,
        Diffusion_Size=32,
        Encoder_Size=16,
        Prompt_Size=16,
        Kernel_Size=3,
        Dilation=1,
        Stack=4,            # Attention.Apply_in_Stack = 5 > Stack -> no FiLM layer active
        Max_Step=1000,
    )

    key = jax.random.PRNGKey(0)
    pkey, fkey, ekey, skey = jax.random.split(key, 4)
    params = init_params(pkey, hp)

    B, T, T_prompt = 2, 16, 8
    features = jax.random.normal(fkey, (B, hp['Audio_Codec_Size'], T), jnp.float32)
    encodings = jax.random.normal(ekey, (B, hp['Encoder_Size'], T), jnp.float32)
    speech_prompts = jax.random.normal(skey, (B, hp['Prompt_Size'], T_prompt), jnp.float32)
    lengths = jnp.array([16, 12], dtype=jnp.int32)
    diffusion_steps = jnp.array([3, 250], dtype=jnp.int32)

    fwd = jax.jit(functools.partial(diffusion_network_forward, hp=hp))
    out = fwd(params, features, encodings, lengths, speech_prompts, diffusion_steps)
    jax.block_until_ready(out)
    assert out.shape == (B, hp['Audio_Codec_Size'], T), out.shape
    assert bool(jnp.all(jnp.isfinite(out)))
    print("KERNEL_OK")
</pallas_src>

<mosaic_0001>
module attributes {stable_mosaic.version = 11 : i64} {
  func.func @_diffusion_kernel(%arg0: i32, %arg1: memref<2xi32, #tpu.memory_space<smem>>, %arg2: memref<1x8x16xf32, #tpu.memory_space<vmem>>, %arg3: memref<1x16x16xf32, #tpu.memory_space<vmem>>, %arg4: memref<1x32x4xf32, #tpu.memory_space<vmem>>, %arg5: memref<32x8xbf16, #tpu.memory_space<vmem>>, %arg6: memref<32x1xf32, #tpu.memory_space<vmem>>, %arg7: memref<32x1xf32, #tpu.memory_space<vmem>>, %arg8: memref<32x1xf32, #tpu.memory_space<vmem>>, %arg9: memref<32x16xbf16, #tpu.memory_space<vmem>>, %arg10: memref<32x1xf32, #tpu.memory_space<vmem>>, %arg11: memref<128x32xbf16, #tpu.memory_space<vmem>>, %arg12: memref<128x1xf32, #tpu.memory_space<vmem>>, %arg13: memref<32x128xbf16, #tpu.memory_space<vmem>>, %arg14: memref<32x1xf32, #tpu.memory_space<vmem>>, %arg15: memref<32x1xf32, #tpu.memory_space<vmem>>, %arg16: memref<32x1xf32, #tpu.memory_space<vmem>>, %arg17: memref<4x64x128xbf16, #tpu.memory_space<vmem>>, %arg18: memref<64x4xf32, #tpu.memory_space<vmem>>, %arg19: memref<8x32xbf16, #tpu.memory_space<vmem>>, %arg20: memref<8x1xf32, #tpu.memory_space<vmem>>, %arg21: memref<1x8x16xf32, #tpu.memory_space<vmem>>, %arg22: memref<32x128xf32, #tpu.memory_space<vmem>>, %arg23: memref<32x128xf32, #tpu.memory_space<vmem>>) attributes {dimension_semantics = [#tpu.dimension_semantics<parallel>], iteration_bounds = array<i64: 2>, scalar_prefetch = 1 : i64, scratch_operands = 2 : i64, tpu.core_type = #tpu.core_type<tc>, window_params = [{transform_indices = @transform_0, window_bounds = array<i64: 1, 8, 16>}, {transform_indices = @transform_1, window_bounds = array<i64: 1, 16, 16>}, {transform_indices = @transform_2, window_bounds = array<i64: 1, 32, 4>}, {pipeline_mode = #tpu.pipeline_mode<synchronous>, transform_indices = @transform_3, window_bounds = array<i64: 32, 8>}, {pipeline_mode = #tpu.pipeline_mode<synchronous>, transform_indices = @transform_4, window_bounds = array<i64: 32, 1>}, {pipeline_mode = #tpu.pipeline_mode<synchronous>, transform_indices = @transform_5, window_bounds = array<i64: 32, 1>}, {pipeline_mode = #tpu.pipeline_mode<synchronous>, transform_indices = @transform_6, window_bounds = array<i64: 32, 1>}, {pipeline_mode = #tpu.pipeline_mode<synchronous>, transform_indices = @transform_7, window_bounds = array<i64: 32, 16>}, {pipeline_mode = #tpu.pipeline_mode<synchronous>, transform_indices = @transform_8, window_bounds = array<i64: 32, 1>}, {pipeline_mode = #tpu.pipeline_mode<synchronous>, transform_indices = @transform_9, window_bounds = array<i64: 128, 32>}, {pipeline_mode = #tpu.pipeline_mode<synchronous>, transform_indices = @transform_10, window_bounds = array<i64: 128, 1>}, {pipeline_mode = #tpu.pipeline_mode<synchronous>, transform_indices = @transform_11, window_bounds = array<i64: 32, 128>}, {pipeline_mode = #tpu.pipeline_mode<synchronous>, transform_indices = @transform_12, window_bounds = array<i64: 32, 1>}, {pipeline_mode = #tpu.pipeline_mode<synchronous>, transform_indices = @transform_13, window_bounds = array<i64: 32, 1>}, {pipeline_mode = #tpu.pipeline_mode<synchronous>, transform_indices = @transform_14, window_bounds = array<i64: 32, 1>}, {pipeline_mode = #tpu.pipeline_mode<synchronous>, transform_indices = @transform_15, window_bounds = array<i64: 4, 64, 128>}, {pipeline_mode = #tpu.pipeline_mode<synchronous>, transform_indices = @transform_16, window_bounds = array<i64: 64, 4>}, {pipeline_mode = #tpu.pipeline_mode<synchronous>, transform_indices = @transform_17, window_bounds = array<i64: 8, 32>}, {pipeline_mode = #tpu.pipeline_mode<synchronous>, transform_indices = @transform_18, window_bounds = array<i64: 8, 1>}, {transform_indices = @transform_19, window_bounds = array<i64: 1, 8, 16>}]} {
    %0 = arith.index_cast %arg0 : i32 to index
    %1 = memref.load %arg1[%0] : memref<2xi32, #tpu.memory_space<smem>>
    %2 = tpu.iota {dimensions = array<i32: 1>} : vector<1x128xi32>
    %3 = vector.broadcast %1 : i32 to vector<1x128xi32>
    %4 = arith.cmpi slt, %2, %3 : vector<1x128xi32>
    %5 = arith.extui %4 : vector<1x128xi1> to vector<1x128xi32>
    %6 = arith.sitofp %5 : vector<1x128xi32> to vector<1x128xf32>
    %c16_i32 = arith.constant 16 : i32
    %7 = vector.broadcast %c16_i32 : i32 to vector<1x128xi32>
    %8 = arith.cmpi slt, %2, %7 : vector<1x128xi32>
    %9 = arith.extui %8 : vector<1x128xi1> to vector<1x128xi32>
    %10 = arith.sitofp %9 : vector<1x128xi32> to vector<1x128xf32>
    %c0 = arith.constant 0 : index
    %c0_0 = arith.constant 0 : index
    %c0_1 = arith.constant 0 : index
    %11 = vector.load %arg2[%c0, %c0_0, %c0_1] : memref<1x8x16xf32, #tpu.memory_space<vmem>>, vector<1x8x16xf32>
    %12 = vector.shape_cast %11 : vector<1x8x16xf32> to vector<8x16xf32>
    %13 = arith.truncf %12 : vector<8x16xf32> to vector<8x16xbf16>
    %c0_2 = arith.constant 0 : index
    %c0_3 = arith.constant 0 : index
    %14 = vector.load %arg5[%c0_2, %c0_3] : memref<32x8xbf16, #tpu.memory_space<vmem>>, vector<32x8xbf16>
    %cst = arith.constant dense<0.000000e+00> : vector<32x16xf32>
    %15 = tpu.matmul %14, %13, %cst {dimension_numbers = #tpu.dot_dimension_numbers<[1], [0], [0], [1], [0, 0, 1, 1], [], []>} : vector<32x8xbf16>, vector<8x16xbf16>, vector<32x16xf32> -> vector<32x16xf32>
    %c0_4 = arith.constant 0 : index
    %c0_5 = arith.constant 0 : index
    %16 = vector.load %arg6[%c0_4, %c0_5] : memref<32x1xf32, #tpu.memory_space<vmem>>, vector<32x1xf32>
    %17 = vector.broadcast %16 : vector<32x1xf32> to vector<32x16xf32>
    %18 = arith.addf %15, %17 : vector<32x16xf32>
    %c0_6 = arith.constant 0 : index
    %c0_7 = arith.constant 0 : index
    %19 = vector.load %arg7[%c0_6, %c0_7] : memref<32x1xf32, #tpu.memory_space<vmem>>, vector<32x1xf32>
    %c0_8 = arith.constant 0 : index
    %c0_9 = arith.constant 0 : index
    %20 = vector.load %arg8[%c0_8, %c0_9] : memref<32x1xf32, #tpu.memory_space<vmem>>, vector<32x1xf32>
    %cst_10 = arith.constant dense<0.000000e+00> : vector<16xf32>
    %21 = vector.multi_reduction <add>, %18, %cst_10 [0] : vector<32x16xf32> to vector<16xf32>
    %22 = vector.shape_cast %21 : vector<16xf32> to vector<1x16xf32>
    %cst_11 = arith.constant 3.200000e+01 : f32
    %23 = vector.broadcast %cst_11 : f32 to vector<1x16xf32>
    %24 = arith.divf %22, %23 : vector<1x16xf32>
    %25 = vector.broadcast %24 : vector<1x16xf32> to vector<32x16xf32>
    %26 = arith.subf %18, %25 : vector<32x16xf32>
    %27 = arith.mulf %26, %26 : vector<32x16xf32>
    %cst_12 = arith.constant dense<0.000000e+00> : vector<16xf32>
    %28 = vector.multi_reduction <add>, %27, %cst_12 [0] : vector<32x16xf32> to vector<16xf32>
    %29 = vector.shape_cast %28 : vector<16xf32> to vector<1x16xf32>
    %cst_13 = arith.constant 3.200000e+01 : f32
    %30 = vector.broadcast %cst_13 : f32 to vector<1x16xf32>
    %31 = arith.divf %29, %30 : vector<1x16xf32>
    %32 = vector.broadcast %24 : vector<1x16xf32> to vector<32x16xf32>
    %33 = arith.subf %18, %32 : vector<32x16xf32>
    %cst_14 = arith.constant 9.99999974E-6 : f32
    %34 = vector.broadcast %cst_14 : f32 to vector<1x16xf32>
    %35 = arith.addf %31, %34 : vector<1x16xf32>
    %36 = math.rsqrt %35 : vector<1x16xf32>
    %37 = vector.broadcast %36 : vector<1x16xf32> to vector<32x16xf32>
    %38 = arith.mulf %33, %37 : vector<32x16xf32>
    %39 = vector.broadcast %19 : vector<32x1xf32> to vector<32x16xf32>
    %40 = arith.mulf %38, %39 : vector<32x16xf32>
    %41 = vector.broadcast %20 : vector<32x1xf32> to vector<32x16xf32>
    %42 = arith.addf %40, %41 : vector<32x16xf32>
    %43 = arith.negf %42 : vector<32x16xf32>
    %44 = math.exp %43 : vector<32x16xf32>
    %cst_15 = arith.constant 1.000000e+00 : f32
    %45 = vector.broadcast %cst_15 : f32 to vector<32x16xf32>
    %46 = arith.addf %45, %44 : vector<32x16xf32>
    %47 = arith.divf %45, %46 : vector<32x16xf32>
    %48 = arith.mulf %42, %47 : vector<32x16xf32>
    %cst_16 = arith.constant 0.000000e+00 : f32
    %49 = vector.broadcast %cst_16 : f32 to vector<32x128xf32>
    %c0_17 = arith.constant 0 : index
    %c0_18 = arith.constant 0 : index
    %50 = vector.load %arg22[%c0_17, %c0_18] : memref<32x128xf32, #tpu.memory_space<vmem>>, vector<32x128xf32>
    tpu.vector_store %arg22[%c0_17, %c0_18], %49 {strides = array<i32>} : memref<32x128xf32, #tpu.memory_space<vmem>>, vector<32x128xf32>,
    %c0_19 = arith.constant 0 : index
    %c0_20 = arith.constant 0 : index
    %51 = vector.load %arg22[%c0_19, %c0_20] : memref<32x128xf32, #tpu.memory_space<vmem>>, vector<32x16xf32>
    tpu.vector_store %arg22[%c0_19, %c0_20], %48 {strides = array<i32>} : memref<32x128xf32, #tpu.memory_space<vmem>>, vector<32x16xf32>,
    %c0_21 = arith.constant 0 : index
    %c0_22 = arith.constant 0 : index
    %52 = vector.load %arg22[%c0_21, %c0_22] : memref<32x128xf32, #tpu.memory_space<vmem>>, vector<32x128xf32>
    %c0_23 = arith.constant 0 : index
    %c0_24 = arith.constant 0 : index
    %c0_25 = arith.constant 0 : index
    %53 = vector.load %arg3[%c0_23, %c0_24, %c0_25] : memref<1x16x16xf32, #tpu.memory_space<vmem>>, vector<1x16x16xf32>
    %54 = vector.shape_cast %53 : vector<1x16x16xf32> to vector<16x16xf32>
    %55 = arith.truncf %54 : vector<16x16xf32> to vector<16x16xbf16>
    %c0_26 = arith.constant 0 : index
    %c0_27 = arith.constant 0 : index
    %56 = vector.load %arg9[%c0_26, %c0_27] : memref<32x16xbf16, #tpu.memory_space<vmem>>, vector<32x16xbf16>
    %cst_28 = arith.constant dense<0.000000e+00> : vector<32x16xf32>
    %57 = tpu.matmul %56, %55, %cst_28 {dimension_numbers = #tpu.dot_dimension_numbers<[1], [0], [0], [1], [0, 0, 1, 1], [], []>} : vector<32x16xbf16>, vector<16x16xbf16>, vector<32x16xf32> -> vector<32x16xf32>
    %c0_29 = arith.constant 0 : index
    %c0_30 = arith.constant 0 : index
    %58 = vector.load %arg10[%c0_29, %c0_30] : memref<32x1xf32, #tpu.memory_space<vmem>>, vector<32x1xf32>
    %59 = vector.broadcast %58 : vector<32x1xf32> to vector<32x16xf32>
    %60 = arith.addf %57, %59 : vector<32x16xf32>
    %c0_31 = arith.constant 0 : index
    %c0_32 = arith.constant 0 : index
    %61 = vector.load %arg11[%c0_31, %c0_32] : memref<128x32xbf16, #tpu.memory_space<vmem>>, vector<128x32xbf16>
    %62 = arith.truncf %60 : vector<32x16xf32> to vector<32x16xbf16>
    %cst_33 = arith.constant dense<0.000000e+00> : vector<128x16xf32>
    %63 = tpu.matmul %61, %62, %cst_33 {dimension_numbers = #tpu.dot_dimension_numbers<[1], [0], [0], [1], [0, 0, 1, 1], [], []>} : vector<128x32xbf16>, vector<32x16xbf16>, vector<128x16xf32> -> vector<128x16xf32>
    %c0_34 = arith.constant 0 : index
    %c0_35 = arith.constant 0 : index
    %64 = vector.load %arg12[%c0_34, %c0_35] : memref<128x1xf32, #tpu.memory_space<vmem>>, vector<128x1xf32>
    %65 = vector.broadcast %64 : vector<128x1xf32> to vector<128x16xf32>
    %66 = arith.addf %63, %65 : vector<128x16xf32>
    %67 = arith.negf %66 : vector<128x16xf32>
    %68 = math.exp %67 : vector<128x16xf32>
    %cst_36 = arith.constant 1.000000e+00 : f32
    %69 = vector.broadcast %cst_36 : f32 to vector<128x16xf32>
    %70 = arith.addf %69, %68 : vector<128x16xf32>
    %71 = arith.divf %69, %70 : vector<128x16xf32>
    %72 = arith.mulf %66, %71 : vector<128x16xf32>
    %c0_37 = arith.constant 0 : index
    %c0_38 = arith.constant 0 : index
    %73 = vector.load %arg13[%c0_37, %c0_38] : memref<32x128xbf16, #tpu.memory_space<vmem>>, vector<32x128xbf16>
    %74 = arith.truncf %72 : vector<128x16xf32> to vector<128x16xbf16>
    %cst_39 = arith.constant dense<0.000000e+00> : vector<32x16xf32>
    %75 = tpu.matmul %73, %74, %cst_39 {dimension_numbers = #tpu.dot_dimension_numbers<[1], [0], [0], [1], [0, 0, 1, 1], [], []>} : vector<32x128xbf16>, vector<128x16xbf16>, vector<32x16xf32> -> vector<32x16xf32>
    %c0_40 = arith.constant 0 : index
    %c0_41 = arith.constant 0 : index
    %76 = vector.load %arg14[%c0_40, %c0_41] : memref<32x1xf32, #tpu.memory_space<vmem>>, vector<32x1xf32>
    %77 = vector.broadcast %76 : vector<32x1xf32> to vector<32x16xf32>
    %78 = arith.addf %75, %77 : vector<32x16xf32>
    %79 = arith.addf %78, %60 : vector<32x16xf32>
    %c0_42 = arith.constant 0 : index
    %c0_43 = arith.constant 0 : index
    %80 = vector.load %arg15[%c0_42, %c0_43] : memref<32x1xf32, #tpu.memory_space<vmem>>, vector<32x1xf32>
    %c0_44 = arith.constant 0 : index
    %c0_45 = arith.constant 0 : index
    %81 = vector.load %arg16[%c0_44, %c0_45] : memref<32x1xf32, #tpu.memory_space<vmem>>, vector<32x1xf32>
    %cst_46 = arith.constant dense<0.000000e+00> : vector<16xf32>
    %82 = vector.multi_reduction <add>, %79, %cst_46 [0] : vector<32x16xf32> to vector<16xf32>
    %83 = vector.shape_cast %82 : vector<16xf32> to vector<1x16xf32>
    %cst_47 = arith.constant 3.200000e+01 : f32
    %84 = vector.broadcast %cst_47 : f32 to vector<1x16xf32>
    %85 = arith.divf %83, %84 : vector<1x16xf32>
    %86 = vector.broadcast %85 : vector<1x16xf32> to vector<32x16xf32>
    %87 = arith.subf %79, %86 : vector<32x16xf32>
    %88 = arith.mulf %87, %87 : vector<32x16xf32>
    %cst_48 = arith.constant dense<0.000000e+00> : vector<16xf32>
    %89 = vector.multi_reduction <add>, %88, %cst_48 [0] : vector<32x16xf32> to vector<16xf32>
    %90 = vector.shape_cast %89 : vector<16xf32> to vector<1x16xf32>
    %cst_49 = arith.constant 3.200000e+01 : f32
    %91 = vector.broadcast %cst_49 : f32 to vector<1x16xf32>
    %92 = arith.divf %90, %91 : vector<1x16xf32>
    %93 = vector.broadcast %85 : vector<1x16xf32> to vector<32x16xf32>
    %94 = arith.subf %79, %93 : vector<32x16xf32>
    %cst_50 = arith.constant 9.99999974E-6 : f32
    %95 = vector.broadcast %cst_50 : f32 to vector<1x16xf32>
    %96 = arith.addf %92, %95 : vector<1x16xf32>
    %97 = math.rsqrt %96 : vector<1x16xf32>
    %98 = vector.broadcast %97 : vector<1x16xf32> to vector<32x16xf32>
    %99 = arith.mulf %94, %98 : vector<32x16xf32>
    %100 = vector.broadcast %80 : vector<32x1xf32> to vector<32x16xf32>
    %101 = arith.mulf %99, %100 : vector<32x16xf32>
    %102 = vector.broadcast %81 : vector<32x1xf32> to vector<32x16xf32>
    %103 = arith.addf %101, %102 : vector<32x16xf32>
    %cst_51 = arith.constant 0.000000e+00 : f32
    %104 = vector.broadcast %cst_51 : f32 to vector<32x128xf32>
    %c0_52 = arith.constant 0 : index
    %c0_53 = arith.constant 0 : index
    %105 = vector.load %arg23[%c0_52, %c0_53] : memref<32x128xf32, #tpu.memory_space<vmem>>, vector<32x128xf32>
    tpu.vector_store %arg23[%c0_52, %c0_53], %104 {strides = array<i32>} : memref<32x128xf32, #tpu.memory_space<vmem>>, vector<32x128xf32>,
    %c0_54 = arith.constant 0 : index
    %c0_55 = arith.constant 0 : index
    %106 = vector.load %arg23[%c0_54, %c0_55] : memref<32x128xf32, #tpu.memory_space<vmem>>, vector<32x16xf32>
    tpu.vector_store %arg23[%c0_54, %c0_55], %103 {strides = array<i32>} : memref<32x128xf32, #tpu.memory_space<vmem>>, vector<32x16xf32>,
    %c0_56 = arith.constant 0 : index
    %c0_57 = arith.constant 0 : index
    %107 = vector.load %arg23[%c0_56, %c0_57] : memref<32x128xf32, #tpu.memory_space<vmem>>, vector<32x128xf32>
    %108 = arith.truncf %107 : vector<32x128xf32> to vector<32x128xbf16>
    %c0_58 = arith.constant 0 : index
    %c0_59 = arith.constant 0 : index
    %c0_60 = arith.constant 0 : index
    %109 = vector.load %arg4[%c0_58, %c0_59, %c0_60] : memref<1x32x4xf32, #tpu.memory_space<vmem>>, vector<1x32x4xf32>
    %110 = vector.shape_cast %109 : vector<1x32x4xf32> to vector<32x4xf32>
    %c0_61 = arith.constant 0 : index
    %c0_62 = arith.constant 0 : index
    %111 = vector.load %arg18[%c0_61, %c0_62] : memref<64x4xf32, #tpu.memory_space<vmem>>, vector<64x4xf32>
    %cst_63 = arith.constant 0.000000e+00 : f32
    %112 = vector.broadcast %cst_63 : f32 to vector<32x128xf32>
    %113 = vector.extract_strided_slice %110 {offsets = [0, 0], sizes = [32, 1], strides = [1, 1]} : vector<32x4xf32> to vector<32x1xf32>
    %114 = vector.extract_strided_slice %111 {offsets = [0, 0], sizes = [64, 1], strides = [1, 1]} : vector<64x4xf32> to vector<64x1xf32>
    %115 = vector.broadcast %113 : vector<32x1xf32> to vector<32x128xf32>
    %116 = arith.addf %52, %115 : vector<32x128xf32>
    %117 = vector.broadcast %10 : vector<1x128xf32> to vector<32x128xf32>
    %118 = arith.mulf %116, %117 : vector<32x128xf32>
    %c1_i32 = arith.constant 1 : i32
    %119 = tpu.dynamic_rotate %118 by %c1_i32 dim 1 : vector<32x128xf32>, i32 -> vector<32x128xf32>
    %120 = arith.truncf %119 : vector<32x128xf32> to vector<32x128xbf16>
    %121 = arith.truncf %118 : vector<32x128xf32> to vector<32x128xbf16>
    %c127_i32 = arith.constant 127 : i32
    %122 = tpu.dynamic_rotate %118 by %c127_i32 dim 1 : vector<32x128xf32>, i32 -> vector<32x128xf32>
    %123 = arith.truncf %122 : vector<32x128xf32> to vector<32x128xbf16>
    %124 = tpu.concatenate %120, %121, %123, %108 in 0 : vector<32x128xbf16>, vector<32x128xbf16>, vector<32x128xbf16>, vector<32x128xbf16> -> vector<128x128xbf16>
    %c0_64 = arith.constant 0 : index
    %c0_65 = arith.constant 0 : index
    %c0_66 = arith.constant 0 : index
    %125 = vector.load %arg17[%c0_64, %c0_65, %c0_66] : memref<4x64x128xbf16, #tpu.memory_space<vmem>>, vector<1x64x128xbf16>
    %126 = vector.shape_cast %125 : vector<1x64x128xbf16> to vector<64x128xbf16>
    %cst_67 = arith.constant dense<0.000000e+00> : vector<64x128xf32>
    %127 = tpu.matmul %126, %124, %cst_67 {dimension_numbers = #tpu.dot_dimension_numbers<[1], [0], [0], [1], [0, 0, 1, 1], [], []>} : vector<64x128xbf16>, vector<128x128xbf16>, vector<64x128xf32> -> vector<64x128xf32>
    %128 = vector.broadcast %114 : vector<64x1xf32> to vector<64x128xf32>
    %129 = arith.addf %127, %128 : vector<64x128xf32>
    %130 = vector.extract_strided_slice %129 {offsets = [0, 0], sizes = [32, 128], strides = [1, 1]} : vector<64x128xf32> to vector<32x128xf32>
    %131 = math.tanh %130 : vector<32x128xf32>
    %132 = vector.extract_strided_slice %129 {offsets = [32, 0], sizes = [32, 128], strides = [1, 1]} : vector<64x128xf32> to vector<32x128xf32>
    %133 = arith.negf %132 : vector<32x128xf32>
    %134 = math.exp %133 : vector<32x128xf32>
    %cst_68 = arith.constant 1.000000e+00 : f32
    %135 = vector.broadcast %cst_68 : f32 to vector<32x128xf32>
    %136 = arith.addf %135, %134 : vector<32x128xf32>
    %137 = arith.divf %135, %136 : vector<32x128xf32>
    %138 = arith.mulf %131, %137 : vector<32x128xf32>
    %139 = vector.broadcast %6 : vector<1x128xf32> to vector<32x128xf32>
    %140 = arith.mulf %138, %139 : vector<32x128xf32>
    %141 = arith.addf %112, %140 : vector<32x128xf32>
    %142 = arith.addf %52, %140 : vector<32x128xf32>
    %143 = vector.extract_strided_slice %110 {offsets = [0, 1], sizes = [32, 1], strides = [1, 1]} : vector<32x4xf32> to vector<32x1xf32>
    %144 = vector.extract_strided_slice %111 {offsets = [0, 1], sizes = [64, 1], strides = [1, 1]} : vector<64x4xf32> to vector<64x1xf32>
    %145 = vector.broadcast %143 : vector<32x1xf32> to vector<32x128xf32>
    %146 = arith.addf %142, %145 : vector<32x128xf32>
    %147 = vector.broadcast %10 : vector<1x128xf32> to vector<32x128xf32>
    %148 = arith.mulf %146, %147 : vector<32x128xf32>
    %c1_i32_69 = arith.constant 1 : i32
    %149 = tpu.dynamic_rotate %148 by %c1_i32_69 dim 1 : vector<32x128xf32>, i32 -> vector<32x128xf32>
    %150 = arith.truncf %149 : vector<32x128xf32> to vector<32x128xbf16>
    %151 = arith.truncf %148 : vector<32x128xf32> to vector<32x128xbf16>
    %c127_i32_70 = arith.constant 127 : i32
    %152 = tpu.dynamic_rotate %148 by %c127_i32_70 dim 1 : vector<32x128xf32>, i32 -> vector<32x128xf32>
    %153 = arith.truncf %152 : vector<32x128xf32> to vector<32x128xbf16>
    %154 = tpu.concatenate %150, %151, %153, %108 in 0 : vector<32x128xbf16>, vector<32x128xbf16>, vector<32x128xbf16>, vector<32x128xbf16> -> vector<128x128xbf16>
    %c1 = arith.constant 1 : index
    %c0_71 = arith.constant 0 : index
    %c0_72 = arith.constant 0 : index
    %155 = vector.load %arg17[%c1, %c0_71, %c0_72] : memref<4x64x128xbf16, #tpu.memory_space<vmem>>, vector<1x64x128xbf16>
    %156 = vector.shape_cast %155 : vector<1x64x128xbf16> to vector<64x128xbf16>
    %cst_73 = arith.constant dense<0.000000e+00> : vector<64x128xf32>
    %157 = tpu.matmul %156, %154, %cst_73 {dimension_numbers = #tpu.dot_dimension_numbers<[1], [0], [0], [1], [0, 0, 1, 1], [], []>} : vector<64x128xbf16>, vector<128x128xbf16>, vector<64x128xf32> -> vector<64x128xf32>
    %158 = vector.broadcast %144 : vector<64x1xf32> to vector<64x128xf32>
    %159 = arith.addf %157, %158 : vector<64x128xf32>
    %160 = vector.extract_strided_slice %159 {offsets = [0, 0], sizes = [32, 128], strides = [1, 1]} : vector<64x128xf32> to vector<32x128xf32>
    %161 = math.tanh %160 : vector<32x128xf32>
    %162 = vector.extract_strided_slice %159 {offsets = [32, 0], sizes = [32, 128], strides = [1, 1]} : vector<64x128xf32> to vector<32x128xf32>
    %163 = arith.negf %162 : vector<32x128xf32>
    %164 = math.exp %163 : vector<32x128xf32>
    %cst_74 = arith.constant 1.000000e+00 : f32
    %165 = vector.broadcast %cst_74 : f32 to vector<32x128xf32>
    %166 = arith.addf %165, %164 : vector<32x128xf32>
    %167 = arith.divf %165, %166 : vector<32x128xf32>
    %168 = arith.mulf %161, %167 : vector<32x128xf32>
    %169 = vector.broadcast %6 : vector<1x128xf32> to vector<32x128xf32>
    %170 = arith.mulf %168, %169 : vector<32x128xf32>
    %171 = arith.addf %141, %170 : vector<32x128xf32>
    %172 = arith.addf %142, %170 : vector<32x128xf32>
    %173 = vector.extract_strided_slice %110 {offsets = [0, 2], sizes = [32, 1], strides = [1, 1]} : vector<32x4xf32> to vector<32x1xf32>
    %174 = vector.extract_strided_slice %111 {offsets = [0, 2], sizes = [64, 1], strides = [1, 1]} : vector<64x4xf32> to vector<64x1xf32>
    %175 = vector.broadcast %173 : vector<32x1xf32> to vector<32x128xf32>
    %176 = arith.addf %172, %175 : vector<32x128xf32>
    %177 = vector.broadcast %10 : vector<1x128xf32> to vector<32x128xf32>
    %178 = arith.mulf %176, %177 : vector<32x128xf32>
    %c1_i32_75 = arith.constant 1 : i32
    %179 = tpu.dynamic_rotate %178 by %c1_i32_75 dim 1 : vector<32x128xf32>, i32 -> vector<32x128xf32>
    %180 = arith.truncf %179 : vector<32x128xf32> to vector<32x128xbf16>
    %181 = arith.truncf %178 : vector<32x128xf32> to vector<32x128xbf16>
    %c127_i32_76 = arith.constant 127 : i32
    %182 = tpu.dynamic_rotate %178 by %c127_i32_76 dim 1 : vector<32x128xf32>, i32 -> vector<32x128xf32>
    %183 = arith.truncf %182 : vector<32x128xf32> to vector<32x128xbf16>
    %184 = tpu.concatenate %180, %181, %183, %108 in 0 : vector<32x128xbf16>, vector<32x128xbf16>, vector<32x128xbf16>, vector<32x128xbf16> -> vector<128x128xbf16>
    %c2 = arith.constant 2 : index
    %c0_77 = arith.constant 0 : index
    %c0_78 = arith.constant 0 : index
    %185 = vector.load %arg17[%c2, %c0_77, %c0_78] : memref<4x64x128xbf16, #tpu.memory_space<vmem>>, vector<1x64x128xbf16>
    %186 = vector.shape_cast %185 : vector<1x64x128xbf16> to vector<64x128xbf16>
    %cst_79 = arith.constant dense<0.000000e+00> : vector<64x128xf32>
    %187 = tpu.matmul %186, %184, %cst_79 {dimension_numbers = #tpu.dot_dimension_numbers<[1], [0], [0], [1], [0, 0, 1, 1], [], []>} : vector<64x128xbf16>, vector<128x128xbf16>, vector<64x128xf32> -> vector<64x128xf32>
    %188 = vector.broadcast %174 : vector<64x1xf32> to vector<64x128xf32>
    %189 = arith.addf %187, %188 : vector<64x128xf32>
    %190 = vector.extract_strided_slice %189 {offsets = [0, 0], sizes = [32, 128], strides = [1, 1]} : vector<64x128xf32> to vector<32x128xf32>
    %191 = math.tanh %190 : vector<32x128xf32>
    %192 = vector.extract_strided_slice %189 {offsets = [32, 0], sizes = [32, 128], strides = [1, 1]} : vector<64x128xf32> to vector<32x128xf32>
    %193 = arith.negf %192 : vector<32x128xf32>
    %194 = math.exp %193 : vector<32x128xf32>
    %cst_80 = arith.constant 1.000000e+00 : f32
    %195 = vector.broadcast %cst_80 : f32 to vector<32x128xf32>
    %196 = arith.addf %195, %194 : vector<32x128xf32>
    %197 = arith.divf %195, %196 : vector<32x128xf32>
    %198 = arith.mulf %191, %197 : vector<32x128xf32>
    %199 = vector.broadcast %6 : vector<1x128xf32> to vector<32x128xf32>
    %200 = arith.mulf %198, %199 : vector<32x128xf32>
    %201 = arith.addf %171, %200 : vector<32x128xf32>
    %202 = arith.addf %172, %200 : vector<32x128xf32>
    %203 = vector.extract_strided_slice %110 {offsets = [0, 3], sizes = [32, 1], strides = [1, 1]} : vector<32x4xf32> to vector<32x1xf32>
    %204 = vector.extract_strided_slice %111 {offsets = [0, 3], sizes = [64, 1], strides = [1, 1]} : vector<64x4xf32> to vector<64x1xf32>
    %205 = vector.broadcast %203 : vector<32x1xf32> to vector<32x128xf32>
    %206 = arith.addf %202, %205 : vector<32x128xf32>
    %207 = vector.broadcast %10 : vector<1x128xf32> to vector<32x128xf32>
    %208 = arith.mulf %206, %207 : vector<32x128xf32>
    %c1_i32_81 = arith.constant 1 : i32
    %209 = tpu.dynamic_rotate %208 by %c1_i32_81 dim 1 : vector<32x128xf32>, i32 -> vector<32x128xf32>
    %210 = arith.truncf %209 : vector<32x128xf32> to vector<32x128xbf16>
    %211 = arith.truncf %208 : vector<32x128xf32> to vector<32x128xbf16>
    %c127_i32_82 = arith.constant 127 : i32
    %212 = tpu.dynamic_rotate %208 by %c127_i32_82 dim 1 : vector<32x128xf32>, i32 -> vector<32x128xf32>
    %213 = arith.truncf %212 : vector<32x128xf32> to vector<32x128xbf16>
    %214 = tpu.concatenate %210, %211, %213, %108 in 0 : vector<32x128xbf16>, vector<32x128xbf16>, vector<32x128xbf16>, vector<32x128xbf16> -> vector<128x128xbf16>
    %c3 = arith.constant 3 : index
    %c0_83 = arith.constant 0 : index
    %c0_84 = arith.constant 0 : index
    %215 = vector.load %arg17[%c3, %c0_83, %c0_84] : memref<4x64x128xbf16, #tpu.memory_space<vmem>>, vector<1x64x128xbf16>
    %216 = vector.shape_cast %215 : vector<1x64x128xbf16> to vector<64x128xbf16>
    %cst_85 = arith.constant dense<0.000000e+00> : vector<64x128xf32>
    %217 = tpu.matmul %216, %214, %cst_85 {dimension_numbers = #tpu.dot_dimension_numbers<[1], [0], [0], [1], [0, 0, 1, 1], [], []>} : vector<64x128xbf16>, vector<128x128xbf16>, vector<64x128xf32> -> vector<64x128xf32>
    %218 = vector.broadcast %204 : vector<64x1xf32> to vector<64x128xf32>
    %219 = arith.addf %217, %218 : vector<64x128xf32>
    %220 = vector.extract_strided_slice %219 {offsets = [0, 0], sizes = [32, 128], strides = [1, 1]} : vector<64x128xf32> to vector<32x128xf32>
    %221 = math.tanh %220 : vector<32x128xf32>
    %222 = vector.extract_strided_slice %219 {offsets = [32, 0], sizes = [32, 128], strides = [1, 1]} : vector<64x128xf32> to vector<32x128xf32>
    %223 = arith.negf %222 : vector<32x128xf32>
    %224 = math.exp %223 : vector<32x128xf32>
    %cst_86 = arith.constant 1.000000e+00 : f32
    %225 = vector.broadcast %cst_86 : f32 to vector<32x128xf32>
    %226 = arith.addf %225, %224 : vector<32x128xf32>
    %227 = arith.divf %225, %226 : vector<32x128xf32>
    %228 = arith.mulf %221, %227 : vector<32x128xf32>
    %229 = vector.broadcast %6 : vector<1x128xf32> to vector<32x128xf32>
    %230 = arith.mulf %228, %229 : vector<32x128xf32>
    %231 = arith.addf %201, %230 : vector<32x128xf32>
    %cst_87 = arith.constant 5.000000e-01 : f32
    %232 = vector.broadcast %cst_87 : f32 to vector<32x128xf32>
    %233 = arith.mulf %231, %232 : vector<32x128xf32>
    %234 = arith.negf %233 : vector<32x128xf32>
    %235 = math.exp %234 : vector<32x128xf32>
    %cst_88 = arith.constant 1.000000e+00 : f32
    %236 = vector.broadcast %cst_88 : f32 to vector<32x128xf32>
    %237 = arith.addf %236, %235 : vector<32x128xf32>
    %238 = arith.divf %236, %237 : vector<32x128xf32>
    %239 = arith.mulf %233, %238 : vector<32x128xf32>
    %c0_89 = arith.constant 0 : index
    %c0_90 = arith.constant 0 : index
    %240 = vector.load %arg19[%c0_89, %c0_90] : memref<8x32xbf16, #tpu.memory_space<vmem>>, vector<8x32xbf16>
    %241 = arith.truncf %239 : vector<32x128xf32> to vector<32x128xbf16>
    %cst_91 = arith.constant dense<0.000000e+00> : vector<8x128xf32>
    %242 = tpu.matmul %240, %241, %cst_91 {dimension_numbers = #tpu.dot_dimension_numbers<[1], [0], [0], [1], [0, 0, 1, 1], [], []>} : vector<8x32xbf16>, vector<32x128xbf16>, vector<8x128xf32> -> vector<8x128xf32>
    %c0_92 = arith.constant 0 : index
    %c0_93 = arith.constant 0 : index
    %243 = vector.load %arg20[%c0_92, %c0_93] : memref<8x1xf32, #tpu.memory_space<vmem>>, vector<8x1xf32>
    %244 = vector.broadcast %243 : vector<8x1xf32> to vector<8x128xf32>
    %245 = arith.addf %242, %244 : vector<8x128xf32>
    %246 = vector.broadcast %6 : vector<1x128xf32> to vector<8x128xf32>
    %247 = arith.mulf %245, %246 : vector<8x128xf32>
    %248 = vector.extract_strided_slice %247 {offsets = [0, 0], sizes = [8, 16], strides = [1, 1]} : vector<8x128xf32> to vector<8x16xf32>
    %c0_94 = arith.constant 0 : index
    %c0_95 = arith.constant 0 : index
    %c0_96 = arith.constant 0 : index
    %249 = vector.load %arg21[%c0_94, %c0_95, %c0_96] : memref<1x8x16xf32, #tpu.memory_space<vmem>>, vector<1x8x16xf32>
    %250 = vector.shape_cast %249 : vector<1x8x16xf32> to vector<8x16xf32>
    %251 = vector.shape_cast %248 : vector<8x16xf32> to vector<1x8x16xf32>
    tpu.vector_store %arg21[%c0_94, %c0_95, %c0_96], %251 {strides = array<i32>} : memref<1x8x16xf32, #tpu.memory_space<vmem>>, vector<1x8x16xf32>,
    return
  }
  func.func @transform_0(%arg0: i32, %arg1: memref<2xi32, #tpu.memory_space<smem>>) -> (i32, i32, i32) {
    %c0_i32 = arith.constant 0 : i32
    %c0_i32_0 = arith.constant 0 : i32
    %c0_i32_1 = arith.constant 0 : i32
    return %arg0, %c0_i32, %c0_i32_0 : i32, i32, i32
  }
  func.func @transform_1(%arg0: i32, %arg1: memref<2xi32, #tpu.memory_space<smem>>) -> (i32, i32, i32) {
    %c0_i32 = arith.constant 0 : i32
    %c0_i32_0 = arith.constant 0 : i32
    %c0_i32_1 = arith.constant 0 : i32
    return %arg0, %c0_i32, %c0_i32_0 : i32, i32, i32
  }
  func.func @transform_2(%arg0: i32, %arg1: memref<2xi32, #tpu.memory_space<smem>>) -> (i32, i32, i32) {
    %c0_i32 = arith.constant 0 : i32
    %c0_i32_0 = arith.constant 0 : i32
    %c0_i32_1 = arith.constant 0 : i32
    return %arg0, %c0_i32, %c0_i32_0 : i32, i32, i32
  }
  func.func @transform_3(%arg0: i32, %arg1: memref<2xi32, #tpu.memory_space<smem>>) -> (i32, i32) {
    %c0_i32 = arith.constant 0 : i32
    %c0_i32_0 = arith.constant 0 : i32
    %c0_i32_1 = arith.constant 0 : i32
    return %c0_i32, %c0_i32_0 : i32, i32
  }
  func.func @transform_4(%arg0: i32, %arg1: memref<2xi32, #tpu.memory_space<smem>>) -> (i32, i32) {
    %c0_i32 = arith.constant 0 : i32
    %c0_i32_0 = arith.constant 0 : i32
    %c0_i32_1 = arith.constant 0 : i32
    return %c0_i32, %c0_i32_0 : i32, i32
  }
  func.func @transform_5(%arg0: i32, %arg1: memref<2xi32, #tpu.memory_space<smem>>) -> (i32, i32) {
    %c0_i32 = arith.constant 0 : i32
    %c0_i32_0 = arith.constant 0 : i32
    %c0_i32_1 = arith.constant 0 : i32
    return %c0_i32, %c0_i32_0 : i32, i32
  }
  func.func @transform_6(%arg0: i32, %arg1: memref<2xi32, #tpu.memory_space<smem>>) -> (i32, i32) {
    %c0_i32 = arith.constant 0 : i32
    %c0_i32_0 = arith.constant 0 : i32
    %c0_i32_1 = arith.constant 0 : i32
    return %c0_i32, %c0_i32_0 : i32, i32
  }
  func.func @transform_7(%arg0: i32, %arg1: memref<2xi32, #tpu.memory_space<smem>>) -> (i32, i32) {
    %c0_i32 = arith.constant 0 : i32
    %c0_i32_0 = arith.constant 0 : i32
    %c0_i32_1 = arith.constant 0 : i32
    return %c0_i32, %c0_i32_0 : i32, i32
  }
  func.func @transform_8(%arg0: i32, %arg1: memref<2xi32, #tpu.memory_space<smem>>) -> (i32, i32) {
    %c0_i32 = arith.constant 0 : i32
    %c0_i32_0 = arith.constant 0 : i32
    %c0_i32_1 = arith.constant 0 : i32
    return %c0_i32, %c0_i32_0 : i32, i32
  }
  func.func @transform_9(%arg0: i32, %arg1: memref<2xi32, #tpu.memory_space<smem>>) -> (i32, i32) {
    %c0_i32 = arith.constant 0 : i32
    %c0_i32_0 = arith.constant 0 : i32
    %c0_i32_1 = arith.constant 0 : i32
    return %c0_i32, %c0_i32_0 : i32, i32
  }
  func.func @transform_10(%arg0: i32, %arg1: memref<2xi32, #tpu.memory_space<smem>>) -> (i32, i32) {
    %c0_i32 = arith.constant 0 : i32
    %c0_i32_0 = arith.constant 0 : i32
    %c0_i32_1 = arith.constant 0 : i32
    return %c0_i32, %c0_i32_0 : i32, i32
  }
  func.func @transform_11(%arg0: i32, %arg1: memref<2xi32, #tpu.memory_space<smem>>) -> (i32, i32) {
    %c0_i32 = arith.constant 0 : i32
    %c0_i32_0 = arith.constant 0 : i32
    %c0_i32_1 = arith.constant 0 : i32
    return %c0_i32, %c0_i32_0 : i32, i32
  }
  func.func @transform_12(%arg0: i32, %arg1: memref<2xi32, #tpu.memory_space<smem>>) -> (i32, i32) {
    %c0_i32 = arith.constant 0 : i32
    %c0_i32_0 = arith.constant 0 : i32
    %c0_i32_1 = arith.constant 0 : i32
    return %c0_i32, %c0_i32_0 : i32, i32
  }
  func.func @transform_13(%arg0: i32, %arg1: memref<2xi32, #tpu.memory_space<smem>>) -> (i32, i32) {
    %c0_i32 = arith.constant 0 : i32
    %c0_i32_0 = arith.constant 0 : i32
    %c0_i32_1 = arith.constant 0 : i32
    return %c0_i32, %c0_i32_0 : i32, i32
  }
  func.func @transform_14(%arg0: i32, %arg1: memref<2xi32, #tpu.memory_space<smem>>) -> (i32, i32) {
    %c0_i32 = arith.constant 0 : i32
    %c0_i32_0 = arith.constant 0 : i32
    %c0_i32_1 = arith.constant 0 : i32
    return %c0_i32, %c0_i32_0 : i32, i32
  }
  func.func @transform_15(%arg0: i32, %arg1: memref<2xi32, #tpu.memory_space<smem>>) -> (i32, i32, i32) {
    %c0_i32 = arith.constant 0 : i32
    %c0_i32_0 = arith.constant 0 : i32
    %c0_i32_1 = arith.constant 0 : i32
    %c0_i32_2 = arith.constant 0 : i32
    return %c0_i32, %c0_i32_0, %c0_i32_1 : i32, i32, i32
  }
  func.func @transform_16(%arg0: i32, %arg1: memref<2xi32, #tpu.memory_space<smem>>) -> (i32, i32) {
    %c0_i32 = arith.constant 0 : i32
    %c0_i32_0 = arith.constant 0 : i32
    %c0_i32_1 = arith.constant 0 : i32
    return %c0_i32, %c0_i32_0 : i32, i32
  }
  func.func @transform_17(%arg0: i32, %arg1: memref<2xi32, #tpu.memory_space<smem>>) -> (i32, i32) {
    %c0_i32 = arith.constant 0 : i32
    %c0_i32_0 = arith.constant 0 : i32
    %c0_i32_1 = arith.constant 0 : i32
    return %c0_i32, %c0_i32_0 : i32, i32
  }
  func.func @transform_18(%arg0: i32, %arg1: memref<2xi32, #tpu.memory_space<smem>>) -> (i32, i32) {
    %c0_i32 = arith.constant 0 : i32
    %c0_i32_0 = arith.constant 0 : i32
    %c0_i32_1 = arith.constant 0 : i32
    return %c0_i32, %c0_i32_0 : i32, i32
  }
  func.func @transform_19(%arg0: i32, %arg1: memref<2xi32, #tpu.memory_space<smem>>) -> (i32, i32, i32) {
    %c0_i32 = arith.constant 0 : i32
    %c0_i32_0 = arith.constant 0 : i32
    %c0_i32_1 = arith.constant 0 : i32
    return %arg0, %c0_i32, %c0_i32_0 : i32, i32, i32
  }
}

</mosaic_0001>

<llo_original>
// kernel: diffusion_network_forward.1
$region0: #{diffusion_network_forward.1}
  #allocation0 [shape = 'u32[]', space=smem, size = 0x4, offset = 0x4, fixed_abs, tag = 'smem constant byte address 0x4 - core index']
  #allocation1 [shape = 'u32[72,128]{1,0:T(1,128)}', space=vmem, size = 0x9000, scoped, tag = 'internal scratch']
  #allocation2 [shape = 'f32[32,128]{1,0:T(8,128)}', space=vmem, size = 0x4000, scoped, tag = 'scratch operand']
  #allocation3 [shape = 'f32[32,128]{1,0:T(8,128)}', space=vmem, size = 0x4000, scoped, tag = 'scratch operand']
  #allocation4 [shape = 's32[1]{0}', space=sflag, size = 0x4, scoped, tag = 'scoped memory for diffusion_network_forward.1']
  #allocation5 [shape = 'u8[512]{0}', space=smem, size = 0x200, scoped, tag = 'prefetched SMEM operand 0']
  %s0 = inlined_call_operand.vmem [shape: s32[2], index: 0, kind: input, shape index: {}]
  %s1 = inlined_call_operand.vmem [shape: f32[2,8,16], index: 1, kind: input, shape index: {}]
  %s2 = inlined_call_operand.vmem [shape: f32[2,16,16], index: 2, kind: input, shape index: {}]
  %s3 = inlined_call_operand.vmem [shape: f32[2,32,4], index: 3, kind: input, shape index: {}]
  %s4 = inlined_call_operand.vmem [shape: bf16[32,8], index: 4, kind: input, shape index: {}]
  %s5 = inlined_call_operand.vmem [shape: f32[32,1], index: 5, kind: input, shape index: {}]
  %s6 = inlined_call_operand.vmem [shape: f32[32,1], index: 6, kind: input, shape index: {}]
  %s7 = inlined_call_operand.vmem [shape: f32[32,1], index: 7, kind: input, shape index: {}]
  %s8 = inlined_call_operand.vmem [shape: bf16[32,16], index: 8, kind: input, shape index: {}]
  %s9 = inlined_call_operand.vmem [shape: f32[32,1], index: 9, kind: input, shape index: {}]
  %s10 = inlined_call_operand.vmem [shape: bf16[128,32], index: 10, kind: input, shape index: {}]
  %s11 = inlined_call_operand.vmem [shape: f32[128,1], index: 11, kind: input, shape index: {}]
  %s12 = inlined_call_operand.vmem [shape: bf16[32,128], index: 12, kind: input, shape index: {}]
  %s13 = inlined_call_operand.vmem [shape: f32[32,1], index: 13, kind: input, shape index: {}]
  %s14 = inlined_call_operand.vmem [shape: f32[32,1], index: 14, kind: input, shape index: {}]
  %s15 = inlined_call_operand.vmem [shape: f32[32,1], index: 15, kind: input, shape index: {}]
  %s16 = inlined_call_operand.vmem [shape: bf16[4,64,128], index: 16, kind: input, shape index: {}]
  %s17 = inlined_call_operand.vmem [shape: f32[64,4], index: 17, kind: input, shape index: {}]
  %s18 = inlined_call_operand.vmem [shape: bf16[8,32], index: 18, kind: input, shape index: {}]
  %s19 = inlined_call_operand.vmem [shape: f32[8,1], index: 19, kind: input, shape index: {}]
  %s20 = inlined_call_operand.hbm [shape: f32[2,8,16], index: 20, kind: output, shape index: {}]
  %s21 = sld [smem:[#allocation0]]
  $region109: #{diffusion_network_forward.1} parent=0
    _
  %s23 = ssub.s32 1, %s21
  %s24 = scalar_select 0, %s23, %s21
  %s26 = sshll.u32 %s0, 4
  %s27 = int_to_ptr.vmem [resolvable:$true] %s26
  %29 = dma.vmem_to_smem %s27, 16, [#allocation5], [#allocation4]
  %31 = dma.done [#allocation4], 16
  %32 = sfence
  $region1: #{diffusion_network_forward.1} parent=0
    #allocation6 [shape = 'u8[8192]{0}', space=vmem, size = 0x2000, scoped, tag = 'output window, operand 0']
    #allocation7 [shape = 's32[2]{0}', space=sflag, size = 0x8, scoped, tag = 'scoped memory for diffusion_network_forward.1']
    %33 = vsyncpa [#allocation7], 0
    %s34 = scalar_lea.sflag [#allocation7], 1
    %35 = vsyncpa %s34, 0
    loop: start=0, step=1, limit=4
    $region2: #{diffusion_network_forward.1} parent=1 // loop_pre_header
      _
    $region3: #{diffusion_network_forward.1} parent=1 // loop_header
      %s37 = sphi 0, %s41
      %p38 = scmp.ge.s32.totalorder %s37, 4
      %s47 = sphi 0, %s49
      %s50 = sphi 0, %s47
      %s51 = sphi 0, %s50
      %s67 = sphi 0, %s51
      %s73 = sphi 0, %s75
      %s76 = sphi 0, %s73
      %s77 = sphi 0, %s76
      %s93 = sphi 0, %s77
      %s99 = sphi 0, %s101
      %s102 = sphi 0, %s99
      %s103 = sphi 0, %s102
      %s119 = sphi 0, %s103
      %s123 = sphi 0, %s123
      %s125 = sphi 0, %s123
      %s126 = sphi 0, %s125
      %s140 = sphi 0, %s126
      %s144 = sphi 0, %s144
      %s146 = sphi 0, %s144
      %s147 = sphi 0, %s146
      %s161 = sphi 0, %s147
      %s165 = sphi 0, %s165
      %s167 = sphi 0, %s165
      %s168 = sphi 0, %s167
      %s182 = sphi 0, %s168
      %s186 = sphi 0, %s186
      %s188 = sphi 0, %s186
      %s189 = sphi 0, %s188
      %s203 = sphi 0, %s189
      %s207 = sphi 0, %s207
      %s209 = sphi 0, %s207
      %s210 = sphi 0, %s209
      %s224 = sphi 0, %s210
      %s228 = sphi 0, %s228
      %s230 = sphi 0, %s228
      %s231 = sphi 0, %s230
      %s245 = sphi 0, %s231
      %s249 = sphi 0, %s249
      %s251 = sphi 0, %s249
      %s252 = sphi 0, %s251
      %s266 = sphi 0, %s252
      %s270 = sphi 0, %s270
      %s272 = sphi 0, %s270
      %s273 = sphi 0, %s272
      %s287 = sphi 0, %s273
      %s291 = sphi 0, %s291
      %s293 = sphi 0, %s291
      %s294 = sphi 0, %s293
      %s308 = sphi 0, %s294
      %s312 = sphi 0, %s312
      %s314 = sphi 0, %s312
      %s315 = sphi 0, %s314
      %s329 = sphi 0, %s315
      %s333 = sphi 0, %s333
      %s335 = sphi 0, %s333
      %s336 = sphi 0, %s335
      %s350 = sphi 0, %s336
      %s354 = sphi 0, %s354
      %s356 = sphi 0, %s354
      %s357 = sphi 0, %s356
      %s371 = sphi 0, %s357
      %s375 = sphi 0, %s375
      %s377 = sphi 0, %s375
      %s378 = sphi 0, %s377
      %s392 = sphi 0, %s378
      %s396 = sphi 0, %s396
      %s398 = sphi 0, %s396
      %s399 = sphi 0, %s398
      %s413 = sphi 0, %s399
      %s417 = sphi 0, %s417
      %s419 = sphi 0, %s417
      %s420 = sphi 0, %s419
      %s434 = sphi 0, %s420
      %s438 = sphi 0, %s438
      %s440 = sphi 0, %s438
      %s441 = sphi 0, %s440
      %s455 = sphi 0, %s441
      %s461 = sphi 0, %s463
      %s464 = sphi 0, %s461
      %s465 = sphi 0, %s464
      %s481 = sphi 0, %s465
    $region4: #{diffusion_network_forward.1} parent=1 // loop_header_branch
      %40 = sbr.rel (%p38) target = $region8
    $region5: #{diffusion_network_forward.1} parent=1 // loop_body
      %s42 = ssub.s32 %s37, 1
      %s43 = ssub.s32 %s37, 2
      %s44 = sadd.s32 %s37, 1
      %s45 = ssub.s32 %s37, %s44
      %p46 = scmp.eq.s32.totalorder %s45, 0
      %s48 = sadd.s32 %s47, 1
      %s49 = scalar_select %p46, %s47, %s48
      %p52 = pneg %p46
      %p53 = scmp.eq.s32.totalorder %s37, 1
      %p54 = por %p52, %p53
      %p55 = scmp.ne.s32.totalorder %s47, %s50
      %p56 = scmp.eq.s32.totalorder %s37, 0
      %p57 = por %p55, %p56
      %p58 = scmp.ne.s32.totalorder %s47, %s50
      %p59 = scmp.eq.s32.totalorder %s42, 1
      %p60 = por %p58, %p59
      %p61 = scmp.ne.s32.totalorder %s50, %s51
      %p62 = scmp.eq.s32.totalorder %s42, 0
      %p63 = por %p61, %p62
      %p64 = scmp.ne.s32.totalorder %s50, %s51
      %p65 = scmp.eq.s32.totalorder %s43, 1
      %p66 = por %p64, %p65
      %p68 = scmp.ne.s32.totalorder %s51, %s67
      %p69 = scmp.eq.s32.totalorder %s43, 0
      %p70 = por %p68, %p69
      %s71 = ssub.s32 %s37, %s44
      %p72 = scmp.eq.s32.totalorder %s71, 0
      %s74 = sadd.s32 %s73, 1
      %s75 = scalar_select %p72, %s73, %s74
      %p78 = pneg %p72
      %p79 = scmp.eq.s32.totalorder %s37, 1
      %p80 = por %p78, %p79
      %p81 = scmp.ne.s32.totalorder %s73, %s76
      %p82 = scmp.eq.s32.totalorder %s37, 0
      %p83 = por %p81, %p82
      %p84 = scmp.ne.s32.totalorder %s73, %s76
      %p85 = scmp.eq.s32.totalorder %s42, 1
      %p86 = por %p84, %p85
      %p87 = scmp.ne.s32.totalorder %s76, %s77
      %p88 = scmp.eq.s32.totalorder %s42, 0
      %p89 = por %p87, %p88
      %p90 = scmp.ne.s32.totalorder %s76, %s77
      %p91 = scmp.eq.s32.totalorder %s43, 1
      %p92 = por %p90, %p91
      %p94 = scmp.ne.s32.totalorder %s77, %s93
      %p95 = scmp.eq.s32.totalorder %s43, 0
      %p96 = por %p94, %p95
      %s97 = ssub.s32 %s37, %s44
      %p98 = scmp.eq.s32.totalorder %s97, 0
      %s100 = sadd.s32 %s99, 1
      %s101 = scalar_select %p98, %s99, %s100
      %p104 = pneg %p98
      %p105 = scmp.eq.s32.totalorder %s37, 1
      %p106 = por %p104, %p105
      %p107 = scmp.ne.s32.totalorder %s99, %s102
      %p108 = scmp.eq.s32.totalorder %s37, 0
      %p109 = por %p107, %p108
      %p110 = scmp.ne.s32.totalorder %s99, %s102
      %p111 = scmp.eq.s32.totalorder %s42, 1
      %p112 = por %p110, %p111
      %p113 = scmp.ne.s32.totalorder %s102, %s103
      %p114 = scmp.eq.s32.totalorder %s42, 0
      %p115 = por %p113, %p114
      %p116 = scmp.ne.s32.totalorder %s102, %s103
      %p117 = scmp.eq.s32.totalorder %s43, 1
      %p118 = por %p116, %p117
      %p120 = scmp.ne.s32.totalorder %s103, %s119
      %p121 = scmp.eq.s32.totalorder %s43, 0
      %p122 = por %p120, %p121
      %s124 = sadd.s32 %s123, 1
      %p127 = scmp.eq.s32.totalorder %s37, 1
      %p128 = scmp.ne.s32.totalorder %s123, %s125
      %p129 = scmp.eq.s32.totalorder %s37, 0
      %p130 = por %p128, %p129
      %p131 = scmp.ne.s32.totalorder %s123, %s125
      %p132 = scmp.eq.s32.totalorder %s42, 1
      %p133 = por %p131, %p132
      %p134 = scmp.ne.s32.totalorder %s125, %s126
      %p135 = scmp.eq.s32.totalorder %s42, 0
      %p136 = por %p134, %p135
      %p137 = scmp.ne.s32.totalorder %s125, %s126
      %p138 = scmp.eq.s32.totalorder %s43, 1
      %p139 = por %p137, %p138
      %p141 = scmp.ne.s32.totalorder %s126, %s140
      %p142 = scmp.eq.s32.totalorder %s43, 0
      %p143 = por %p141, %p142
      %s145 = sadd.s32 %s144, 1
      %p148 = scmp.eq.s32.totalorder %s37, 1
      %p149 = scmp.ne.s32.totalorder %s144, %s146
      %p150 = scmp.eq.s32.totalorder %s37, 0
      %p151 = por %p149, %p150
      %p152 = scmp.ne.s32.totalorder %s144, %s146
      %p153 = scmp.eq.s32.totalorder %s42, 1
      %p154 = por %p152, %p153
      %p155 = scmp.ne.s32.totalorder %s146, %s147
      %p156 = scmp.eq.s32.totalorder %s42, 0
      %p157 = por %p155, %p156
      %p158 = scmp.ne.s32.totalorder %s146, %s147
      %p159 = scmp.eq.s32.totalorder %s43, 1
      %p160 = por %p158, %p159
      %p162 = scmp.ne.s32.totalorder %s147, %s161
      %p163 = scmp.eq.s32.totalorder %s43, 0
      %p164 = por %p162, %p163
      %s166 = sadd.s32 %s165, 1
      %p169 = scmp.eq.s32.totalorder %s37, 1
      %p170 = scmp.ne.s32.totalorder %s165, %s167
      %p171 = scmp.eq.s32.totalorder %s37, 0
      %p172 = por %p170, %p171
      %p173 = scmp.ne.s32.totalorder %s165, %s167
      %p174 = scmp.eq.s32.totalorder %s42, 1
      %p175 = por %p173, %p174
      %p176 = scmp.ne.s32.totalorder %s167, %s168
      %p177 = scmp.eq.s32.totalorder %s42, 0
      %p178 = por %p176, %p177
      %p179 = scmp.ne.s32.totalorder %s167, %s168
      %p180 = scmp.eq.s32.totalorder %s43, 1
      %p181 = por %p179, %p180
      %p183 = scmp.ne.s32.totalorder %s168, %s182
      %p184 = scmp.eq.s32.totalorder %s43, 0
      %p185 = por %p183, %p184
      %s187 = sadd.s32 %s186, 1
      %p190 = scmp.eq.s32.totalorder %s37, 1
      %p191 = scmp.ne.s32.totalorder %s186, %s188
      %p192 = scmp.eq.s32.totalorder %s37, 0
      %p193 = por %p191, %p192
      %p194 = scmp.ne.s32.totalorder %s186, %s188
      %p195 = scmp.eq.s32.totalorder %s42, 1
      %p196 = por %p194, %p195
      %p197 = scmp.ne.s32.totalorder %s188, %s189
      %p198 = scmp.eq.s32.totalorder %s42, 0
      %p199 = por %p197, %p198
      %p200 = scmp.ne.s32.totalorder %s188, %s189
      %p201 = scmp.eq.s32.totalorder %s43, 1
      %p202 = por %p200, %p201
      %p204 = scmp.ne.s32.totalorder %s189, %s203
      %p205 = scmp.eq.s32.totalorder %s43, 0
      %p206 = por %p204, %p205
      %s208 = sadd.s32 %s207, 1
      %p211 = scmp.eq.s32.totalorder %s37, 1
      %p212 = scmp.ne.s32.totalorder %s207, %s209
      %p213 = scmp.eq.s32.totalorder %s37, 0
      %p214 = por %p212, %p213
      %p215 = scmp.ne.s32.totalorder %s207, %s209
      %p216 = scmp.eq.s32.totalorder %s42, 1
      %p217 = por %p215, %p216
      %p218 = scmp.ne.s32.totalorder %s209, %s210
      %p219 = scmp.eq.s32.totalorder %s42, 0
      %p220 = por %p218, %p219
      %p221 = scmp.ne.s32.totalorder %s209, %s210
      %p222 = scmp.eq.s32.totalorder %s43, 1
      %p223 = por %p221, %p222
      %p225 = scmp.ne.s32.totalorder %s210, %s224
      %p226 = scmp.eq.s32.totalorder %s43, 0
      %p227 = por %p225, %p226
      %s229 = sadd.s32 %s228, 1
      %p232 = scmp.eq.s32.totalorder %s37, 1
      %p233 = scmp.ne.s32.totalorder %s228, %s230
      %p234 = scmp.eq.s32.totalorder %s37, 0
      %p235 = por %p233, %p234
      %p236 = scmp.ne.s32.totalorder %s228, %s230
      %p237 = scmp.eq.s32.totalorder %s42, 1
      %p238 = por %p236, %p237
      %p239 = scmp.ne.s32.totalorder %s230, %s231
      %p240 = scmp.eq.s32.totalorder %s42, 0
      %p241 = por %p239, %p240
      %p242 = scmp.ne.s32.totalorder %s230, %s231
      %p243 = scmp.eq.s32.totalorder %s43, 1
      %p244 = por %p242, %p243
      %p246 = scmp.ne.s32.totalorder %s231, %s245
      %p247 = scmp.eq.s32.totalorder %s43, 0
      %p248 = por %p246, %p247
      %s250 = sadd.s32 %s249, 1
      %p253 = scmp.eq.s32.totalorder %s37, 1
      %p254 = scmp.ne.s32.totalorder %s249, %s251
      %p255 = scmp.eq.s32.totalorder %s37, 0
      %p256 = por %p254, %p255
      %p257 = scmp.ne.s32.totalorder %s249, %s251
      %p258 = scmp.eq.s32.totalorder %s42, 1
      %p259 = por %p257, %p258
      %p260 = scmp.ne.s32.totalorder %s251, %s252
      %p261 = scmp.eq.s32.totalorder %s42, 0
      %p262 = por %p260, %p261
      %p263 = scmp.ne.s32.totalorder %s251, %s252
      %p264 = scmp.eq.s32.totalorder %s43, 1
      %p265 = por %p263, %p264
      %p267 = scmp.ne.s32.totalorder %s252, %s266
      %p268 = scmp.eq.s32.totalorder %s43, 0
      %p269 = por %p267, %p268
      %s271 = sadd.s32 %s270, 1
      %p274 = scmp.eq.s32.totalorder %s37, 1
      %p275 = scmp.ne.s32.totalorder %s270, %s272
      %p276 = scmp.eq.s32.totalorder %s37, 0
      %p277 = por %p275, %p276
      %p278 = scmp.ne.s32.totalorder %s270, %s272
      %p279 = scmp.eq.s32.totalorder %s42, 1
      %p280 = por %p278, %p279
      %p281 = scmp.ne.s32.totalorder %s272, %s273
      %p282 = scmp.eq.s32.totalorder %s42, 0
      %p283 = por %p281, %p282
      %p284 = scmp.ne.s32.totalorder %s272, %s273
      %p285 = scmp.eq.s32.totalorder %s43, 1
      %p286 = por %p284, %p285
      %p288 = scmp.ne.s32.totalorder %s273, %s287
      %p289 = scmp.eq.s32.totalorder %s43, 0
      %p290 = por %p288, %p289
      %s292 = sadd.s32 %s291, 1
      %p295 = scmp.eq.s32.totalorder %s37, 1
      %p296 = scmp.ne.s32.totalorder %s291, %s293
      %p297 = scmp.eq.s32.totalorder %s37, 0
      %p298 = por %p296, %p297
      %p299 = scmp.ne.s32.totalorder %s291, %s293
      %p300 = scmp.eq.s32.totalorder %s42, 1
      %p301 = por %p299, %p300
      %p302 = scmp.ne.s32.totalorder %s293, %s294
      %p303 = scmp.eq.s32.totalorder %s42, 0
      %p304 = por %p302, %p303
      %p305 = scmp.ne.s32.totalorder %s293, %s294
      %p306 = scmp.eq.s32.totalorder %s43, 1
      %p307 = por %p305, %p306
      %p309 = scmp.ne.s32.totalorder %s294, %s308
      %p310 = scmp.eq.s32.totalorder %s43, 0
      %p311 = por %p309, %p310
      %s313 = sadd.s32 %s312, 1
      %p316 = scmp.eq.s32.totalorder %s37, 1
      %p317 = scmp.ne.s32.totalorder %s312, %s314
      %p318 = scmp.eq.s32.totalorder %s37, 0
      %p319 = por %p317, %p318
      %p320 = scmp.ne.s32.totalorder %s312, %s314
      %p321 = scmp.eq.s32.totalorder %s42, 1
      %p322 = por %p320, %p321
      %p323 = scmp.ne.s32.totalorder %s314, %s315
      %p324 = scmp.eq.s32.totalorder %s42, 0
      %p325 = por %p323, %p324
      %p326 = scmp.ne.s32.totalorder %s314, %s315
      %p327 = scmp.eq.s32.totalorder %s43, 1
      %p328 = por %p326, %p327
      %p330 = scmp.ne.s32.totalorder %s315, %s329
      %p331 = scmp.eq.s32.totalorder %s43, 0
      %p332 = por %p330, %p331
      %s334 = sadd.s32 %s333, 1
      %p337 = scmp.eq.s32.totalorder %s37, 1
      %p338 = scmp.ne.s32.totalorder %s333, %s335
      %p339 = scmp.eq.s32.totalorder %s37, 0
      %p340 = por %p338, %p339
      %p341 = scmp.ne.s32.totalorder %s333, %s335
      %p342 = scmp.eq.s32.totalorder %s42, 1
      %p343 = por %p341, %p342
      %p344 = scmp.ne.s32.totalorder %s335, %s336
      %p345 = scmp.eq.s32.totalorder %s42, 0
      %p346 = por %p344, %p345
      %p347 = scmp.ne.s32.totalorder %s335, %s336
      %p348 = scmp.eq.s32.totalorder %s43, 1
      %p349 = por %p347, %p348
      %p351 = scmp.ne.s32.totalorder %s336, %s350
      %p352 = scmp.eq.s32.totalorder %s43, 0
      %p353 = por %p351, %p352
      %s355 = sadd.s32 %s354, 1
      %p358 = scmp.eq.s32.totalorder %s37, 1
      %p359 = scmp.ne.s32.totalorder %s354, %s356
      %p360 = scmp.eq.s32.totalorder %s37, 0
      %p361 = por %p359, %p360
      %p362 = scmp.ne.s32.totalorder %s354, %s356
      %p363 = scmp.eq.s32.totalorder %s42, 1
      %p364 = por %p362, %p363
      %p365 = scmp.ne.s32.totalorder %s356, %s357
      %p366 = scmp.eq.s32.totalorder %s42, 0
      %p367 = por %p365, %p366
      %p368 = scmp.ne.s32.totalorder %s356, %s357
      %p369 = scmp.eq.s32.totalorder %s43, 1
      %p370 = por %p368, %p369
      %p372 = scmp.ne.s32.totalorder %s357, %s371
      %p373 = scmp.eq.s32.totalorder %s43, 0
      %p374 = por %p372, %p373
      %s376 = sadd.s32 %s375, 1
      %p379 = scmp.eq.s32.totalorder %s37, 1
      %p380 = scmp.ne.s32.totalorder %s375, %s377
      %p381 = scmp.eq.s32.totalorder %s37, 0
      %p382 = por %p380, %p381
      %p383 = scmp.ne.s32.totalorder %s375, %s377
      %p384 = scmp.eq.s32.totalorder %s42, 1
      %p385 = por %p383, %p384
      %p386 = scmp.ne.s32.totalorder %s377, %s378
      %p387 = scmp.eq.s32.totalorder %s42, 0
      %p388 = por %p386, %p387
      %p389 = scmp.ne.s32.totalorder %s377, %s378
      %p390 = scmp.eq.s32.totalorder %s43, 1
      %p391 = por %p389, %p390
      %p393 = scmp.ne.s32.totalorder %s378, %s392
      %p394 = scmp.eq.s32.totalorder %s43, 0
      %p395 = por %p393, %p394
      %s397 = sadd.s32 %s396, 1
      %p400 = scmp.eq.s32.totalorder %s37, 1
      %p401 = scmp.ne.s32.totalorder %s396, %s398
      %p402 = scmp.eq.s32.totalorder %s37, 0
      %p403 = por %p401, %p402
      %p404 = scmp.ne.s32.totalorder %s396, %s398
      %p405 = scmp.eq.s32.totalorder %s42, 1
      %p406 = por %p404, %p405
      %p407 = scmp.ne.s32.totalorder %s398, %s399
      %p408 = scmp.eq.s32.totalorder %s42, 0
      %p409 = por %p407, %p408
      %p410 = scmp.ne.s32.totalorder %s398, %s399
      %p411 = scmp.eq.s32.totalorder %s43, 1
      %p412 = por %p410, %p411
      %p414 = scmp.ne.s32.totalorder %s399, %s413
      %p415 = scmp.eq.s32.totalorder %s43, 0
      %p416 = por %p414, %p415
      %s418 = sadd.s32 %s417, 1
      %p421 = scmp.eq.s32.totalorder %s37, 1
      %p422 = scmp.ne.s32.totalorder %s417, %s419
      %p423 = scmp.eq.s32.totalorder %s37, 0
      %p424 = por %p422, %p423
      %p425 = scmp.ne.s32.totalorder %s417, %s419
      %p426 = scmp.eq.s32.totalorder %s42, 1
      %p427 = por %p425, %p426
      %p428 = scmp.ne.s32.totalorder %s419, %s420
      %p429 = scmp.eq.s32.totalorder %s42, 0
      %p430 = por %p428, %p429
      %p431 = scmp.ne.s32.totalorder %s419, %s420
      %p432 = scmp.eq.s32.totalorder %s43, 1
      %p433 = por %p431, %p432
      %p435 = scmp.ne.s32.totalorder %s420, %s434
      %p436 = scmp.eq.s32.totalorder %s43, 0
      %p437 = por %p435, %p436
      %s439 = sadd.s32 %s438, 1
      %p442 = scmp.eq.s32.totalorder %s37, 1
      %p443 = scmp.ne.s32.totalorder %s438, %s440
      %p444 = scmp.eq.s32.totalorder %s37, 0
      %p445 = por %p443, %p444
      %p446 = scmp.ne.s32.totalorder %s438, %s440
      %p447 = scmp.eq.s32.totalorder %s42, 1
      %p448 = por %p446, %p447
      %p449 = scmp.ne.s32.totalorder %s440, %s441
      %p450 = scmp.eq.s32.totalorder %s42, 0
      %p451 = por %p449, %p450
      %p452 = scmp.ne.s32.totalorder %s440, %s441
      %p453 = scmp.eq.s32.totalorder %s43, 1
      %p454 = por %p452, %p453
      %p456 = scmp.ne.s32.totalorder %s441, %s455
      %p457 = scmp.eq.s32.totalorder %s43, 0
      %p458 = por %p456, %p457
      %s459 = ssub.s32 %s37, %s44
      %p460 = scmp.eq.s32.totalorder %s459, 0
      %s462 = sadd.s32 %s461, 1
      %s463 = scalar_select %p460, %s461, %s462
      %p466 = pneg %p460
      %p467 = scmp.eq.s32.totalorder %s37, 1
      %p468 = por %p466, %p467
      %p469 = scmp.ne.s32.totalorder %s461, %s464
      %p470 = scmp.eq.s32.totalorder %s37, 0
      %p471 = por %p469, %p470
      %p472 = scmp.ne.s32.totalorder %s461, %s464
      %p473 = scmp.eq.s32.totalorder %s42, 1
      %p474 = por %p472, %p473
      %p475 = scmp.ne.s32.totalorder %s464, %s465
      %p476 = scmp.eq.s32.totalorder %s42, 0
      %p477 = por %p475, %p476
      %p478 = scmp.ne.s32.totalorder %s464, %s465
      %p479 = scmp.eq.s32.totalorder %s43, 1
      %p480 = por %p478, %p479
      %p482 = scmp.ne.s32.totalorder %s465, %s481
      %p483 = scmp.eq.s32.totalorder %s43, 0
      %p484 = por %p482, %p483
      %p485 = scmp.le.s32.totalorder 1, %s37
      %p486 = scmp.lt.s32.totalorder %s37, 3
      %p487 = pnand %p485, %p486
      %p488 = pneg %p487
      // Predicated region
      $region9: #{diffusion_network_forward.1} parent=5 // pred_check
        _
      $region10: #{diffusion_network_forward.1} parent=5 // pred_check_branch
        %490 = sbr.rel (%p487) target = $region12
      $region11: #{diffusion_network_forward.1} parent=5 // pred_region
        %s491 = ssub.s32 %s37, 1
        // Predicated region
        $region13: #{diffusion_network_forward.1} parent=11 // pred_check
          %p492 = pneg %p136
        $region14: #{diffusion_network_forward.1} parent=11 // pred_check_branch
          %494 = sbr.rel (%p492) target = $region16
        $region15: #{diffusion_network_forward.1} parent=11 // pred_region
          _
        $region16: #{diffusion_network_forward.1} parent=11 // pred_fallthru
          _
        // Predicated region
        $region17: #{diffusion_network_forward.1} parent=11 // pred_check
          %p495 = pneg %p157
        $region18: #{diffusion_network_forward.1} parent=11 // pred_check_branch
          %497 = sbr.rel (%p495) target = $region20
        $region19: #{diffusion_network_forward.1} parent=11 // pred_region
          _
        $region20: #{diffusion_network_forward.1} parent=11 // pred_fallthru
          _
        // Predicated region
        $region21: #{diffusion_network_forward.1} parent=11 // pred_check
          %p498 = pneg %p178
        $region22: #{diffusion_network_forward.1} parent=11 // pred_check_branch
          %500 = sbr.rel (%p498) target = $region24
        $region23: #{diffusion_network_forward.1} parent=11 // pred_region
          _
        $region24: #{diffusion_network_forward.1} parent=11 // pred_fallthru
          _
        // Predicated region
        $region25: #{diffusion_network_forward.1} parent=11 // pred_check
          %p501 = pneg %p199
        $region26: #{diffusion_network_forward.1} parent=11 // pred_check_branch
          %503 = sbr.rel (%p501) target = $region28
        $region27: #{diffusion_network_forward.1} parent=11 // pred_region
          _
        $region28: #{diffusion_network_forward.1} parent=11 // pred_fallthru
          _
        // Predicated region
        $region29: #{diffusion_network_forward.1} parent=11 // pred_check
          %p504 = pneg %p220
        $region30: #{diffusion_network_forward.1} parent=11 // pred_check_branch
          %506 = sbr.rel (%p504) target = $region32
        $region31: #{diffusion_network_forward.1} parent=11 // pred_region
          _
        $region32: #{diffusion_network_forward.1} parent=11 // pred_fallthru
          _
        // Predicated region
        $region33: #{diffusion_network_forward.1} parent=11 // pred_check
          %p507 = pneg %p241
        $region34: #{diffusion_network_forward.1} parent=11 // pred_check_branch
          %509 = sbr.rel (%p507) target = $region36
        $region35: #{diffusion_network_forward.1} parent=11 // pred_region
          _
        $region36: #{diffusion_network_forward.1} parent=11 // pred_fallthru
          _
        // Predicated region
        $region37: #{diffusion_network_forward.1} parent=11 // pred_check
          %p510 = pneg %p262
        $region38: #{diffusion_network_forward.1} parent=11 // pred_check_branch
          %512 = sbr.rel (%p510) target = $region40
        $region39: #{diffusion_network_forward.1} parent=11 // pred_region
          _
        $region40: #{diffusion_network_forward.1} parent=11 // pred_fallthru
          _
        // Predicated region
        $region41: #{diffusion_network_forward.1} parent=11 // pred_check
          %p513 = pneg %p283
        $region42: #{diffusion_network_forward.1} parent=11 // pred_check_branch
          %515 = sbr.rel (%p513) target = $region44
        $region43: #{diffusion_network_forward.1} parent=11 // pred_region
          _
        $region44: #{diffusion_network_forward.1} parent=11 // pred_fallthru
          _
        // Predicated region
        $region45: #{diffusion_network_forward.1} parent=11 // pred_check
          %p516 = pneg %p304
        $region46: #{diffusion_network_forward.1} parent=11 // pred_check_branch
          %518 = sbr.rel (%p516) target = $region48
        $region47: #{diffusion_network_forward.1} parent=11 // pred_region
          _
        $region48: #{diffusion_network_forward.1} parent=11 // pred_fallthru
          _
        // Predicated region
        $region49: #{diffusion_network_forward.1} parent=11 // pred_check
          %p519 = pneg %p325
        $region50: #{diffusion_network_forward.1} parent=11 // pred_check_branch
          %521 = sbr.rel (%p519) target = $region52
        $region51: #{diffusion_network_forward.1} parent=11 // pred_region
          _
        $region52: #{diffusion_network_forward.1} parent=11 // pred_fallthru
          _
        // Predicated region
        $region53: #{diffusion_network_forward.1} parent=11 // pred_check
          %p522 = pneg %p346
        $region54: #{diffusion_network_forward.1} parent=11 // pred_check_branch
          %524 = sbr.rel (%p522) target = $region56
        $region55: #{diffusion_network_forward.1} parent=11 // pred_region
          _
        $region56: #{diffusion_network_forward.1} parent=11 // pred_fallthru
          _
        // Predicated region
        $region57: #{diffusion_network_forward.1} parent=11 // pred_check
          %p525 = pneg %p367
        $region58: #{diffusion_network_forward.1} parent=11 // pred_check_branch
          %527 = sbr.rel (%p525) target = $region60
        $region59: #{diffusion_network_forward.1} parent=11 // pred_region
          _
        $region60: #{diffusion_network_forward.1} parent=11 // pred_fallthru
          _
        // Predicated region
        $region61: #{diffusion_network_forward.1} parent=11 // pred_check
          %p528 = pneg %p388
        $region62: #{diffusion_network_forward.1} parent=11 // pred_check_branch
          %530 = sbr.rel (%p528) target = $region64
        $region63: #{diffusion_network_forward.1} parent=11 // pred_region
          _
        $region64: #{diffusion_network_forward.1} parent=11 // pred_fallthru
          _
        // Predicated region
        $region65: #{diffusion_network_forward.1} parent=11 // pred_check
          %p531 = pneg %p409
        $region66: #{diffusion_network_forward.1} parent=11 // pred_check_branch
          %533 = sbr.rel (%p531) target = $region68
        $region67: #{diffusion_network_forward.1} parent=11 // pred_region
          _
        $region68: #{diffusion_network_forward.1} parent=11 // pred_fallthru
          _
        // Predicated region
        $region69: #{diffusion_network_forward.1} parent=11 // pred_check
          %p534 = pneg %p430
        $region70: #{diffusion_network_forward.1} parent=11 // pred_check_branch
          %536 = sbr.rel (%p534) target = $region72
        $region71: #{diffusion_network_forward.1} parent=11 // pred_region
          _
        $region72: #{diffusion_network_forward.1} parent=11 // pred_fallthru
          _
        // Predicated region
        $region73: #{diffusion_network_forward.1} parent=11 // pred_check
          %p537 = pneg %p451
        $region74: #{diffusion_network_forward.1} parent=11 // pred_check_branch
          %539 = sbr.rel (%p537) target = $region76
        $region75: #{diffusion_network_forward.1} parent=11 // pred_region
          _
        $region76: #{diffusion_network_forward.1} parent=11 // pred_fallthru
          _
      $region12: #{diffusion_network_forward.1} parent=5 // pred_fallthru
        _
      %p540 = scmp.lt.s32.totalorder %s37, 2
      // Predicated region
      $region77: #{diffusion_network_forward.1} parent=5 // pred_check
        %p541 = pneg %p540
      $region78: #{diffusion_network_forward.1} parent=5 // pred_check_branch
        %543 = sbr.rel (%p541) target = $region80
      $region79: #{diffusion_network_forward.1} parent=5 // pred_region
        // Predicated region
        $region81: #{diffusion_network_forward.1} parent=79 // pred_check
          %p544 = pneg %p57
        $region82: #{diffusion_network_forward.1} parent=79 // pred_check_branch
          %546 = sbr.rel (%p544) target = $region84
        $region83: #{diffusion_network_forward.1} parent=79 // pred_region
          %p547 = scmp.lt.s32.totalorder %s37, 1
          %s548 = scalar_select %p547, %s37, 1
          %s549 = smul.addr %s548, 8
          %s550 = scalar_lea.vmem %s1, %s549
        $region84: #{diffusion_network_forward.1} parent=79 // pred_fallthru
          _
        // Predicated region
        $region85: #{diffusion_network_forward.1} parent=79 // pred_check
          %p551 = pneg %p83
        $region86: #{diffusion_network_forward.1} parent=79 // pred_check_branch
          %553 = sbr.rel (%p551) target = $region88
        $region87: #{diffusion_network_forward.1} parent=79 // pred_region
          %p554 = scmp.lt.s32.totalorder %s37, 1
          %s555 = scalar_select %p554, %s37, 1
          %s556 = smul.addr %s555, 2
          %s557 = smul.addr %s556, 8
          %s558 = scalar_lea.vmem %s2, %s557
        $region88: #{diffusion_network_forward.1} parent=79 // pred_fallthru
          _
        // Predicated region
        $region89: #{diffusion_network_forward.1} parent=79 // pred_check
          %p559 = pneg %p109
        $region90: #{diffusion_network_forward.1} parent=79 // pred_check_branch
          %561 = sbr.rel (%p559) target = $region92
        $region91: #{diffusion_network_forward.1} parent=79 // pred_region
          %p562 = scmp.lt.s32.totalorder %s37, 1
          %s563 = scalar_select %p562, %s37, 1
          %s564 = smul.addr %s563, 4
          %s565 = smul.addr %s564, 8
          %s566 = scalar_lea.vmem %s3, %s565
        $region92: #{diffusion_network_forward.1} parent=79 // pred_fallthru
          _
      $region80: #{diffusion_network_forward.1} parent=5 // pred_fallthru
        _
      %p567 = scmp.le.s32.totalorder 1, %s37
      %p568 = scmp.lt.s32.totalorder %s37, 3
      %p569 = pnand %p567, %p568
      %p570 = pneg %p569
      // Predicated region
      $region93: #{diffusion_network_forward.1} parent=5 // pred_check
        _
      $region94: #{diffusion_network_forward.1} parent=5 // pred_check_branch
        %572 = sbr.rel (%p569) target = $region96
      $region95: #{diffusion_network_forward.1} parent=5 // pred_region
        %s573 = ssub.s32 %s37, 1
        %p574 = scmp.lt.s32.totalorder %s42, 1
        %s575 = scalar_select %p574, %s42, 1
        %s576 = smul.addr %s575, 8
        %s577 = scalar_lea.vmem %s1, %s576
        %p578 = pneg %p63
        %p579 = pneg %p60
        %p580 = scmp.lt.s32.totalorder %s42, 1
        %s581 = scalar_select %p580, %s42, 1
        %s582 = smul.addr %s581, 2
        %s583 = smul.addr %s582, 8
        %s584 = scalar_lea.vmem %s2, %s583
        %p585 = pneg %p89
        %p586 = pneg %p86
        %p587 = scmp.lt.s32.totalorder %s42, 1
        %s588 = scalar_select %p587, %s42, 1
        %s589 = smul.addr %s588, 4
        %s590 = smul.addr %s589, 8
        %s591 = scalar_lea.vmem %s3, %s590
        %p592 = pneg %p115
        %p593 = pneg %p112
        %p594 = pneg %p136
        %p595 = pneg %p133
        %p596 = pneg %p157
        %p597 = pneg %p154
        %p598 = pneg %p178
        %p599 = pneg %p175
        %p600 = pneg %p199
        %p601 = pneg %p196
        %p602 = pneg %p220
        %p603 = pneg %p217
        %p604 = pneg %p241
        %p605 = pneg %p238
        %p606 = pneg %p262
        %p607 = pneg %p259
        %p608 = pneg %p283
        %p609 = pneg %p280
        %p610 = pneg %p304
        %p611 = pneg %p301
        %p612 = pneg %p325
        %p613 = pneg %p322
        %p614 = pneg %p346
        %p615 = pneg %p343
        %p616 = pneg %p367
        %p617 = pneg %p364
        %p618 = pneg %p388
        %p619 = pneg %p385
        %p620 = pneg %p409
        %p621 = pneg %p406
        %p622 = pneg %p430
        %p623 = pneg %p427
        %p624 = pneg %p451
        %p625 = pneg %p448
        %p626 = pneg %p477
        %p627 = pneg %p474
        %s628 = sand.u32 %s464, 1
        %s629 = scalar_lea.sflag [#allocation7], %s628
        %s630 = sand.u32 %s464, 1
        %s631 = smul.addr %s630, 8
        %s632 = scalar_lea.vmem [#allocation6], %s631
        %p633 = scmp.lt.s32.totalorder %s42, 1
        %s634 = scalar_select %p633, %s42, 1
        %s635 = smul.addr %s634, 8
        %s636 = scalar_lea.vmem %s1, %s635
        %p637 = scmp.lt.s32.totalorder %s42, 1
        %s638 = scalar_select %p637, %s42, 1
        %s639 = smul.addr %s638, 2
        %s640 = smul.addr %s639, 8
        %s641 = scalar_lea.vmem %s2, %s640
        %p642 = scmp.lt.s32.totalorder %s42, 1
        %s643 = scalar_select %p642, %s42, 1
        %s644 = smul.addr %s643, 4
        %s645 = smul.addr %s644, 8
        %s646 = scalar_lea.vmem %s3, %s645
        %s648 = sld [smem:[#allocation5 + %s42]]
        %v649 = vlaneseq
        %v650 = vand.u32 %v649, 127
        %v651 = vstv %s648
        %vm652 = vcmp.lt.s32.totalorder %v650, %v651
        %v653 = vsel %vm652, 1, 0
        %v654 = vcvt.s32.f32 %v653
        %vm655 = vcmp.lt.s32.totalorder %v650, 16
        %v656 = vsel %vm655, 1, 0
        %v657 = vcvt.s32.f32 %v656
        %v658 = vld [vmem:[%s636] sm:$0xff]
        %v659 = vpack.c.bf16 %v658, %v658
        %v660 = vld [vmem:[%s4] sm:$0xf]
        %v661 = vld [vmem:[%s4 + $0x4] sm:$0xf]
        %v662 = vld [vmem:[%s4 + $0x8] sm:$0xf]
        %v663 = vld [vmem:[%s4 + $0xc] sm:$0xf]
        %v664 = vld [vmem:[%s5] sm:$0xff]
        %v665 = vld [vmem:[%s5 + $0x8] sm:$0xff]
        %v666 = vld [vmem:[%s5 + $0x10] sm:$0xff]
        %v667 = vld [vmem:[%s5 + $0x18] sm:$0xff]
        %669 = vset.pattern.permute.xlu0 0
        %670 = vperm.xlu0 %669, %v664
        %v671 = vpop.permute.xlu0 %670
        %674 = vset.pattern.permute.xlu0 0
        %675 = vperm.xlu0 %674, %v665
        %v676 = vpop.permute.xlu0 %675
        %679 = vset.pattern.permute.xlu0 0
        %680 = vperm.xlu0 %679, %v666
        %v681 = vpop.permute.xlu0 %680
        %684 = vset.pattern.permute.xlu0 0
        %685 = vperm.xlu0 %684, %v667
        %v686 = vpop.permute.xlu0 %685
        %v692 = vunpack.c.l.b16 %v660
        %v693 = vunpack.c.l.b16 %v661
        %v694 = vunpack.c.l.b16 %v662
        %v695 = vunpack.c.l.b16 %v663
        %v696 = vpack.c.b16 %v693, %v692
        %v697 = vpack.c.b16 %v695, %v694
        %vm698 = vcmask 64512
        %v700 = vsel %vm698, %v696, 0
        %v703 = vsel %vm698, %v697, 0
        %vm705 = vcmask 1043456
        %v707 = vsel %vm705, %v659, 0
        %709 = vmatpush.bf16.msra.mxu0 0
        %710 = vmatpush.bf16.msra.mxu0 0
        %711 = vmatpush.bf16.msra.mxu0 0
        %712 = vmatpush.bf16.msra.mxu0 0
        %713 = vmatpush.bf16.msra.mxu0 0
        %714 = vmatpush.bf16.msra.mxu0 0
        %715 = vmatpush.bf16.msra.mxu0 0
        %716 = vmatpush.bf16.msra.mxu0 %v707
        %717 = vmatmul.bf16.gmra.mxu0 %v700
        %v718 = vpop.f32.mrf.mxu0
        %v719 = vadd.f32 %v671, %v718
        %v720 = vpop.f32.mrf.mxu0
        %v721 = vadd.f32 %v676, %v720
        %722 = vmatmul.bf16.gmra.mxu0 %v703
        %v723 = vpop.f32.mrf.mxu0
        %v724 = vadd.f32 %v681, %v723
        %v725 = vpop.f32.mrf.mxu0
        %v726 = vadd.f32 %v686, %v725
        %727 = vdwg.mxu0
        %v728 = vld [vmem:[%s6] sm:$0xff]
        %v729 = vld [vmem:[%s6 + $0x8] sm:$0xff]
        %v730 = vld [vmem:[%s6 + $0x10] sm:$0xff]
        %v731 = vld [vmem:[%s6 + $0x18] sm:$0xff]
        %v732 = vld [vmem:[%s7] sm:$0xff]
        %v733 = vld [vmem:[%s7 + $0x8] sm:$0xff]
        %v734 = vld [vmem:[%s7 + $0x10] sm:$0xff]
        %v735 = vld [vmem:[%s7 + $0x18] sm:$0xff]
        %vm736 = vcmask 130048
        %v737 = vsel %vm736, %v719, 0.0
        %v738 = vsel %vm736, %v721, 0.0
        %v739 = vadd.f32 %v737, %v738
        %v740 = vsel %vm736, %v724, 0.0
        %v741 = vadd.f32 %v739, %v740
        %v742 = vsel %vm736, %v726, 0.0
        %v743 = vadd.f32 %v741, %v742
        %v744 = vrot.slane %v743, 4
        %v745 = vadd.f32 %v743, %v744
        %v746 = vrot.slane %v745, 2
        %v747 = vadd.f32 %v745, %v746
        %v748 = vrot.slane %v747, 1
        %v749 = vadd.f32 %v747, %v748
        %v750 = vrcp.pop 32.0
        %v751 = vmul.f32 32.0, %v750
        %v752 = vsub.f32 1.0, %v751
        %v753 = vmul.f32 %v750, %v752
        %v754 = vadd.f32 %v750, %v753
        %vm755 = vweird.f32 %v750
        %v756 = vsel %vm755, %v750, %v754
        %v757 = vmul.f32 %v749, %v756
        %v758 = vsub.f32 %v719, %v757
        %v759 = vsub.f32 %v721, %v757
        %v760 = vsub.f32 %v724, %v757
        %v761 = vsub.f32 %v726, %v757
        %v762 = vmul.f32 %v758, %v758
        %v763 = vmul.f32 %v759, %v759
        %v764 = vmul.f32 %v760, %v760
        %v765 = vmul.f32 %v761, %v761
        %v766 = vsel %vm736, %v762, 0.0
        %v767 = vsel %vm736, %v763, 0.0
        %v768 = vadd.f32 %v766, %v767
        %v769 = vsel %vm736, %v764, 0.0
        %v770 = vadd.f32 %v768, %v769
        %v771 = vsel %vm736, %v765, 0.0
        %v772 = vadd.f32 %v770, %v771
        %v773 = vrot.slane %v772, 4
        %v774 = vadd.f32 %v772, %v773
        %v775 = vrot.slane %v774, 2
        %v776 = vadd.f32 %v774, %v775
        %v777 = vrot.slane %v776, 1
        %v778 = vadd.f32 %v776, %v777
        %v779 = vmul.f32 %v778, %v756
        %v780 = vadd.f32 %v779, 1e-05
        %v781 = vrsqrt.pop %v780
        %v782 = vmul.f32 %v781, %v780
        %v783 = vmul.f32 %v782, %v781
        %v784 = vmul.f32 0.5, %v783
        %v785 = vsub.f32 1.5, %v784
        %v786 = vmul.f32 %v781, %v785
        %vm787 = vweird.f32 %v780
        %vm788 = vweird.f32 %v781
        %vm789 = vmor %vm787, %vm788
        %v790 = vsel %vm789, %v781, %v786
        %v791 = vmul.f32 %v758, %v790
        %v792 = vmul.f32 %v759, %v790
        %v793 = vmul.f32 %v760, %v790
        %v794 = vmul.f32 %v761, %v790
        %796 = vset.pattern.permute.xlu0 0
        %797 = vperm.xlu0 %796, %v728
        %v798 = vpop.permute.xlu0 %797
        %801 = vset.pattern.permute.xlu0 0
        %802 = vperm.xlu0 %801, %v729
        %v803 = vpop.permute.xlu0 %802
        %806 = vset.pattern.permute.xlu0 0
        %807 = vperm.xlu0 %806, %v730
        %v808 = vpop.permute.xlu0 %807
        %811 = vset.pattern.permute.xlu0 0
        %812 = vperm.xlu0 %811, %v731
        %v813 = vpop.permute.xlu0 %812
        %v815 = vmul.f32 %v791, %v798
        %v816 = vmul.f32 %v792, %v803
        %v817 = vmul.f32 %v793, %v808
        %v818 = vmul.f32 %v794, %v813
        %820 = vset.pattern.permute.xlu0 0
        %821 = vperm.xlu0 %820, %v732
        %v822 = vpop.permute.xlu0 %821
        %825 = vset.pattern.permute.xlu0 0
        %826 = vperm.xlu0 %825, %v733
        %v827 = vpop.permute.xlu0 %826
        %830 = vset.pattern.permute.xlu0 0
        %831 = vperm.xlu0 %830, %v734
        %v832 = vpop.permute.xlu0 %831
        %835 = vset.pattern.permute.xlu0 0
        %836 = vperm.xlu0 %835, %v735
        %v837 = vpop.permute.xlu0 %836
        %v839 = vadd.f32 %v815, %v822
        %v840 = vadd.f32 %v816, %v827
        %v841 = vadd.f32 %v817, %v832
        %v842 = vadd.f32 %v818, %v837
        %v843 = vxor.u32 %v839, 2147483648
        %v844 = vxor.u32 %v840, 2147483648
        %v845 = vxor.u32 %v841, 2147483648
        %v846 = vxor.u32 %v842, 2147483648
        %v847 = vmul.f32 %v843, 1.442695
        %v848 = vpow.pop %v847
        %v849 = vmul.f32 %v844, 1.442695
        %v850 = vpow.pop %v849
        %v851 = vmul.f32 %v845, 1.442695
        %v852 = vpow.pop %v851
        %v853 = vmul.f32 %v846, 1.442695
        %v854 = vpow.pop %v853
        %v855 = vadd.f32 %v848, 1.0
        %v856 = vadd.f32 %v850, 1.0
        %v857 = vadd.f32 %v852, 1.0
        %v858 = vadd.f32 %v854, 1.0
        %v859 = vrcp.pop %v855
        %v860 = vmul.f32 %v855, %v859
        %v861 = vsub.f32 1.0, %v860
        %v862 = vmul.f32 %v859, %v861
        %v863 = vadd.f32 %v859, %v862
        %vm864 = vweird.f32 %v855
        %vm865 = vweird.f32 %v859
        %vm866 = vmor %vm864, %vm865
        %v867 = vsel %vm866, %v859, %v863
        %v868 = vand.u32 2147483647, %v855
        %vm869 = vcmp.eq.f32.partialorder %v868, 8.507059e+37
        %v870 = vand.u32 %v855, 2147483648
        %v871 = vor.u32 1.1754944e-38, %v870
        %v872 = vsel %vm869, %v871, %v867
        %v873 = vmul.f32 1.0, %v872
        %v874 = vrcp.pop %v856
        %v875 = vmul.f32 %v856, %v874
        %v876 = vsub.f32 1.0, %v875
        %v877 = vmul.f32 %v874, %v876
        %v878 = vadd.f32 %v874, %v877
        %vm879 = vweird.f32 %v856
        %vm880 = vweird.f32 %v874
        %vm881 = vmor %vm879, %vm880
        %v882 = vsel %vm881, %v874, %v878
        %v883 = vand.u32 2147483647, %v856
        %vm884 = vcmp.eq.f32.partialorder %v883, 8.507059e+37
        %v885 = vand.u32 %v856, 2147483648
        %v886 = vor.u32 1.1754944e-38, %v885
        %v887 = vsel %vm884, %v886, %v882
        %v888 = vmul.f32 1.0, %v887
        %v889 = vrcp.pop %v857
        %v890 = vmul.f32 %v857, %v889
        %v891 = vsub.f32 1.0, %v890
        %v892 = vmul.f32 %v889, %v891
        %v893 = vadd.f32 %v889, %v892
        %vm894 = vweird.f32 %v857
        %vm895 = vweird.f32 %v889
        %vm896 = vmor %vm894, %vm895
        %v897 = vsel %vm896, %v889, %v893
        %v898 = vand.u32 2147483647, %v857
        %vm899 = vcmp.eq.f32.partialorder %v898, 8.507059e+37
        %v900 = vand.u32 %v857, 2147483648
        %v901 = vor.u32 1.1754944e-38, %v900
        %v902 = vsel %vm899, %v901, %v897
        %v903 = vmul.f32 1.0, %v902
        %v904 = vrcp.pop %v858
        %v905 = vmul.f32 %v858, %v904
        %v906 = vsub.f32 1.0, %v905
        %v907 = vmul.f32 %v904, %v906
        %v908 = vadd.f32 %v904, %v907
        %vm909 = vweird.f32 %v858
        %vm910 = vweird.f32 %v904
        %vm911 = vmor %vm909, %vm910
        %v912 = vsel %vm911, %v904, %v908
        %v913 = vand.u32 2147483647, %v858
        %vm914 = vcmp.eq.f32.partialorder %v913, 8.507059e+37
        %v915 = vand.u32 %v858, 2147483648
        %v916 = vor.u32 1.1754944e-38, %v915
        %v917 = vsel %vm914, %v916, %v912
        %v918 = vmul.f32 1.0, %v917
        %v919 = vmul.f32 %v839, %v873
        %v920 = vmul.f32 %v840, %v888
        %v921 = vmul.f32 %v841, %v903
        %v922 = vmul.f32 %v842, %v918
        %923 = vst [vmem:[#allocation2] sm:$0xff] 0.0
        %924 = vst [vmem:[#allocation2 + $0x8] sm:$0xff] 0.0
        %925 = vst [vmem:[#allocation2 + $0x10] sm:$0xff] 0.0
        %926 = vst [vmem:[#allocation2 + $0x18] sm:$0xff] 0.0
        %927 = vst.msk [vmem:[#allocation2] sm:$0xff] %vm736, %v919
        %928 = vst.msk [vmem:[#allocation2 + $0x8] sm:$0xff] %vm736, %v920
        %929 = vst.msk [vmem:[#allocation2 + $0x10] sm:$0xff] %vm736, %v921
        %930 = vst.msk [vmem:[#allocation2 + $0x18] sm:$0xff] %vm736, %v922
        %v931 = vld [vmem:[#allocation2] sm:$0xff]
        %v932 = vld [vmem:[#allocation2 + $0x8] sm:$0xff]
        %v933 = vld [vmem:[#allocation2 + $0x10] sm:$0xff]
        %v934 = vld [vmem:[#allocation2 + $0x18] sm:$0xff]
        %v935 = vld [vmem:[%s641] sm:$0xff]
        %v936 = vld [vmem:[%s641 + $0x8] sm:$0xff]
        %v937 = vpack.c.bf16 %v936, %v935
        %v938 = vld [vmem:[%s8] sm:$0xf]
        %v939 = vld [vmem:[%s8 + $0x4] sm:$0xf]
        %v940 = vld [vmem:[%s8 + $0x8] sm:$0xf]
        %v941 = vld [vmem:[%s8 + $0xc] sm:$0xf]
        %v942 = vld [vmem:[%s9] sm:$0xff]
        %v943 = vld [vmem:[%s9 + $0x8] sm:$0xff]
        %v944 = vld [vmem:[%s9 + $0x10] sm:$0xff]
        %v945 = vld [vmem:[%s9 + $0x18] sm:$0xff]
        %947 = vset.pattern.permute.xlu0 0
        %948 = vperm.xlu0 %947, %v942
        %v949 = vpop.permute.xlu0 %948
        %952 = vset.pattern.permute.xlu0 0
        %953 = vperm.xlu0 %952, %v943
        %v954 = vpop.permute.xlu0 %953
        %957 = vset.pattern.permute.xlu0 0
        %958 = vperm.xlu0 %957, %v944
        %v959 = vpop.permute.xlu0 %958
        %962 = vset.pattern.permute.xlu0 0
        %963 = vperm.xlu0 %962, %v945
        %v964 = vpop.permute.xlu0 %963
        %v970 = vunpack.c.l.b16 %v938
        %v971 = vunpack.c.l.b16 %v939
        %v972 = vunpack.c.l.b16 %v940
        %v973 = vunpack.c.l.b16 %v941
        %v974 = vpack.c.b16 %v971, %v970
        %v975 = vpack.c.b16 %v973, %v972
        %v977 = vsel %vm736, %v974, 0
        %v980 = vsel %vm736, %v975, 0
        %982 = vmatpush.bf16.msra.mxu0 0
        %983 = vmatpush.bf16.msra.mxu0 0
        %984 = vmatpush.bf16.msra.mxu0 0
        %985 = vmatpush.bf16.msra.mxu0 0
        %986 = vmatpush.bf16.msra.mxu0 0
        %987 = vmatpush.bf16.msra.mxu0 0
        %988 = vmatpush.bf16.msra.mxu0 0
        %989 = vmatpush.bf16.msra.mxu0 %v937
        %990 = vmatmul.bf16.gmra.mxu0 %v977
        %v991 = vpop.f32.mrf.mxu0
        %v992 = vadd.f32 %v949, %v991
        %v993 = vpop.f32.mrf.mxu0
        %v994 = vadd.f32 %v954, %v993
        %995 = vmatmul.bf16.gmra.mxu0 %v980
        %v996 = vpop.f32.mrf.mxu0
        %v997 = vadd.f32 %v959, %v996
        %v998 = vpop.f32.mrf.mxu0
        %v999 = vadd.f32 %v964, %v998
        %1000 = vdwg.mxu0
        %v1001 = vld [vmem:[%s10] sm:$0xf]
        %v1002 = vld [vmem:[%s10 + $0x4] sm:$0xf]
        %v1003 = vld [vmem:[%s10 + $0x8] sm:$0xf]
        %v1004 = vld [vmem:[%s10 + $0xc] sm:$0xf]
        %v1005 = vld [vmem:[%s10 + $0x10] sm:$0xf]
        %v1006 = vld [vmem:[%s10 + $0x14] sm:$0xf]
        %v1007 = vld [vmem:[%s10 + $0x18] sm:$0xf]
        %v1008 = vld [vmem:[%s10 + $0x1c] sm:$0xf]
        %v1009 = vld [vmem:[%s10 + $0x20] sm:$0xf]
        %v1010 = vld [vmem:[%s10 + $0x24] sm:$0xf]
        %v1011 = vld [vmem:[%s10 + $0x28] sm:$0xf]
        %v1012 = vld [vmem:[%s10 + $0x2c] sm:$0xf]
        %v1013 = vld [vmem:[%s10 + $0x30] sm:$0xf]
        %v1014 = vld [vmem:[%s10 + $0x34] sm:$0xf]
        %v1015 = vld [vmem:[%s10 + $0x38] sm:$0xf]
        %v1016 = vld [vmem:[%s10 + $0x3c] sm:$0xf]
        %v1017 = vpack.c.bf16 %v994, %v992
        %v1018 = vpack.c.bf16 %v999, %v997
        %v1019 = vld [vmem:[%s11] sm:$0xff]
        %v1020 = vld [vmem:[%s11 + $0x8] sm:$0xff]
        %v1021 = vld [vmem:[%s11 + $0x10] sm:$0xff]
        %v1022 = vld [vmem:[%s11 + $0x18] sm:$0xff]
        %v1023 = vld [vmem:[%s11 + $0x20] sm:$0xff]
        %v1024 = vld [vmem:[%s11 + $0x28] sm:$0xff]
        %v1025 = vld [vmem:[%s11 + $0x30] sm:$0xff]
        %v1026 = vld [vmem:[%s11 + $0x38] sm:$0xff]
        %v1027 = vld [vmem:[%s11 + $0x40] sm:$0xff]
        %v1028 = vld [vmem:[%s11 + $0x48] sm:$0xff]
        %v1029 = vld [vmem:[%s11 + $0x50] sm:$0xff]
        %v1030 = vld [vmem:[%s11 + $0x58] sm:$0xff]
        %v1031 = vld [vmem:[%s11 + $0x60] sm:$0xff]
        %v1032 = vld [vmem:[%s11 + $0x68] sm:$0xff]
        %v1033 = vld [vmem:[%s11 + $0x70] sm:$0xff]
        %v1034 = vld [vmem:[%s11 + $0x78] sm:$0xff]
        %1036 = vset.pattern.permute.xlu0 0
        %1037 = vperm.xlu0 %1036, %v1019
        %v1038 = vpop.permute.xlu0 %1037
        %1041 = vset.pattern.permute.xlu0 0
        %1042 = vperm.xlu0 %1041, %v1020
        %v1043 = vpop.permute.xlu0 %1042
        %1046 = vset.pattern.permute.xlu0 0
        %1047 = vperm.xlu0 %1046, %v1021
        %v1048 = vpop.permute.xlu0 %1047
        %1051 = vset.pattern.permute.xlu0 0
        %1052 = vperm.xlu0 %1051, %v1022
        %v1053 = vpop.permute.xlu0 %1052
        %1056 = vset.pattern.permute.xlu0 0
        %1057 = vperm.xlu0 %1056, %v1023
        %v1058 = vpop.permute.xlu0 %1057
        %1061 = vset.pattern.permute.xlu0 0
        %1062 = vperm.xlu0 %1061, %v1024
        %v1063 = vpop.permute.xlu0 %1062
        %1066 = vset.pattern.permute.xlu0 0
        %1067 = vperm.xlu0 %1066, %v1025
        %v1068 = vpop.permute.xlu0 %1067
        %1071 = vset.pattern.permute.xlu0 0
        %1072 = vperm.xlu0 %1071, %v1026
        %v1073 = vpop.permute.xlu0 %1072
        %1076 = vset.pattern.permute.xlu0 0
        %1077 = vperm.xlu0 %1076, %v1027
        %v1078 = vpop.permute.xlu0 %1077
        %1081 = vset.pattern.permute.xlu0 0
        %1082 = vperm.xlu0 %1081, %v1028
        %v1083 = vpop.permute.xlu0 %1082
        %1086 = vset.pattern.permute.xlu0 0
        %1087 = vperm.xlu0 %1086, %v1029
        %v1088 = vpop.permute.xlu0 %1087
        %1091 = vset.pattern.permute.xlu0 0
        %1092 = vperm.xlu0 %1091, %v1030
        %v1093 = vpop.permute.xlu0 %1092
        %1096 = vset.pattern.permute.xlu0 0
        %1097 = vperm.xlu0 %1096, %v1031
        %v1098 = vpop.permute.xlu0 %1097
        %1101 = vset.pattern.permute.xlu0 0
        %1102 = vperm.xlu0 %1101, %v1032
        %v1103 = vpop.permute.xlu0 %1102
        %1106 = vset.pattern.permute.xlu0 0
        %1107 = vperm.xlu0 %1106, %v1033
        %v1108 = vpop.permute.xlu0 %1107
        %1111 = vset.pattern.permute.xlu0 0
        %1112 = vperm.xlu0 %1111, %v1034
        %v1113 = vpop.permute.xlu0 %1112
        %v1131 = vunpack.c.l.b16 %v1001
        %v1132 = vunpack.c.l.b16 %v1002
        %v1133 = vunpack.c.l.b16 %v1003
        %v1134 = vunpack.c.l.b16 %v1004
        %v1135 = vunpack.c.l.b16 %v1005
        %v1136 = vunpack.c.l.b16 %v1006
        %v1137 = vunpack.c.l.b16 %v1007
        %v1138 = vunpack.c.l.b16 %v1008
        %v1139 = vunpack.c.l.b16 %v1009
        %v1140 = vunpack.c.l.b16 %v1010
        %v1141 = vunpack.c.l.b16 %v1011
        %v1142 = vunpack.c.l.b16 %v1012
        %v1143 = vunpack.c.l.b16 %v1013
        %v1144 = vunpack.c.l.b16 %v1014
        %v1145 = vunpack.c.l.b16 %v1015
        %v1146 = vunpack.c.l.b16 %v1016
        %v1147 = vpack.c.b16 %v1132, %v1131
        %v1148 = vpack.c.b16 %v1134, %v1133
        %v1149 = vpack.c.b16 %v1136, %v1135
        %v1150 = vpack.c.b16 %v1138, %v1137
        %v1151 = vpack.c.b16 %v1140, %v1139
        %v1152 = vpack.c.b16 %v1142, %v1141
        %v1153 = vpack.c.b16 %v1144, %v1143
        %v1154 = vpack.c.b16 %v1146, %v1145
        %vm1155 = vcmask 261120
        %v1157 = vsel %vm1155, %v1147, 0
        %v1160 = vsel %vm1155, %v1148, 0
        %v1163 = vsel %vm1155, %v1149, 0
        %v1166 = vsel %vm1155, %v1150, 0
        %v1169 = vsel %vm1155, %v1151, 0
        %v1172 = vsel %vm1155, %v1152, 0
        %v1175 = vsel %vm1155, %v1153, 0
        %v1178 = vsel %vm1155, %v1154, 0
        %1180 = vmatpush.bf16.msra.mxu0 0
        %1181 = vmatpush.bf16.msra.mxu0 0
        %1182 = vmatpush.bf16.msra.mxu0 0
        %1183 = vmatpush.bf16.msra.mxu0 0
        %1184 = vmatpush.bf16.msra.mxu0 0
        %1185 = vmatpush.bf16.msra.mxu0 0
        %1186 = vmatpush.bf16.msra.mxu0 %v1018
        %1187 = vmatpush.bf16.msra.mxu0 %v1017
        %1188 = vmatmul.bf16.gmra.mxu0 %v1157
        %v1189 = vpop.f32.mrf.mxu0
        %v1190 = vadd.f32 %v1038, %v1189
        %v1191 = vpop.f32.mrf.mxu0
        %v1192 = vadd.f32 %v1043, %v1191
        %1193 = vmatmul.bf16.gmra.mxu0 %v1160
        %v1194 = vpop.f32.mrf.mxu0
        %v1195 = vadd.f32 %v1048, %v1194
        %v1196 = vpop.f32.mrf.mxu0
        %v1197 = vadd.f32 %v1053, %v1196
        %1198 = vmatmul.bf16.gmra.mxu0 %v1163
        %v1199 = vpop.f32.mrf.mxu0
        %v1200 = vadd.f32 %v1058, %v1199
        %v1201 = vpop.f32.mrf.mxu0
        %v1202 = vadd.f32 %v1063, %v1201
        %1203 = vmatmul.bf16.gmra.mxu0 %v1166
        %v1204 = vpop.f32.mrf.mxu0
        %v1205 = vadd.f32 %v1068, %v1204
        %v1206 = vpop.f32.mrf.mxu0
        %v1207 = vadd.f32 %v1073, %v1206
        %1208 = vmatmul.bf16.gmra.mxu0 %v1169
        %v1209 = vpop.f32.mrf.mxu0
        %v1210 = vadd.f32 %v1078, %v1209
        %v1211 = vpop.f32.mrf.mxu0
        %v1212 = vadd.f32 %v1083, %v1211
        %1213 = vmatmul.bf16.gmra.mxu0 %v1172
        %v1214 = vpop.f32.mrf.mxu0
        %v1215 = vadd.f32 %v1088, %v1214
        %v1216 = vpop.f32.mrf.mxu0
        %v1217 = vadd.f32 %v1093, %v1216
        %1218 = vmatmul.bf16.gmra.mxu0 %v1175
        %v1219 = vpop.f32.mrf.mxu0
        %v1220 = vadd.f32 %v1098, %v1219
        %v1221 = vpop.f32.mrf.mxu0
        %v1222 = vadd.f32 %v1103, %v1221
        %1223 = vmatmul.bf16.gmra.mxu0 %v1178
        %v1224 = vpop.f32.mrf.mxu0
        %v1225 = vadd.f32 %v1108, %v1224
        %v1226 = vpop.f32.mrf.mxu0
        %v1227 = vadd.f32 %v1113, %v1226
        %1228 = vdwg.mxu0
        %v1229 = vxor.u32 %v1190, 2147483648
        %v1230 = vxor.u32 %v1192, 2147483648
        %v1231 = vxor.u32 %v1195, 2147483648
        %v1232 = vxor.u32 %v1197, 2147483648
        %v1233 = vxor.u32 %v1200, 2147483648
        %v1234 = vxor.u32 %v1202, 2147483648
        %v1235 = vxor.u32 %v1205, 2147483648
        %v1236 = vxor.u32 %v1207, 2147483648
        %v1237 = vxor.u32 %v1210, 2147483648
        %v1238 = vxor.u32 %v1212, 2147483648
        %v1239 = vxor.u32 %v1215, 2147483648
        %v1240 = vxor.u32 %v1217, 2147483648
        %v1241 = vxor.u32 %v1220, 2147483648
        %v1242 = vxor.u32 %v1222, 2147483648
        %v1243 = vxor.u32 %v1225, 2147483648
        %v1244 = vxor.u32 %v1227, 2147483648
        %v1245 = vmul.f32 %v1229, 1.442695
        %v1246 = vpow.pop %v1245
        %v1247 = vmul.f32 %v1230, 1.442695
        %v1248 = vpow.pop %v1247
        %v1249 = vmul.f32 %v1231, 1.442695
        %v1250 = vpow.pop %v1249
        %v1251 = vmul.f32 %v1232, 1.442695
        %v1252 = vpow.pop %v1251
        %v1253 = vmul.f32 %v1233, 1.442695
        %v1254 = vpow.pop %v1253
        %v1255 = vmul.f32 %v1234, 1.442695
        %v1256 = vpow.pop %v1255
        %v1257 = vmul.f32 %v1235, 1.442695
        %v1258 = vpow.pop %v1257
        %v1259 = vmul.f32 %v1236, 1.442695
        %v1260 = vpow.pop %v1259
        %v1261 = vmul.f32 %v1237, 1.442695
        %v1262 = vpow.pop %v1261
        %v1263 = vmul.f32 %v1238, 1.442695
        %v1264 = vpow.pop %v1263
        %v1265 = vmul.f32 %v1239, 1.442695
        %v1266 = vpow.pop %v1265
        %v1267 = vmul.f32 %v1240, 1.442695
        %v1268 = vpow.pop %v1267
        %v1269 = vmul.f32 %v1241, 1.442695
        %v1270 = vpow.pop %v1269
        %v1271 = vmul.f32 %v1242, 1.442695
        %v1272 = vpow.pop %v1271
        %v1273 = vmul.f32 %v1243, 1.442695
        %v1274 = vpow.pop %v1273
        %v1275 = vmul.f32 %v1244, 1.442695
        %v1276 = vpow.pop %v1275
        %v1277 = vadd.f32 %v1246, 1.0
        %v1278 = vadd.f32 %v1248, 1.0
        %v1279 = vadd.f32 %v1250, 1.0
        %v1280 = vadd.f32 %v1252, 1.0
        %v1281 = vadd.f32 %v1254, 1.0
        %v1282 = vadd.f32 %v1256, 1.0
        %v1283 = vadd.f32 %v1258, 1.0
        %v1284 = vadd.f32 %v1260, 1.0
        %v1285 = vadd.f32 %v1262, 1.0
        %v1286 = vadd.f32 %v1264, 1.0
        %v1287 = vadd.f32 %v1266, 1.0
        %v1288 = vadd.f32 %v1268, 1.0
        %v1289 = vadd.f32 %v1270, 1.0
        %v1290 = vadd.f32 %v1272, 1.0
        %v1291 = vadd.f32 %v1274, 1.0
        %v1292 = vadd.f32 %v1276, 1.0
        %v1293 = vrcp.pop %v1277
        %v1294 = vmul.f32 %v1277, %v1293
        %v1295 = vsub.f32 1.0, %v1294
        %v1296 = vmul.f32 %v1293, %v1295
        %v1297 = vadd.f32 %v1293, %v1296
        %vm1298 = vweird.f32 %v1277
        %vm1299 = vweird.f32 %v1293
        %vm1300 = vmor %vm1298, %vm1299
        %v1301 = vsel %vm1300, %v1293, %v1297
        %v1302 = vand.u32 2147483647, %v1277
        %vm1303 = vcmp.eq.f32.partialorder %v1302, 8.507059e+37
        %v1304 = vand.u32 %v1277, 2147483648
        %v1305 = vor.u32 1.1754944e-38, %v1304
        %v1306 = vsel %vm1303, %v1305, %v1301
        %v1307 = vmul.f32 1.0, %v1306
        %v1308 = vrcp.pop %v1278
        %v1309 = vmul.f32 %v1278, %v1308
        %v1310 = vsub.f32 1.0, %v1309
        %v1311 = vmul.f32 %v1308, %v1310
        %v1312 = vadd.f32 %v1308, %v1311
        %vm1313 = vweird.f32 %v1278
        %vm1314 = vweird.f32 %v1308
        %vm1315 = vmor %vm1313, %vm1314
        %v1316 = vsel %vm1315, %v1308, %v1312
        %v1317 = vand.u32 2147483647, %v1278
        %vm1318 = vcmp.eq.f32.partialorder %v1317, 8.507059e+37
        %v1319 = vand.u32 %v1278, 2147483648
        %v1320 = vor.u32 1.1754944e-38, %v1319
        %v1321 = vsel %vm1318, %v1320, %v1316
        %v1322 = vmul.f32 1.0, %v1321
        %v1323 = vrcp.pop %v1279
        %v1324 = vmul.f32 %v1279, %v1323
        %v1325 = vsub.f32 1.0, %v1324
        %v1326 = vmul.f32 %v1323, %v1325
        %v1327 = vadd.f32 %v1323, %v1326
        %vm1328 = vweird.f32 %v1279
        %vm1329 = vweird.f32 %v1323
        %vm1330 = vmor %vm1328, %vm1329
        %v1331 = vsel %vm1330, %v1323, %v1327
        %v1332 = vand.u32 2147483647, %v1279
        %vm1333 = vcmp.eq.f32.partialorder %v1332, 8.507059e+37
        %v1334 = vand.u32 %v1279, 2147483648
        %v1335 = vor.u32 1.1754944e-38, %v1334
        %v1336 = vsel %vm1333, %v1335, %v1331
        %v1337 = vmul.f32 1.0, %v1336
        %v1338 = vrcp.pop %v1280
        %v1339 = vmul.f32 %v1280, %v1338
        %v1340 = vsub.f32 1.0, %v1339
        %v1341 = vmul.f32 %v1338, %v1340
        %v1342 = vadd.f32 %v1338, %v1341
        %vm1343 = vweird.f32 %v1280
        %vm1344 = vweird.f32 %v1338
        %vm1345 = vmor %vm1343, %vm1344
        %v1346 = vsel %vm1345, %v1338, %v1342
        %v1347 = vand.u32 2147483647, %v1280
        %vm1348 = vcmp.eq.f32.partialorder %v1347, 8.507059e+37
        %v1349 = vand.u32 %v1280, 2147483648
        %v1350 = vor.u32 1.1754944e-38, %v1349
        %v1351 = vsel %vm1348, %v1350, %v1346
        %v1352 = vmul.f32 1.0, %v1351
        %v1353 = vrcp.pop %v1281
        %v1354 = vmul.f32 %v1281, %v1353
        %v1355 = vsub.f32 1.0, %v1354
        %v1356 = vmul.f32 %v1353, %v1355
        %v1357 = vadd.f32 %v1353, %v1356
        %vm1358 = vweird.f32 %v1281
        %vm1359 = vweird.f32 %v1353
        %vm1360 = vmor %vm1358, %vm1359
        %v1361 = vsel %vm1360, %v1353, %v1357
        %v1362 = vand.u32 2147483647, %v1281
        %vm1363 = vcmp.eq.f32.partialorder %v1362, 8.507059e+37
        %v1364 = vand.u32 %v1281, 2147483648
        %v1365 = vor.u32 1.1754944e-38, %v1364
        %v1366 = vsel %vm1363, %v1365, %v1361
        %v1367 = vmul.f32 1.0, %v1366
        %v1368 = vrcp.pop %v1282
        %v1369 = vmul.f32 %v1282, %v1368
        %v1370 = vsub.f32 1.0, %v1369
        %v1371 = vmul.f32 %v1368, %v1370
        %v1372 = vadd.f32 %v1368, %v1371
        %vm1373 = vweird.f32 %v1282
        %vm1374 = vweird.f32 %v1368
        %vm1375 = vmor %vm1373, %vm1374
        %v1376 = vsel %vm1375, %v1368, %v1372
        %v1377 = vand.u32 2147483647, %v1282
        %vm1378 = vcmp.eq.f32.partialorder %v1377, 8.507059e+37
        %v1379 = vand.u32 %v1282, 2147483648
        %v1380 = vor.u32 1.1754944e-38, %v1379
        %v1381 = vsel %vm1378, %v1380, %v1376
        %v1382 = vmul.f32 1.0, %v1381
        %v1383 = vrcp.pop %v1283
        %v1384 = vmul.f32 %v1283, %v1383
        %v1385 = vsub.f32 1.0, %v1384
        %v1386 = vmul.f32 %v1383, %v1385
        %v1387 = vadd.f32 %v1383, %v1386
        %vm1388 = vweird.f32 %v1283
        %vm1389 = vweird.f32 %v1383
        %vm1390 = vmor %vm1388, %vm1389
        %v1391 = vsel %vm1390, %v1383, %v1387
        %v1392 = vand.u32 2147483647, %v1283
        %vm1393 = vcmp.eq.f32.partialorder %v1392, 8.507059e+37
        %v1394 = vand.u32 %v1283, 2147483648
        %v1395 = vor.u32 1.1754944e-38, %v1394
        %v1396 = vsel %vm1393, %v1395, %v1391
        %v1397 = vmul.f32 1.0, %v1396
        %v1398 = vrcp.pop %v1284
        %v1399 = vmul.f32 %v1284, %v1398
        %v1400 = vsub.f32 1.0, %v1399
        %v1401 = vmul.f32 %v1398, %v1400
        %v1402 = vadd.f32 %v1398, %v1401
        %vm1403 = vweird.f32 %v1284
        %vm1404 = vweird.f32 %v1398
        %vm1405 = vmor %vm1403, %vm1404
        %v1406 = vsel %vm1405, %v1398, %v1402
        %v1407 = vand.u32 2147483647, %v1284
        %vm1408 = vcmp.eq.f32.partialorder %v1407, 8.507059e+37
        %v1409 = vand.u32 %v1284, 2147483648
        %v1410 = vor.u32 1.1754944e-38, %v1409
        %v1411 = vsel %vm1408, %v1410, %v1406
        %v1412 = vmul.f32 1.0, %v1411
        %v1413 = vrcp.pop %v1285
        %v1414 = vmul.f32 %v1285, %v1413
        %v1415 = vsub.f32 1.0, %v1414
        %v1416 = vmul.f32 %v1413, %v1415
        %v1417 = vadd.f32 %v1413, %v1416
        %vm1418 = vweird.f32 %v1285
        %vm1419 = vweird.f32 %v1413
        %vm1420 = vmor %vm1418, %vm1419
        %v1421 = vsel %vm1420, %v1413, %v1417
        %v1422 = vand.u32 2147483647, %v1285
        %vm1423 = vcmp.eq.f32.partialorder %v1422, 8.507059e+37
        %v1424 = vand.u32 %v1285, 2147483648
        %v1425 = vor.u32 1.1754944e-38, %v1424
        %v1426 = vsel %vm1423, %v1425, %v1421
        %v1427 = vmul.f32 1.0, %v1426
        %v1428 = vrcp.pop %v1286
        %v1429 = vmul.f32 %v1286, %v1428
        %v1430 = vsub.f32 1.0, %v1429
        %v1431 = vmul.f32 %v1428, %v1430
        %v1432 = vadd.f32 %v1428, %v1431
        %vm1433 = vweird.f32 %v1286
        %vm1434 = vweird.f32 %v1428
        %vm1435 = vmor %vm1433, %vm1434
        %v1436 = vsel %vm1435, %v1428, %v1432
        %v1437 = vand.u32 2147483647, %v1286
        %vm1438 = vcmp.eq.f32.partialorder %v1437, 8.507059e+37
        %v1439 = vand.u32 %v1286, 2147483648
        %v1440 = vor.u32 1.1754944e-38, %v1439
        %v1441 = vsel %vm1438, %v1440, %v1436
        %v1442 = vmul.f32 1.0, %v1441
        %v1443 = vrcp.pop %v1287
        %v1444 = vmul.f32 %v1287, %v1443
        %v1445 = vsub.f32 1.0, %v1444
        %v1446 = vmul.f32 %v1443, %v1445
        %v1447 = vadd.f32 %v1443, %v1446
        %vm1448 = vweird.f32 %v1287
        %vm1449 = vweird.f32 %v1443
        %vm1450 = vmor %vm1448, %vm1449
        %v1451 = vsel %vm1450, %v1443, %v1447
        %v1452 = vand.u32 2147483647, %v1287
        %vm1453 = vcmp.eq.f32.partialorder %v1452, 8.507059e+37
        %v1454 = vand.u32 %v1287, 2147483648
        %v1455 = vor.u32 1.1754944e-38, %v1454
        %v1456 = vsel %vm1453, %v1455, %v1451
        %v1457 = vmul.f32 1.0, %v1456
        %v1458 = vrcp.pop %v1288
        %v1459 = vmul.f32 %v1288, %v1458
        %v1460 = vsub.f32 1.0, %v1459
        %v1461 = vmul.f32 %v1458, %v1460
        %v1462 = vadd.f32 %v1458, %v1461
        %vm1463 = vweird.f32 %v1288
        %vm1464 = vweird.f32 %v1458
        %vm1465 = vmor %vm1463, %vm1464
        %v1466 = vsel %vm1465, %v1458, %v1462
        %v1467 = vand.u32 2147483647, %v1288
        %vm1468 = vcmp.eq.f32.partialorder %v1467, 8.507059e+37
        %v1469 = vand.u32 %v1288, 2147483648
        %v1470 = vor.u32 1.1754944e-38, %v1469
        %v1471 = vsel %vm1468, %v1470, %v1466
        %v1472 = vmul.f32 1.0, %v1471
        %v1473 = vrcp.pop %v1289
        %v1474 = vmul.f32 %v1289, %v1473
        %v1475 = vsub.f32 1.0, %v1474
        %v1476 = vmul.f32 %v1473, %v1475
        %v1477 = vadd.f32 %v1473, %v1476
        %vm1478 = vweird.f32 %v1289
        %vm1479 = vweird.f32 %v1473
        %vm1480 = vmor %vm1478, %vm1479
        %v1481 = vsel %vm1480, %v1473, %v1477
        %v1482 = vand.u32 2147483647, %v1289
        %vm1483 = vcmp.eq.f32.partialorder %v1482, 8.507059e+37
        %v1484 = vand.u32 %v1289, 2147483648
        %v1485 = vor.u32 1.1754944e-38, %v1484
        %v1486 = vsel %vm1483, %v1485, %v1481
        %v1487 = vmul.f32 1.0, %v1486
        %v1488 = vrcp.pop %v1290
        %v1489 = vmul.f32 %v1290, %v1488
        %v1490 = vsub.f32 1.0, %v1489
        %v1491 = vmul.f32 %v1488, %v1490
        %v1492 = vadd.f32 %v1488, %v1491
        %vm1493 = vweird.f32 %v1290
        %vm1494 = vweird.f32 %v1488
        %vm1495 = vmor %vm1493, %vm1494
        %v1496 = vsel %vm1495, %v1488, %v1492
        %v1497 = vand.u32 2147483647, %v1290
        %vm1498 = vcmp.eq.f32.partialorder %v1497, 8.507059e+37
        %v1499 = vand.u32 %v1290, 2147483648
        %v1500 = vor.u32 1.1754944e-38, %v1499
        %v1501 = vsel %vm1498, %v1500, %v1496
        %v1502 = vmul.f32 1.0, %v1501
        %v1503 = vrcp.pop %v1291
        %v1504 = vmul.f32 %v1291, %v1503
        %v1505 = vsub.f32 1.0, %v1504
        %v1506 = vmul.f32 %v1503, %v1505
        %v1507 = vadd.f32 %v1503, %v1506
        %vm1508 = vweird.f32 %v1291
        %vm1509 = vweird.f32 %v1503
        %vm1510 = vmor %vm1508, %vm1509
        %v1511 = vsel %vm1510, %v1503, %v1507
        %v1512 = vand.u32 2147483647, %v1291
        %vm1513 = vcmp.eq.f32.partialorder %v1512, 8.507059e+37
        %v1514 = vand.u32 %v1291, 2147483648
        %v1515 = vor.u32 1.1754944e-38, %v1514
        %v1516 = vsel %vm1513, %v1515, %v1511
        %v1517 = vmul.f32 1.0, %v1516
        %v1518 = vrcp.pop %v1292
        %v1519 = vmul.f32 %v1292, %v1518
        %v1520 = vsub.f32 1.0, %v1519
        %v1521 = vmul.f32 %v1518, %v1520
        %v1522 = vadd.f32 %v1518, %v1521
        %vm1523 = vweird.f32 %v1292
        %vm1524 = vweird.f32 %v1518
        %vm1525 = vmor %vm1523, %vm1524
        %v1526 = vsel %vm1525, %v1518, %v1522
        %v1527 = vand.u32 2147483647, %v1292
        %vm1528 = vcmp.eq.f32.partialorder %v1527, 8.507059e+37
        %v1529 = vand.u32 %v1292, 2147483648
        %v1530 = vor.u32 1.1754944e-38, %v1529
        %v1531 = vsel %vm1528, %v1530, %v1526
        %v1532 = vmul.f32 1.0, %v1531
        %v1533 = vmul.f32 %v1190, %v1307
        %v1534 = vmul.f32 %v1192, %v1322
        %v1535 = vmul.f32 %v1195, %v1337
        %v1536 = vmul.f32 %v1197, %v1352
        %v1537 = vmul.f32 %v1200, %v1367
        %v1538 = vmul.f32 %v1202, %v1382
        %v1539 = vmul.f32 %v1205, %v1397
        %v1540 = vmul.f32 %v1207, %v1412
        %v1541 = vmul.f32 %v1210, %v1427
        %v1542 = vmul.f32 %v1212, %v1442
        %v1543 = vmul.f32 %v1215, %v1457
        %v1544 = vmul.f32 %v1217, %v1472
        %v1545 = vmul.f32 %v1220, %v1487
        %v1546 = vmul.f32 %v1222, %v1502
        %v1547 = vmul.f32 %v1225, %v1517
        %v1548 = vmul.f32 %v1227, %v1532
        %v1549 = vld [vmem:[%s12] sm:$0xf]
        %v1550 = vld [vmem:[%s12 + $0x4] sm:$0xf]
        %v1551 = vld [vmem:[%s12 + $0x8] sm:$0xf]
        %v1552 = vld [vmem:[%s12 + $0xc] sm:$0xf]
        %v1553 = vpack.c.bf16 %v1534, %v1533
        %v1554 = vpack.c.bf16 %v1536, %v1535
        %v1555 = vpack.c.bf16 %v1538, %v1537
        %v1556 = vpack.c.bf16 %v1540, %v1539
        %v1557 = vpack.c.bf16 %v1542, %v1541
        %v1558 = vpack.c.bf16 %v1544, %v1543
        %v1559 = vpack.c.bf16 %v1546, %v1545
        %v1560 = vpack.c.bf16 %v1548, %v1547
        %v1561 = vld [vmem:[%s13] sm:$0xff]
        %v1562 = vld [vmem:[%s13 + $0x8] sm:$0xff]
        %v1563 = vld [vmem:[%s13 + $0x10] sm:$0xff]
        %v1564 = vld [vmem:[%s13 + $0x18] sm:$0xff]
        %1566 = vset.pattern.permute.xlu0 0
        %1567 = vperm.xlu0 %1566, %v1561
        %v1568 = vpop.permute.xlu0 %1567
        %1571 = vset.pattern.permute.xlu0 0
        %1572 = vperm.xlu0 %1571, %v1562
        %v1573 = vpop.permute.xlu0 %1572
        %1576 = vset.pattern.permute.xlu0 0
        %1577 = vperm.xlu0 %1576, %v1563
        %v1578 = vpop.permute.xlu0 %1577
        %1581 = vset.pattern.permute.xlu0 0
        %1582 = vperm.xlu0 %1581, %v1564
        %v1583 = vpop.permute.xlu0 %1582
        %v1589 = vunpack.c.l.b16 %v1549
        %v1590 = vunpack.c.l.b16 %v1550
        %v1591 = vunpack.c.l.b16 %v1551
        %v1592 = vunpack.c.l.b16 %v1552
        %v1593 = vpack.c.b16 %v1590, %v1589
        %v1594 = vpack.c.b16 %v1592, %v1591
        %1597 = vmatpush.bf16.msra.mxu0 %v1560
        %1598 = vmatpush.bf16.msra.mxu0 %v1559
        %1599 = vmatpush.bf16.msra.mxu0 %v1558
        %1600 = vmatpush.bf16.msra.mxu0 %v1557
        %1601 = vmatpush.bf16.msra.mxu0 %v1556
        %1602 = vmatpush.bf16.msra.mxu0 %v1555
        %1603 = vmatpush.bf16.msra.mxu0 %v1554
        %1604 = vmatpush.bf16.msra.mxu0 %v1553
        %1605 = vmatmul.bf16.gmra.mxu0 %v1593
        %v1606 = vpop.f32.mrf.mxu0
        %v1607 = vadd.f32 %v1568, %v1606
        %v1608 = vpop.f32.mrf.mxu0
        %v1609 = vadd.f32 %v1573, %v1608
        %1610 = vmatmul.bf16.gmra.mxu0 %v1594
        %v1611 = vpop.f32.mrf.mxu0
        %v1612 = vadd.f32 %v1578, %v1611
        %v1613 = vpop.f32.mrf.mxu0
        %v1614 = vadd.f32 %v1583, %v1613
        %1615 = vdwg.mxu0
        %v1616 = vadd.f32 %v1607, %v992
        %v1617 = vadd.f32 %v1609, %v994
        %v1618 = vadd.f32 %v1612, %v997
        %v1619 = vadd.f32 %v1614, %v999
        %v1620 = vld [vmem:[%s14] sm:$0xff]
        %v1621 = vld [vmem:[%s14 + $0x8] sm:$0xff]
        %v1622 = vld [vmem:[%s14 + $0x10] sm:$0xff]
        %v1623 = vld [vmem:[%s14 + $0x18] sm:$0xff]
        %v1624 = vld [vmem:[%s15] sm:$0xff]
        %v1625 = vld [vmem:[%s15 + $0x8] sm:$0xff]
        %v1626 = vld [vmem:[%s15 + $0x10] sm:$0xff]
        %v1627 = vld [vmem:[%s15 + $0x18] sm:$0xff]
        %v1628 = vsel %vm736, %v1616, 0.0
        %v1629 = vsel %vm736, %v1617, 0.0
        %v1630 = vadd.f32 %v1628, %v1629
        %v1631 = vsel %vm736, %v1618, 0.0
        %v1632 = vadd.f32 %v1630, %v1631
        %v1633 = vsel %vm736, %v1619, 0.0
        %v1634 = vadd.f32 %v1632, %v1633
        %v1635 = vrot.slane %v1634, 4
        %v1636 = vadd.f32 %v1634, %v1635
        %v1637 = vrot.slane %v1636, 2
        %v1638 = vadd.f32 %v1636, %v1637
        %v1639 = vrot.slane %v1638, 1
        %v1640 = vadd.f32 %v1638, %v1639
        %v1641 = vmul.f32 %v1640, %v756
        %v1642 = vsub.f32 %v1616, %v1641
        %v1643 = vsub.f32 %v1617, %v1641
        %v1644 = vsub.f32 %v1618, %v1641
        %v1645 = vsub.f32 %v1619, %v1641
        %v1646 = vmul.f32 %v1642, %v1642
        %v1647 = vmul.f32 %v1643, %v1643
        %v1648 = vmul.f32 %v1644, %v1644
        %v1649 = vmul.f32 %v1645, %v1645
        %v1650 = vsel %vm736, %v1646, 0.0
        %v1651 = vsel %vm736, %v1647, 0.0
        %v1652 = vadd.f32 %v1650, %v1651
        %v1653 = vsel %vm736, %v1648, 0.0
        %v1654 = vadd.f32 %v1652, %v1653
        %v1655 = vsel %vm736, %v1649, 0.0
        %v1656 = vadd.f32 %v1654, %v1655
        %v1657 = vrot.slane %v1656, 4
        %v1658 = vadd.f32 %v1656, %v1657
        %v1659 = vrot.slane %v1658, 2
        %v1660 = vadd.f32 %v1658, %v1659
        %v1661 = vrot.slane %v1660, 1
        %v1662 = vadd.f32 %v1660, %v1661
        %v1663 = vmul.f32 %v1662, %v756
        %v1664 = vadd.f32 %v1663, 1e-05
        %v1665 = vrsqrt.pop %v1664
        %v1666 = vmul.f32 %v1665, %v1664
        %v1667 = vmul.f32 %v1666, %v1665
        %v1668 = vmul.f32 0.5, %v1667
        %v1669 = vsub.f32 1.5, %v1668
        %v1670 = vmul.f32 %v1665, %v1669
        %vm1671 = vweird.f32 %v1664
        %vm1672 = vweird.f32 %v1665
        %vm1673 = vmor %vm1671, %vm1672
        %v1674 = vsel %vm1673, %v1665, %v1670
        %v1675 = vmul.f32 %v1642, %v1674
        %v1676 = vmul.f32 %v1643, %v1674
        %v1677 = vmul.f32 %v1644, %v1674
        %v1678 = vmul.f32 %v1645, %v1674
        %1680 = vset.pattern.permute.xlu0 0
        %1681 = vperm.xlu0 %1680, %v1620
        %v1682 = vpop.permute.xlu0 %1681
        %1685 = vset.pattern.permute.xlu0 0
        %1686 = vperm.xlu0 %1685, %v1621
        %v1687 = vpop.permute.xlu0 %1686
        %1690 = vset.pattern.permute.xlu0 0
        %1691 = vperm.xlu0 %1690, %v1622
        %v1692 = vpop.permute.xlu0 %1691
        %1695 = vset.pattern.permute.xlu0 0
        %1696 = vperm.xlu0 %1695, %v1623
        %v1697 = vpop.permute.xlu0 %1696
        %v1699 = vmul.f32 %v1675, %v1682
        %v1700 = vmul.f32 %v1676, %v1687
        %v1701 = vmul.f32 %v1677, %v1692
        %v1702 = vmul.f32 %v1678, %v1697
        %1704 = vset.pattern.permute.xlu0 0
        %1705 = vperm.xlu0 %1704, %v1624
        %v1706 = vpop.permute.xlu0 %1705
        %1709 = vset.pattern.permute.xlu0 0
        %1710 = vperm.xlu0 %1709, %v1625
        %v1711 = vpop.permute.xlu0 %1710
        %1714 = vset.pattern.permute.xlu0 0
        %1715 = vperm.xlu0 %1714, %v1626
        %v1716 = vpop.permute.xlu0 %1715
        %1719 = vset.pattern.permute.xlu0 0
        %1720 = vperm.xlu0 %1719, %v1627
        %v1721 = vpop.permute.xlu0 %1720
        %v1723 = vadd.f32 %v1699, %v1706
        %v1724 = vadd.f32 %v1700, %v1711
        %v1725 = vadd.f32 %v1701, %v1716
        %v1726 = vadd.f32 %v1702, %v1721
        %1727 = vst [vmem:[#allocation3] sm:$0xff] 0.0
        %1728 = vst [vmem:[#allocation3 + $0x8] sm:$0xff] 0.0
        %1729 = vst [vmem:[#allocation3 + $0x10] sm:$0xff] 0.0
        %1730 = vst [vmem:[#allocation3 + $0x18] sm:$0xff] 0.0
        %1731 = vst.msk [vmem:[#allocation3] sm:$0xff] %vm736, %v1723
        %1732 = vst.msk [vmem:[#allocation3 + $0x8] sm:$0xff] %vm736, %v1724
        %1733 = vst.msk [vmem:[#allocation3 + $0x10] sm:$0xff] %vm736, %v1725
        %1734 = vst.msk [vmem:[#allocation3 + $0x18] sm:$0xff] %vm736, %v1726
        %v1735 = vld [vmem:[#allocation3] sm:$0xff]
        %v1736 = vld [vmem:[#allocation3 + $0x8] sm:$0xff]
        %v1737 = vld [vmem:[#allocation3 + $0x10] sm:$0xff]
        %v1738 = vld [vmem:[#allocation3 + $0x18] sm:$0xff]
        %v1739 = vpack.c.bf16 %v1735, %v1735
        %v1740 = vpack.c.bf16 %v1736, %v1736
        %v1741 = vpack.c.bf16 %v1737, %v1737
        %v1742 = vpack.c.bf16 %v1738, %v1738
        %v1743 = vld [vmem:[%s646] sm:$0xff]
        %v1744 = vld [vmem:[%s646 + $0x8] sm:$0xff]
        %v1745 = vld [vmem:[%s646 + $0x10] sm:$0xff]
        %v1746 = vld [vmem:[%s646 + $0x18] sm:$0xff]
        %v1747 = vld [vmem:[%s17] sm:$0xff]
        %v1748 = vld [vmem:[%s17 + $0x8] sm:$0xff]
        %v1749 = vld [vmem:[%s17 + $0x10] sm:$0xff]
        %v1750 = vld [vmem:[%s17 + $0x18] sm:$0xff]
        %v1751 = vld [vmem:[%s17 + $0x20] sm:$0xff]
        %v1752 = vld [vmem:[%s17 + $0x28] sm:$0xff]
        %v1753 = vld [vmem:[%s17 + $0x30] sm:$0xff]
        %v1754 = vld [vmem:[%s17 + $0x38] sm:$0xff]
        %1756 = vset.pattern.permute.xlu0 0
        %1757 = vperm.xlu0 %1756, %v1743
        %v1758 = vpop.permute.xlu0 %1757
        %1761 = vset.pattern.permute.xlu0 0
        %1762 = vperm.xlu0 %1761, %v1744
        %v1763 = vpop.permute.xlu0 %1762
        %1766 = vset.pattern.permute.xlu0 0
        %1767 = vperm.xlu0 %1766, %v1745
        %v1768 = vpop.permute.xlu0 %1767
        %1771 = vset.pattern.permute.xlu0 0
        %1772 = vperm.xlu0 %1771, %v1746
        %v1773 = vpop.permute.xlu0 %1772
        %v1775 = vadd.f32 %v931, %v1758
        %v1776 = vadd.f32 %v932, %v1763
        %v1777 = vadd.f32 %v933, %v1768
        %v1778 = vadd.f32 %v934, %v1773
        %v1779 = vmul.f32 %v1775, %v657
        %v1780 = vmul.f32 %v1776, %v657
        %v1781 = vmul.f32 %v1777, %v657
        %v1782 = vmul.f32 %v1778, %v657
        %1783 = vrot.lane.b32.xlu0 %v1779, 1
        %v1784 = vpop.permute.xlu0 %1783
        %1785 = vrot.lane.b32.xlu0 %v1780, 1
        %v1786 = vpop.permute.xlu0 %1785
        %1787 = vrot.lane.b32.xlu0 %v1781, 1
        %v1788 = vpop.permute.xlu0 %1787
        %1789 = vrot.lane.b32.xlu0 %v1782, 1
        %v1790 = vpop.permute.xlu0 %1789
        %v1791 = vpack.c.bf16 %v1784, %v1784
        %v1792 = vpack.c.bf16 %v1786, %v1786
        %v1793 = vpack.c.bf16 %v1788, %v1788
        %v1794 = vpack.c.bf16 %v1790, %v1790
        %v1795 = vpack.c.bf16 %v1779, %v1779
        %v1796 = vpack.c.bf16 %v1780, %v1780
        %v1797 = vpack.c.bf16 %v1781, %v1781
        %v1798 = vpack.c.bf16 %v1782, %v1782
        %1799 = vrot.lane.b32.xlu0 %v1779, 127
        %v1800 = vpop.permute.xlu0 %1799
        %1801 = vrot.lane.b32.xlu0 %v1780, 127
        %v1802 = vpop.permute.xlu0 %1801
        %1803 = vrot.lane.b32.xlu0 %v1781, 127
        %v1804 = vpop.permute.xlu0 %1803
        %1805 = vrot.lane.b32.xlu0 %v1782, 127
        %v1806 = vpop.permute.xlu0 %1805
        %v1807 = vpack.c.bf16 %v1800, %v1800
        %v1808 = vpack.c.bf16 %v1802, %v1802
        %v1809 = vpack.c.bf16 %v1804, %v1804
        %v1810 = vpack.c.bf16 %v1806, %v1806
        %v1815 = vunpack.c.l.b16 %v1791
        %v1816 = vunpack.c.l.b16 %v1792
        %v1817 = vunpack.c.l.b16 %v1793
        %v1818 = vunpack.c.l.b16 %v1794
        %v1819 = vpack.c.b16 %v1816, %v1815
        %v1820 = vpack.c.b16 %v1818, %v1817
        %v1827 = vunpack.c.l.b16 %v1795
        %v1828 = vunpack.c.l.b16 %v1796
        %v1829 = vunpack.c.l.b16 %v1797
        %v1830 = vunpack.c.l.b16 %v1798
        %v1831 = vpack.c.b16 %v1828, %v1827
        %v1832 = vpack.c.b16 %v1830, %v1829
        %v1839 = vunpack.c.l.b16 %v1807
        %v1840 = vunpack.c.l.b16 %v1808
        %v1841 = vunpack.c.l.b16 %v1809
        %v1842 = vunpack.c.l.b16 %v1810
        %v1843 = vpack.c.b16 %v1840, %v1839
        %v1844 = vpack.c.b16 %v1842, %v1841
        %v1851 = vunpack.c.l.b16 %v1739
        %v1852 = vunpack.c.l.b16 %v1740
        %v1853 = vunpack.c.l.b16 %v1741
        %v1854 = vunpack.c.l.b16 %v1742
        %v1855 = vpack.c.b16 %v1852, %v1851
        %v1856 = vpack.c.b16 %v1854, %v1853
        %v1859 = vld [vmem:[%s16] sm:$0xf]
        %v1860 = vld [vmem:[%s16 + $0x4] sm:$0xf]
        %v1861 = vld [vmem:[%s16 + $0x8] sm:$0xf]
        %v1862 = vld [vmem:[%s16 + $0xc] sm:$0xf]
        %v1863 = vld [vmem:[%s16 + $0x10] sm:$0xf]
        %v1864 = vld [vmem:[%s16 + $0x14] sm:$0xf]
        %v1865 = vld [vmem:[%s16 + $0x18] sm:$0xf]
        %v1866 = vld [vmem:[%s16 + $0x1c] sm:$0xf]
        %1868 = vset.pattern.permute.xlu0 0
        %1869 = vperm.xlu0 %1868, %v1747
        %v1870 = vpop.permute.xlu0 %1869
        %1873 = vset.pattern.permute.xlu0 0
        %1874 = vperm.xlu0 %1873, %v1748
        %v1875 = vpop.permute.xlu0 %1874
        %1878 = vset.pattern.permute.xlu0 0
        %1879 = vperm.xlu0 %1878, %v1749
        %v1880 = vpop.permute.xlu0 %1879
        %1883 = vset.pattern.permute.xlu0 0
        %1884 = vperm.xlu0 %1883, %v1750
        %v1885 = vpop.permute.xlu0 %1884
        %1888 = vset.pattern.permute.xlu0 0
        %1889 = vperm.xlu0 %1888, %v1751
        %v1890 = vpop.permute.xlu0 %1889
        %1893 = vset.pattern.permute.xlu0 0
        %1894 = vperm.xlu0 %1893, %v1752
        %v1895 = vpop.permute.xlu0 %1894
        %1898 = vset.pattern.permute.xlu0 0
        %1899 = vperm.xlu0 %1898, %v1753
        %v1900 = vpop.permute.xlu0 %1899
        %1903 = vset.pattern.permute.xlu0 0
        %1904 = vperm.xlu0 %1903, %v1754
        %v1905 = vpop.permute.xlu0 %1904
        %v1915 = vunpack.c.l.b16 %v1859
        %v1916 = vunpack.c.l.b16 %v1860
        %v1917 = vunpack.c.l.b16 %v1861
        %v1918 = vunpack.c.l.b16 %v1862
        %v1919 = vunpack.c.l.b16 %v1863
        %v1920 = vunpack.c.l.b16 %v1864
        %v1921 = vunpack.c.l.b16 %v1865
        %v1922 = vunpack.c.l.b16 %v1866
        %v1923 = vpack.c.b16 %v1916, %v1915
        %v1924 = vpack.c.b16 %v1918, %v1917
        %v1925 = vpack.c.b16 %v1920, %v1919
        %v1926 = vpack.c.b16 %v1922, %v1921
        %1931 = vmatpush.bf16.msra.mxu0 %v1856
        %1932 = vmatpush.bf16.msra.mxu0 %v1855
        %1933 = vmatpush.bf16.msra.mxu0 %v1844
        %1934 = vmatpush.bf16.msra.mxu0 %v1843
        %1935 = vmatpush.bf16.msra.mxu0 %v1832
        %1936 = vmatpush.bf16.msra.mxu0 %v1831
        %1937 = vmatpush.bf16.msra.mxu0 %v1820
        %1938 = vmatpush.bf16.msra.mxu0 %v1819
        %1939 = vmatmul.bf16.gmra.mxu0 %v1923
        %v1940 = vpop.f32.mrf.mxu0
        %v1941 = vadd.f32 %v1870, %v1940
        %v1942 = vpop.f32.mrf.mxu0
        %v1943 = vadd.f32 %v1875, %v1942
        %1944 = vmatmul.bf16.gmra.mxu0 %v1924
        %v1945 = vpop.f32.mrf.mxu0
        %v1946 = vadd.f32 %v1880, %v1945
        %v1947 = vpop.f32.mrf.mxu0
        %v1948 = vadd.f32 %v1885, %v1947
        %1949 = vmatmul.bf16.gmra.mxu0 %v1925
        %v1950 = vpop.f32.mrf.mxu0
        %v1951 = vadd.f32 %v1890, %v1950
        %v1952 = vpop.f32.mrf.mxu0
        %v1953 = vadd.f32 %v1895, %v1952
        %1954 = vmatmul.bf16.gmra.mxu0 %v1926
        %v1955 = vpop.f32.mrf.mxu0
        %v1956 = vadd.f32 %v1900, %v1955
        %v1957 = vpop.f32.mrf.mxu0
        %v1958 = vadd.f32 %v1905, %v1957
        %1959 = vdwg.mxu0
        %v1960 = vtanh.pop %v1941
        %v1961 = vtanh.pop %v1943
        %v1962 = vtanh.pop %v1946
        %v1963 = vtanh.pop %v1948
        %v1964 = vxor.u32 %v1951, 2147483648
        %v1965 = vxor.u32 %v1953, 2147483648
        %v1966 = vxor.u32 %v1956, 2147483648
        %v1967 = vxor.u32 %v1958, 2147483648
        %v1968 = vmul.f32 %v1964, 1.442695
        %v1969 = vpow.pop %v1968
        %v1970 = vmul.f32 %v1965, 1.442695
        %v1971 = vpow.pop %v1970
        %v1972 = vmul.f32 %v1966, 1.442695
        %v1973 = vpow.pop %v1972
        %v1974 = vmul.f32 %v1967, 1.442695
        %v1975 = vpow.pop %v1974
        %v1976 = vadd.f32 %v1969, 1.0
        %v1977 = vadd.f32 %v1971, 1.0
        %v1978 = vadd.f32 %v1973, 1.0
        %v1979 = vadd.f32 %v1975, 1.0
        %v1980 = vrcp.pop %v1976
        %v1981 = vmul.f32 %v1976, %v1980
        %v1982 = vsub.f32 1.0, %v1981
        %v1983 = vmul.f32 %v1980, %v1982
        %v1984 = vadd.f32 %v1980, %v1983
        %vm1985 = vweird.f32 %v1976
        %vm1986 = vweird.f32 %v1980
        %vm1987 = vmor %vm1985, %vm1986
        %v1988 = vsel %vm1987, %v1980, %v1984
        %v1989 = vand.u32 2147483647, %v1976
        %vm1990 = vcmp.eq.f32.partialorder %v1989, 8.507059e+37
        %v1991 = vand.u32 %v1976, 2147483648
        %v1992 = vor.u32 1.1754944e-38, %v1991
        %v1993 = vsel %vm1990, %v1992, %v1988
        %v1994 = vmul.f32 1.0, %v1993
        %v1995 = vrcp.pop %v1977
        %v1996 = vmul.f32 %v1977, %v1995
        %v1997 = vsub.f32 1.0, %v1996
        %v1998 = vmul.f32 %v1995, %v1997
        %v1999 = vadd.f32 %v1995, %v1998
        %vm2000 = vweird.f32 %v1977
        %vm2001 = vweird.f32 %v1995
        %vm2002 = vmor %vm2000, %vm2001
        %v2003 = vsel %vm2002, %v1995, %v1999
        %v2004 = vand.u32 2147483647, %v1977
        %vm2005 = vcmp.eq.f32.partialorder %v2004, 8.507059e+37
        %v2006 = vand.u32 %v1977, 2147483648
        %v2007 = vor.u32 1.1754944e-38, %v2006
        %v2008 = vsel %vm2005, %v2007, %v2003
        %v2009 = vmul.f32 1.0, %v2008
        %v2010 = vrcp.pop %v1978
        %v2011 = vmul.f32 %v1978, %v2010
        %v2012 = vsub.f32 1.0, %v2011
        %v2013 = vmul.f32 %v2010, %v2012
        %v2014 = vadd.f32 %v2010, %v2013
        %vm2015 = vweird.f32 %v1978
        %vm2016 = vweird.f32 %v2010
        %vm2017 = vmor %vm2015, %vm2016
        %v2018 = vsel %vm2017, %v2010, %v2014
        %v2019 = vand.u32 2147483647, %v1978
        %vm2020 = vcmp.eq.f32.partialorder %v2019, 8.507059e+37
        %v2021 = vand.u32 %v1978, 2147483648
        %v2022 = vor.u32 1.1754944e-38, %v2021
        %v2023 = vsel %vm2020, %v2022, %v2018
        %v2024 = vmul.f32 1.0, %v2023
        %v2025 = vrcp.pop %v1979
        %v2026 = vmul.f32 %v1979, %v2025
        %v2027 = vsub.f32 1.0, %v2026
        %v2028 = vmul.f32 %v2025, %v2027
        %v2029 = vadd.f32 %v2025, %v2028
        %vm2030 = vweird.f32 %v1979
        %vm2031 = vweird.f32 %v2025
        %vm2032 = vmor %vm2030, %vm2031
        %v2033 = vsel %vm2032, %v2025, %v2029
        %v2034 = vand.u32 2147483647, %v1979
        %vm2035 = vcmp.eq.f32.partialorder %v2034, 8.507059e+37
        %v2036 = vand.u32 %v1979, 2147483648
        %v2037 = vor.u32 1.1754944e-38, %v2036
        %v2038 = vsel %vm2035, %v2037, %v2033
        %v2039 = vmul.f32 1.0, %v2038
        %v2040 = vmul.f32 %v1960, %v1994
        %v2041 = vmul.f32 %v1961, %v2009
        %v2042 = vmul.f32 %v1962, %v2024
        %v2043 = vmul.f32 %v1963, %v2039
        %v2044 = vmul.f32 %v2040, %v654
        %v2045 = vmul.f32 %v2041, %v654
        %v2046 = vmul.f32 %v2042, %v654
        %v2047 = vmul.f32 %v2043, %v654
        %v2048 = vadd.f32 %v2044, 0.0
        %v2049 = vadd.f32 %v2045, 0.0
        %v2050 = vadd.f32 %v2046, 0.0
        %v2051 = vadd.f32 %v2047, 0.0
        %v2052 = vadd.f32 %v931, %v2044
        %v2053 = vadd.f32 %v932, %v2045
        %v2054 = vadd.f32 %v933, %v2046
        %v2055 = vadd.f32 %v934, %v2047
        %2056 = vset.pattern.permute.xlu0 1
        %2057 = vperm.xlu0 %2056, %v1743
        %v2058 = vpop.permute.xlu0 %2057
        %2060 = vset.pattern.permute.xlu0 1
        %2061 = vperm.xlu0 %2060, %v1744
        %v2062 = vpop.permute.xlu0 %2061
        %2064 = vset.pattern.permute.xlu0 1
        %2065 = vperm.xlu0 %2064, %v1745
        %v2066 = vpop.permute.xlu0 %2065
        %2068 = vset.pattern.permute.xlu0 1
        %2069 = vperm.xlu0 %2068, %v1746
        %v2070 = vpop.permute.xlu0 %2069
        %v2072 = vadd.f32 %v2052, %v2058
        %v2073 = vadd.f32 %v2053, %v2062
        %v2074 = vadd.f32 %v2054, %v2066
        %v2075 = vadd.f32 %v2055, %v2070
        %v2076 = vmul.f32 %v2072, %v657
        %v2077 = vmul.f32 %v2073, %v657
        %v2078 = vmul.f32 %v2074, %v657
        %v2079 = vmul.f32 %v2075, %v657
        %2080 = vrot.lane.b32.xlu0 %v2076, 1
        %v2081 = vpop.permute.xlu0 %2080
        %2082 = vrot.lane.b32.xlu0 %v2077, 1
        %v2083 = vpop.permute.xlu0 %2082
        %2084 = vrot.lane.b32.xlu0 %v2078, 1
        %v2085 = vpop.permute.xlu0 %2084
        %2086 = vrot.lane.b32.xlu0 %v2079, 1
        %v2087 = vpop.permute.xlu0 %2086
        %v2088 = vpack.c.bf16 %v2081, %v2081
        %v2089 = vpack.c.bf16 %v2083, %v2083
        %v2090 = vpack.c.bf16 %v2085, %v2085
        %v2091 = vpack.c.bf16 %v2087, %v2087
        %v2092 = vpack.c.bf16 %v2076, %v2076
        %v2093 = vpack.c.bf16 %v2077, %v2077
        %v2094 = vpack.c.bf16 %v2078, %v2078
        %v2095 = vpack.c.bf16 %v2079, %v2079
        %2096 = vrot.lane.b32.xlu0 %v2076, 127
        %v2097 = vpop.permute.xlu0 %2096
        %2098 = vrot.lane.b32.xlu0 %v2077, 127
        %v2099 = vpop.permute.xlu0 %2098
        %2100 = vrot.lane.b32.xlu0 %v2078, 127
        %v2101 = vpop.permute.xlu0 %2100
        %2102 = vrot.lane.b32.xlu0 %v2079, 127
        %v2103 = vpop.permute.xlu0 %2102
        %v2104 = vpack.c.bf16 %v2097, %v2097
        %v2105 = vpack.c.bf16 %v2099, %v2099
        %v2106 = vpack.c.bf16 %v2101, %v2101
        %v2107 = vpack.c.bf16 %v2103, %v2103
        %v2112 = vunpack.c.l.b16 %v2088
        %v2113 = vunpack.c.l.b16 %v2089
        %v2114 = vunpack.c.l.b16 %v2090
        %v2115 = vunpack.c.l.b16 %v2091
        %v2116 = vpack.c.b16 %v2113, %v2112
        %v2117 = vpack.c.b16 %v2115, %v2114
        %v2124 = vunpack.c.l.b16 %v2092
        %v2125 = vunpack.c.l.b16 %v2093
        %v2126 = vunpack.c.l.b16 %v2094
        %v2127 = vunpack.c.l.b16 %v2095
        %v2128 = vpack.c.b16 %v2125, %v2124
        %v2129 = vpack.c.b16 %v2127, %v2126
        %v2136 = vunpack.c.l.b16 %v2104
        %v2137 = vunpack.c.l.b16 %v2105
        %v2138 = vunpack.c.l.b16 %v2106
        %v2139 = vunpack.c.l.b16 %v2107
        %v2140 = vpack.c.b16 %v2137, %v2136
        %v2141 = vpack.c.b16 %v2139, %v2138
        %s2144 = scalar_lea.vmem %s16, 32
        %v2145 = vld [vmem:[%s2144] sm:$0xf]
        %v2146 = vld [vmem:[%s2144 + $0x4] sm:$0xf]
        %v2147 = vld [vmem:[%s2144 + $0x8] sm:$0xf]
        %v2148 = vld [vmem:[%s2144 + $0xc] sm:$0xf]
        %v2149 = vld [vmem:[%s2144 + $0x10] sm:$0xf]
        %v2150 = vld [vmem:[%s2144 + $0x14] sm:$0xf]
        %v2151 = vld [vmem:[%s2144 + $0x18] sm:$0xf]
        %v2152 = vld [vmem:[%s2144 + $0x1c] sm:$0xf]
        %2153 = vset.pattern.permute.xlu0 1
        %2154 = vperm.xlu0 %2153, %v1747
        %v2155 = vpop.permute.xlu0 %2154
        %2157 = vset.pattern.permute.xlu0 1
        %2158 = vperm.xlu0 %2157, %v1748
        %v2159 = vpop.permute.xlu0 %2158
        %2161 = vset.pattern.permute.xlu0 1
        %2162 = vperm.xlu0 %2161, %v1749
        %v2163 = vpop.permute.xlu0 %2162
        %2165 = vset.pattern.permute.xlu0 1
        %2166 = vperm.xlu0 %2165, %v1750
        %v2167 = vpop.permute.xlu0 %2166
        %2169 = vset.pattern.permute.xlu0 1
        %2170 = vperm.xlu0 %2169, %v1751
        %v2171 = vpop.permute.xlu0 %2170
        %2173 = vset.pattern.permute.xlu0 1
        %2174 = vperm.xlu0 %2173, %v1752
        %v2175 = vpop.permute.xlu0 %2174
        %2177 = vset.pattern.permute.xlu0 1
        %2178 = vperm.xlu0 %2177, %v1753
        %v2179 = vpop.permute.xlu0 %2178
        %2181 = vset.pattern.permute.xlu0 1
        %2182 = vperm.xlu0 %2181, %v1754
        %v2183 = vpop.permute.xlu0 %2182
        %v2193 = vunpack.c.l.b16 %v2145
        %v2194 = vunpack.c.l.b16 %v2146
        %v2195 = vunpack.c.l.b16 %v2147
        %v2196 = vunpack.c.l.b16 %v2148
        %v2197 = vunpack.c.l.b16 %v2149
        %v2198 = vunpack.c.l.b16 %v2150
        %v2199 = vunpack.c.l.b16 %v2151
        %v2200 = vunpack.c.l.b16 %v2152
        %v2201 = vpack.c.b16 %v2194, %v2193
        %v2202 = vpack.c.b16 %v2196, %v2195
        %v2203 = vpack.c.b16 %v2198, %v2197
        %v2204 = vpack.c.b16 %v2200, %v2199
        %2209 = vmatpush.bf16.msra.mxu0 %v1856
        %2210 = vmatpush.bf16.msra.mxu0 %v1855
        %2211 = vmatpush.bf16.msra.mxu0 %v2141
        %2212 = vmatpush.bf16.msra.mxu0 %v2140
        %2213 = vmatpush.bf16.msra.mxu0 %v2129
        %2214 = vmatpush.bf16.msra.mxu0 %v2128
        %2215 = vmatpush.bf16.msra.mxu0 %v2117
        %2216 = vmatpush.bf16.msra.mxu0 %v2116
        %2217 = vmatmul.bf16.gmra.mxu0 %v2201
        %v2218 = vpop.f32.mrf.mxu0
        %v2219 = vadd.f32 %v2155, %v2218
        %v2220 = vpop.f32.mrf.mxu0
        %v2221 = vadd.f32 %v2159, %v2220
        %2222 = vmatmul.bf16.gmra.mxu0 %v2202
        %v2223 = vpop.f32.mrf.mxu0
        %v2224 = vadd.f32 %v2163, %v2223
        %v2225 = vpop.f32.mrf.mxu0
        %v2226 = vadd.f32 %v2167, %v2225
        %2227 = vmatmul.bf16.gmra.mxu0 %v2203
        %v2228 = vpop.f32.mrf.mxu0
        %v2229 = vadd.f32 %v2171, %v2228
        %v2230 = vpop.f32.mrf.mxu0
        %v2231 = vadd.f32 %v2175, %v2230
        %2232 = vmatmul.bf16.gmra.mxu0 %v2204
        %v2233 = vpop.f32.mrf.mxu0
        %v2234 = vadd.f32 %v2179, %v2233
        %v2235 = vpop.f32.mrf.mxu0
        %v2236 = vadd.f32 %v2183, %v2235
        %2237 = vdwg.mxu0
        %v2238 = vtanh.pop %v2219
        %v2239 = vtanh.pop %v2221
        %v2240 = vtanh.pop %v2224
        %v2241 = vtanh.pop %v2226
        %v2242 = vxor.u32 %v2229, 2147483648
        %v2243 = vxor.u32 %v2231, 2147483648
        %v2244 = vxor.u32 %v2234, 2147483648
        %v2245 = vxor.u32 %v2236, 2147483648
        %v2246 = vmul.f32 %v2242, 1.442695
        %v2247 = vpow.pop %v2246
        %v2248 = vmul.f32 %v2243, 1.442695
        %v2249 = vpow.pop %v2248
        %v2250 = vmul.f32 %v2244, 1.442695
        %v2251 = vpow.pop %v2250
        %v2252 = vmul.f32 %v2245, 1.442695
        %v2253 = vpow.pop %v2252
        %v2254 = vadd.f32 %v2247, 1.0
        %v2255 = vadd.f32 %v2249, 1.0
        %v2256 = vadd.f32 %v2251, 1.0
        %v2257 = vadd.f32 %v2253, 1.0
        %v2258 = vrcp.pop %v2254
        %v2259 = vmul.f32 %v2254, %v2258
        %v2260 = vsub.f32 1.0, %v2259
        %v2261 = vmul.f32 %v2258, %v2260
        %v2262 = vadd.f32 %v2258, %v2261
        %vm2263 = vweird.f32 %v2254
        %vm2264 = vweird.f32 %v2258
        %vm2265 = vmor %vm2263, %vm2264
        %v2266 = vsel %vm2265, %v2258, %v2262
        %v2267 = vand.u32 2147483647, %v2254
        %vm2268 = vcmp.eq.f32.partialorder %v2267, 8.507059e+37
        %v2269 = vand.u32 %v2254, 2147483648
        %v2270 = vor.u32 1.1754944e-38, %v2269
        %v2271 = vsel %vm2268, %v2270, %v2266
        %v2272 = vmul.f32 1.0, %v2271
        %v2273 = vrcp.pop %v2255
        %v2274 = vmul.f32 %v2255, %v2273
        %v2275 = vsub.f32 1.0, %v2274
        %v2276 = vmul.f32 %v2273, %v2275
        %v2277 = vadd.f32 %v2273, %v2276
        %vm2278 = vweird.f32 %v2255
        %vm2279 = vweird.f32 %v2273
        %vm2280 = vmor %vm2278, %vm2279
        %v2281 = vsel %vm2280, %v2273, %v2277
        %v2282 = vand.u32 2147483647, %v2255
        %vm2283 = vcmp.eq.f32.partialorder %v2282, 8.507059e+37
        %v2284 = vand.u32 %v2255, 2147483648
        %v2285 = vor.u32 1.1754944e-38, %v2284
        %v2286 = vsel %vm2283, %v2285, %v2281
        %v2287 = vmul.f32 1.0, %v2286
        %v2288 = vrcp.pop %v2256
        %v2289 = vmul.f32 %v2256, %v2288
        %v2290 = vsub.f32 1.0, %v2289
        %v2291 = vmul.f32 %v2288, %v2290
        %v2292 = vadd.f32 %v2288, %v2291
        %vm2293 = vweird.f32 %v2256
        %vm2294 = vweird.f32 %v2288
        %vm2295 = vmor %vm2293, %vm2294
        %v2296 = vsel %vm2295, %v2288, %v2292
        %v2297 = vand.u32 2147483647, %v2256
        %vm2298 = vcmp.eq.f32.partialorder %v2297, 8.507059e+37
        %v2299 = vand.u32 %v2256, 2147483648
        %v2300 = vor.u32 1.1754944e-38, %v2299
        %v2301 = vsel %vm2298, %v2300, %v2296
        %v2302 = vmul.f32 1.0, %v2301
        %v2303 = vrcp.pop %v2257
        %v2304 = vmul.f32 %v2257, %v2303
        %v2305 = vsub.f32 1.0, %v2304
        %v2306 = vmul.f32 %v2303, %v2305
        %v2307 = vadd.f32 %v2303, %v2306
        %vm2308 = vweird.f32 %v2257
        %vm2309 = vweird.f32 %v2303
        %vm2310 = vmor %vm2308, %vm2309
        %v2311 = vsel %vm2310, %v2303, %v2307
        %v2312 = vand.u32 2147483647, %v2257
        %vm2313 = vcmp.eq.f32.partialorder %v2312, 8.507059e+37
        %v2314 = vand.u32 %v2257, 2147483648
        %v2315 = vor.u32 1.1754944e-38, %v2314
        %v2316 = vsel %vm2313, %v2315, %v2311
        %v2317 = vmul.f32 1.0, %v2316
        %v2318 = vmul.f32 %v2238, %v2272
        %v2319 = vmul.f32 %v2239, %v2287
        %v2320 = vmul.f32 %v2240, %v2302
        %v2321 = vmul.f32 %v2241, %v2317
        %v2322 = vmul.f32 %v2318, %v654
        %v2323 = vmul.f32 %v2319, %v654
        %v2324 = vmul.f32 %v2320, %v654
        %v2325 = vmul.f32 %v2321, %v654
        %v2326 = vadd.f32 %v2048, %v2322
        %v2327 = vadd.f32 %v2049, %v2323
        %v2328 = vadd.f32 %v2050, %v2324
        %v2329 = vadd.f32 %v2051, %v2325
        %v2330 = vadd.f32 %v2052, %v2322
        %v2331 = vadd.f32 %v2053, %v2323
        %v2332 = vadd.f32 %v2054, %v2324
        %v2333 = vadd.f32 %v2055, %v2325
        %2334 = vset.pattern.permute.xlu0 2
        %2335 = vperm.xlu0 %2334, %v1743
        %v2336 = vpop.permute.xlu0 %2335
        %2338 = vset.pattern.permute.xlu0 2
        %2339 = vperm.xlu0 %2338, %v1744
        %v2340 = vpop.permute.xlu0 %2339
        %2342 = vset.pattern.permute.xlu0 2
        %2343 = vperm.xlu0 %2342, %v1745
        %v2344 = vpop.permute.xlu0 %2343
        %2346 = vset.pattern.permute.xlu0 2
        %2347 = vperm.xlu0 %2346, %v1746
        %v2348 = vpop.permute.xlu0 %2347
        %v2350 = vadd.f32 %v2330, %v2336
        %v2351 = vadd.f32 %v2331, %v2340
        %v2352 = vadd.f32 %v2332, %v2344
        %v2353 = vadd.f32 %v2333, %v2348
        %v2354 = vmul.f32 %v2350, %v657
        %v2355 = vmul.f32 %v2351, %v657
        %v2356 = vmul.f32 %v2352, %v657
        %v2357 = vmul.f32 %v2353, %v657
        %2358 = vrot.lane.b32.xlu0 %v2354, 1
        %v2359 = vpop.permute.xlu0 %2358
        %2360 = vrot.lane.b32.xlu0 %v2355, 1
        %v2361 = vpop.permute.xlu0 %2360
        %2362 = vrot.lane.b32.xlu0 %v2356, 1
        %v2363 = vpop.permute.xlu0 %2362
        %2364 = vrot.lane.b32.xlu0 %v2357, 1
        %v2365 = vpop.permute.xlu0 %2364
        %v2366 = vpack.c.bf16 %v2359, %v2359
        %v2367 = vpack.c.bf16 %v2361, %v2361
        %v2368 = vpack.c.bf16 %v2363, %v2363
        %v2369 = vpack.c.bf16 %v2365, %v2365
        %v2370 = vpack.c.bf16 %v2354, %v2354
        %v2371 = vpack.c.bf16 %v2355, %v2355
        %v2372 = vpack.c.bf16 %v2356, %v2356
        %v2373 = vpack.c.bf16 %v2357, %v2357
        %2374 = vrot.lane.b32.xlu0 %v2354, 127
        %v2375 = vpop.permute.xlu0 %2374
        %2376 = vrot.lane.b32.xlu0 %v2355, 127
        %v2377 = vpop.permute.xlu0 %2376
        %2378 = vrot.lane.b32.xlu0 %v2356, 127
        %v2379 = vpop.permute.xlu0 %2378
        %2380 = vrot.lane.b32.xlu0 %v2357, 127
        %v2381 = vpop.permute.xlu0 %2380
        %v2382 = vpack.c.bf16 %v2375, %v2375
        %v2383 = vpack.c.bf16 %v2377, %v2377
        %v2384 = vpack.c.bf16 %v2379, %v2379
        %v2385 = vpack.c.bf16 %v2381, %v2381
        %v2390 = vunpack.c.l.b16 %v2366
        %v2391 = vunpack.c.l.b16 %v2367
        %v2392 = vunpack.c.l.b16 %v2368
        %v2393 = vunpack.c.l.b16 %v2369
        %v2394 = vpack.c.b16 %v2391, %v2390
        %v2395 = vpack.c.b16 %v2393, %v2392
        %v2402 = vunpack.c.l.b16 %v2370
        %v2403 = vunpack.c.l.b16 %v2371
        %v2404 = vunpack.c.l.b16 %v2372
        %v2405 = vunpack.c.l.b16 %v2373
        %v2406 = vpack.c.b16 %v2403, %v2402
        %v2407 = vpack.c.b16 %v2405, %v2404
        %v2414 = vunpack.c.l.b16 %v2382
        %v2415 = vunpack.c.l.b16 %v2383
        %v2416 = vunpack.c.l.b16 %v2384
        %v2417 = vunpack.c.l.b16 %v2385
        %v2418 = vpack.c.b16 %v2415, %v2414
        %v2419 = vpack.c.b16 %v2417, %v2416
        %s2422 = scalar_lea.vmem %s16, 64
        %v2423 = vld [vmem:[%s2422] sm:$0xf]
        %v2424 = vld [vmem:[%s2422 + $0x4] sm:$0xf]
        %v2425 = vld [vmem:[%s2422 + $0x8] sm:$0xf]
        %v2426 = vld [vmem:[%s2422 + $0xc] sm:$0xf]
        %v2427 = vld [vmem:[%s2422 + $0x10] sm:$0xf]
        %v2428 = vld [vmem:[%s2422 + $0x14] sm:$0xf]
        %v2429 = vld [vmem:[%s2422 + $0x18] sm:$0xf]
        %v2430 = vld [vmem:[%s2422 + $0x1c] sm:$0xf]
        %2431 = vset.pattern.permute.xlu0 2
        %2432 = vperm.xlu0 %2431, %v1747
        %v2433 = vpop.permute.xlu0 %2432
        %2435 = vset.pattern.permute.xlu0 2
        %2436 = vperm.xlu0 %2435, %v1748
        %v2437 = vpop.permute.xlu0 %2436
        %2439 = vset.pattern.permute.xlu0 2
        %2440 = vperm.xlu0 %2439, %v1749
        %v2441 = vpop.permute.xlu0 %2440
        %2443 = vset.pattern.permute.xlu0 2
        %2444 = vperm.xlu0 %2443, %v1750
        %v2445 = vpop.permute.xlu0 %2444
        %2447 = vset.pattern.permute.xlu0 2
        %2448 = vperm.xlu0 %2447, %v1751
        %v2449 = vpop.permute.xlu0 %2448
        %2451 = vset.pattern.permute.xlu0 2
        %2452 = vperm.xlu0 %2451, %v1752
        %v2453 = vpop.permute.xlu0 %2452
        %2455 = vset.pattern.permute.xlu0 2
        %2456 = vperm.xlu0 %2455, %v1753
        %v2457 = vpop.permute.xlu0 %2456
        %2459 = vset.pattern.permute.xlu0 2
        %2460 = vperm.xlu0 %2459, %v1754
        %v2461 = vpop.permute.xlu0 %2460
        %v2471 = vunpack.c.l.b16 %v2423
        %v2472 = vunpack.c.l.b16 %v2424
        %v2473 = vunpack.c.l.b16 %v2425
        %v2474 = vunpack.c.l.b16 %v2426
        %v2475 = vunpack.c.l.b16 %v2427
        %v2476 = vunpack.c.l.b16 %v2428
        %v2477 = vunpack.c.l.b16 %v2429
        %v2478 = vunpack.c.l.b16 %v2430
        %v2479 = vpack.c.b16 %v2472, %v2471
        %v2480 = vpack.c.b16 %v2474, %v2473
        %v2481 = vpack.c.b16 %v2476, %v2475
        %v2482 = vpack.c.b16 %v2478, %v2477
        %2487 = vmatpush.bf16.msra.mxu0 %v1856
        %2488 = vmatpush.bf16.msra.mxu0 %v1855
        %2489 = vmatpush.bf16.msra.mxu0 %v2419
        %2490 = vmatpush.bf16.msra.mxu0 %v2418
        %2491 = vmatpush.bf16.msra.mxu0 %v2407
        %2492 = vmatpush.bf16.msra.mxu0 %v2406
        %2493 = vmatpush.bf16.msra.mxu0 %v2395
        %2494 = vmatpush.bf16.msra.mxu0 %v2394
        %2495 = vmatmul.bf16.gmra.mxu0 %v2479
        %v2496 = vpop.f32.mrf.mxu0
        %v2497 = vadd.f32 %v2433, %v2496
        %v2498 = vpop.f32.mrf.mxu0
        %v2499 = vadd.f32 %v2437, %v2498
        %2500 = vmatmul.bf16.gmra.mxu0 %v2480
        %v2501 = vpop.f32.mrf.mxu0
        %v2502 = vadd.f32 %v2441, %v2501
        %v2503 = vpop.f32.mrf.mxu0
        %v2504 = vadd.f32 %v2445, %v2503
        %2505 = vmatmul.bf16.gmra.mxu0 %v2481
        %v2506 = vpop.f32.mrf.mxu0
        %v2507 = vadd.f32 %v2449, %v2506
        %v2508 = vpop.f32.mrf.mxu0
        %v2509 = vadd.f32 %v2453, %v2508
        %2510 = vmatmul.bf16.gmra.mxu0 %v2482
        %v2511 = vpop.f32.mrf.mxu0
        %v2512 = vadd.f32 %v2457, %v2511
        %v2513 = vpop.f32.mrf.mxu0
        %v2514 = vadd.f32 %v2461, %v2513
        %2515 = vdwg.mxu0
        %v2516 = vtanh.pop %v2497
        %v2517 = vtanh.pop %v2499
        %v2518 = vtanh.pop %v2502
        %v2519 = vtanh.pop %v2504
        %v2520 = vxor.u32 %v2507, 2147483648
        %v2521 = vxor.u32 %v2509, 2147483648
        %v2522 = vxor.u32 %v2512, 2147483648
        %v2523 = vxor.u32 %v2514, 2147483648
        %v2524 = vmul.f32 %v2520, 1.442695
        %v2525 = vpow.pop %v2524
        %v2526 = vmul.f32 %v2521, 1.442695
        %v2527 = vpow.pop %v2526
        %v2528 = vmul.f32 %v2522, 1.442695
        %v2529 = vpow.pop %v2528
        %v2530 = vmul.f32 %v2523, 1.442695
        %v2531 = vpow.pop %v2530
        %v2532 = vadd.f32 %v2525, 1.0
        %v2533 = vadd.f32 %v2527, 1.0
        %v2534 = vadd.f32 %v2529, 1.0
        %v2535 = vadd.f32 %v2531, 1.0
        %v2536 = vrcp.pop %v2532
        %v2537 = vmul.f32 %v2532, %v2536
        %v2538 = vsub.f32 1.0, %v2537
        %v2539 = vmul.f32 %v2536, %v2538
        %v2540 = vadd.f32 %v2536, %v2539
        %vm2541 = vweird.f32 %v2532
        %vm2542 = vweird.f32 %v2536
        %vm2543 = vmor %vm2541, %vm2542
        %v2544 = vsel %vm2543, %v2536, %v2540
        %v2545 = vand.u32 2147483647, %v2532
        %vm2546 = vcmp.eq.f32.partialorder %v2545, 8.507059e+37
        %v2547 = vand.u32 %v2532, 2147483648
        %v2548 = vor.u32 1.1754944e-38, %v2547
        %v2549 = vsel %vm2546, %v2548, %v2544
        %v2550 = vmul.f32 1.0, %v2549
        %v2551 = vrcp.pop %v2533
        %v2552 = vmul.f32 %v2533, %v2551
        %v2553 = vsub.f32 1.0, %v2552
        %v2554 = vmul.f32 %v2551, %v2553
        %v2555 = vadd.f32 %v2551, %v2554
        %vm2556 = vweird.f32 %v2533
        %vm2557 = vweird.f32 %v2551
        %vm2558 = vmor %vm2556, %vm2557
        %v2559 = vsel %vm2558, %v2551, %v2555
        %v2560 = vand.u32 2147483647, %v2533
        %vm2561 = vcmp.eq.f32.partialorder %v2560, 8.507059e+37
        %v2562 = vand.u32 %v2533, 2147483648
        %v2563 = vor.u32 1.1754944e-38, %v2562
        %v2564 = vsel %vm2561, %v2563, %v2559
        %v2565 = vmul.f32 1.0, %v2564
        %v2566 = vrcp.pop %v2534
        %v2567 = vmul.f32 %v2534, %v2566
        %v2568 = vsub.f32 1.0, %v2567
        %v2569 = vmul.f32 %v2566, %v2568
        %v2570 = vadd.f32 %v2566, %v2569
        %vm2571 = vweird.f32 %v2534
        %vm2572 = vweird.f32 %v2566
        %vm2573 = vmor %vm2571, %vm2572
        %v2574 = vsel %vm2573, %v2566, %v2570
        %v2575 = vand.u32 2147483647, %v2534
        %vm2576 = vcmp.eq.f32.partialorder %v2575, 8.507059e+37
        %v2577 = vand.u32 %v2534, 2147483648
        %v2578 = vor.u32 1.1754944e-38, %v2577
        %v2579 = vsel %vm2576, %v2578, %v2574
        %v2580 = vmul.f32 1.0, %v2579
        %v2581 = vrcp.pop %v2535
        %v2582 = vmul.f32 %v2535, %v2581
        %v2583 = vsub.f32 1.0, %v2582
        %v2584 = vmul.f32 %v2581, %v2583
        %v2585 = vadd.f32 %v2581, %v2584
        %vm2586 = vweird.f32 %v2535
        %vm2587 = vweird.f32 %v2581
        %vm2588 = vmor %vm2586, %vm2587
        %v2589 = vsel %vm2588, %v2581, %v2585
        %v2590 = vand.u32 2147483647, %v2535
        %vm2591 = vcmp.eq.f32.partialorder %v2590, 8.507059e+37
        %v2592 = vand.u32 %v2535, 2147483648
        %v2593 = vor.u32 1.1754944e-38, %v2592
        %v2594 = vsel %vm2591, %v2593, %v2589
        %v2595 = vmul.f32 1.0, %v2594
        %v2596 = vmul.f32 %v2516, %v2550
        %v2597 = vmul.f32 %v2517, %v2565
        %v2598 = vmul.f32 %v2518, %v2580
        %v2599 = vmul.f32 %v2519, %v2595
        %v2600 = vmul.f32 %v2596, %v654
        %v2601 = vmul.f32 %v2597, %v654
        %v2602 = vmul.f32 %v2598, %v654
        %v2603 = vmul.f32 %v2599, %v654
        %v2604 = vadd.f32 %v2326, %v2600
        %v2605 = vadd.f32 %v2327, %v2601
        %v2606 = vadd.f32 %v2328, %v2602
        %v2607 = vadd.f32 %v2329, %v2603
        %v2608 = vadd.f32 %v2330, %v2600
        %v2609 = vadd.f32 %v2331, %v2601
        %v2610 = vadd.f32 %v2332, %v2602
        %v2611 = vadd.f32 %v2333, %v2603
        %2612 = vset.pattern.permute.xlu0 3
        %2613 = vperm.xlu0 %2612, %v1743
        %v2614 = vpop.permute.xlu0 %2613
        %2616 = vset.pattern.permute.xlu0 3
        %2617 = vperm.xlu0 %2616, %v1744
        %v2618 = vpop.permute.xlu0 %2617
        %2620 = vset.pattern.permute.xlu0 3
        %2621 = vperm.xlu0 %2620, %v1745
        %v2622 = vpop.permute.xlu0 %2621
        %2624 = vset.pattern.permute.xlu0 3
        %2625 = vperm.xlu0 %2624, %v1746
        %v2626 = vpop.permute.xlu0 %2625
        %v2628 = vadd.f32 %v2608, %v2614
        %v2629 = vadd.f32 %v2609, %v2618
        %v2630 = vadd.f32 %v2610, %v2622
        %v2631 = vadd.f32 %v2611, %v2626
        %v2632 = vmul.f32 %v2628, %v657
        %v2633 = vmul.f32 %v2629, %v657
        %v2634 = vmul.f32 %v2630, %v657
        %v2635 = vmul.f32 %v2631, %v657
        %2636 = vrot.lane.b32.xlu0 %v2632, 1
        %v2637 = vpop.permute.xlu0 %2636
        %2638 = vrot.lane.b32.xlu0 %v2633, 1
        %v2639 = vpop.permute.xlu0 %2638
        %2640 = vrot.lane.b32.xlu0 %v2634, 1
        %v2641 = vpop.permute.xlu0 %2640
        %2642 = vrot.lane.b32.xlu0 %v2635, 1
        %v2643 = vpop.permute.xlu0 %2642
        %v2644 = vpack.c.bf16 %v2637, %v2637
        %v2645 = vpack.c.bf16 %v2639, %v2639
        %v2646 = vpack.c.bf16 %v2641, %v2641
        %v2647 = vpack.c.bf16 %v2643, %v2643
        %v2648 = vpack.c.bf16 %v2632, %v2632
        %v2649 = vpack.c.bf16 %v2633, %v2633
        %v2650 = vpack.c.bf16 %v2634, %v2634
        %v2651 = vpack.c.bf16 %v2635, %v2635
        %2652 = vrot.lane.b32.xlu0 %v2632, 127
        %v2653 = vpop.permute.xlu0 %2652
        %2654 = vrot.lane.b32.xlu0 %v2633, 127
        %v2655 = vpop.permute.xlu0 %2654
        %2656 = vrot.lane.b32.xlu0 %v2634, 127
        %v2657 = vpop.permute.xlu0 %2656
        %2658 = vrot.lane.b32.xlu0 %v2635, 127
        %v2659 = vpop.permute.xlu0 %2658
        %v2660 = vpack.c.bf16 %v2653, %v2653
        %v2661 = vpack.c.bf16 %v2655, %v2655
        %v2662 = vpack.c.bf16 %v2657, %v2657
        %v2663 = vpack.c.bf16 %v2659, %v2659
        %v2668 = vunpack.c.l.b16 %v2644
        %v2669 = vunpack.c.l.b16 %v2645
        %v2670 = vunpack.c.l.b16 %v2646
        %v2671 = vunpack.c.l.b16 %v2647
        %v2672 = vpack.c.b16 %v2669, %v2668
        %v2673 = vpack.c.b16 %v2671, %v2670
        %v2680 = vunpack.c.l.b16 %v2648
        %v2681 = vunpack.c.l.b16 %v2649
        %v2682 = vunpack.c.l.b16 %v2650
        %v2683 = vunpack.c.l.b16 %v2651
        %v2684 = vpack.c.b16 %v2681, %v2680
        %v2685 = vpack.c.b16 %v2683, %v2682
        %v2692 = vunpack.c.l.b16 %v2660
        %v2693 = vunpack.c.l.b16 %v2661
        %v2694 = vunpack.c.l.b16 %v2662
        %v2695 = vunpack.c.l.b16 %v2663
        %v2696 = vpack.c.b16 %v2693, %v2692
        %v2697 = vpack.c.b16 %v2695, %v2694
        %s2700 = scalar_lea.vmem %s16, 96
        %v2701 = vld [vmem:[%s2700] sm:$0xf]
        %v2702 = vld [vmem:[%s2700 + $0x4] sm:$0xf]
        %v2703 = vld [vmem:[%s2700 + $0x8] sm:$0xf]
        %v2704 = vld [vmem:[%s2700 + $0xc] sm:$0xf]
        %v2705 = vld [vmem:[%s2700 + $0x10] sm:$0xf]
        %v2706 = vld [vmem:[%s2700 + $0x14] sm:$0xf]
        %v2707 = vld [vmem:[%s2700 + $0x18] sm:$0xf]
        %v2708 = vld [vmem:[%s2700 + $0x1c] sm:$0xf]
        %2709 = vset.pattern.permute.xlu0 3
        %2710 = vperm.xlu0 %2709, %v1747
        %v2711 = vpop.permute.xlu0 %2710
        %2713 = vset.pattern.permute.xlu0 3
        %2714 = vperm.xlu0 %2713, %v1748
        %v2715 = vpop.permute.xlu0 %2714
        %2717 = vset.pattern.permute.xlu0 3
        %2718 = vperm.xlu0 %2717, %v1749
        %v2719 = vpop.permute.xlu0 %2718
        %2721 = vset.pattern.permute.xlu0 3
        %2722 = vperm.xlu0 %2721, %v1750
        %v2723 = vpop.permute.xlu0 %2722
        %2725 = vset.pattern.permute.xlu0 3
        %2726 = vperm.xlu0 %2725, %v1751
        %v2727 = vpop.permute.xlu0 %2726
        %2729 = vset.pattern.permute.xlu0 3
        %2730 = vperm.xlu0 %2729, %v1752
        %v2731 = vpop.permute.xlu0 %2730
        %2733 = vset.pattern.permute.xlu0 3
        %2734 = vperm.xlu0 %2733, %v1753
        %v2735 = vpop.permute.xlu0 %2734
        %2737 = vset.pattern.permute.xlu0 3
        %2738 = vperm.xlu0 %2737, %v1754
        %v2739 = vpop.permute.xlu0 %2738
        %v2749 = vunpack.c.l.b16 %v2701
        %v2750 = vunpack.c.l.b16 %v2702
        %v2751 = vunpack.c.l.b16 %v2703
        %v2752 = vunpack.c.l.b16 %v2704
        %v2753 = vunpack.c.l.b16 %v2705
        %v2754 = vunpack.c.l.b16 %v2706
        %v2755 = vunpack.c.l.b16 %v2707
        %v2756 = vunpack.c.l.b16 %v2708
        %v2757 = vpack.c.b16 %v2750, %v2749
        %v2758 = vpack.c.b16 %v2752, %v2751
        %v2759 = vpack.c.b16 %v2754, %v2753
        %v2760 = vpack.c.b16 %v2756, %v2755
        %2765 = vmatpush.bf16.msra.mxu0 %v1856
        %2766 = vmatpush.bf16.msra.mxu0 %v1855
        %2767 = vmatpush.bf16.msra.mxu0 %v2697
        %2768 = vmatpush.bf16.msra.mxu0 %v2696
        %2769 = vmatpush.bf16.msra.mxu0 %v2685
        %2770 = vmatpush.bf16.msra.mxu0 %v2684
        %2771 = vmatpush.bf16.msra.mxu0 %v2673
        %2772 = vmatpush.bf16.msra.mxu0 %v2672
        %2773 = vmatmul.bf16.gmra.mxu0 %v2757
        %v2774 = vpop.f32.mrf.mxu0
        %v2775 = vadd.f32 %v2711, %v2774
        %v2776 = vpop.f32.mrf.mxu0
        %v2777 = vadd.f32 %v2715, %v2776
        %2778 = vmatmul.bf16.gmra.mxu0 %v2758
        %v2779 = vpop.f32.mrf.mxu0
        %v2780 = vadd.f32 %v2719, %v2779
        %v2781 = vpop.f32.mrf.mxu0
        %v2782 = vadd.f32 %v2723, %v2781
        %2783 = vmatmul.bf16.gmra.mxu0 %v2759
        %v2784 = vpop.f32.mrf.mxu0
        %v2785 = vadd.f32 %v2727, %v2784
        %v2786 = vpop.f32.mrf.mxu0
        %v2787 = vadd.f32 %v2731, %v2786
        %2788 = vmatmul.bf16.gmra.mxu0 %v2760
        %v2789 = vpop.f32.mrf.mxu0
        %v2790 = vadd.f32 %v2735, %v2789
        %v2791 = vpop.f32.mrf.mxu0
        %v2792 = vadd.f32 %v2739, %v2791
        %2793 = vdwg.mxu0
        %v2794 = vtanh.pop %v2775
        %v2795 = vtanh.pop %v2777
        %v2796 = vtanh.pop %v2780
        %v2797 = vtanh.pop %v2782
        %v2798 = vxor.u32 %v2785, 2147483648
        %v2799 = vxor.u32 %v2787, 2147483648
        %v2800 = vxor.u32 %v2790, 2147483648
        %v2801 = vxor.u32 %v2792, 2147483648
        %v2802 = vmul.f32 %v2798, 1.442695
        %v2803 = vpow.pop %v2802
        %v2804 = vmul.f32 %v2799, 1.442695
        %v2805 = vpow.pop %v2804
        %v2806 = vmul.f32 %v2800, 1.442695
        %v2807 = vpow.pop %v2806
        %v2808 = vmul.f32 %v2801, 1.442695
        %v2809 = vpow.pop %v2808
        %v2810 = vadd.f32 %v2803, 1.0
        %v2811 = vadd.f32 %v2805, 1.0
        %v2812 = vadd.f32 %v2807, 1.0
        %v2813 = vadd.f32 %v2809, 1.0
        %v2814 = vrcp.pop %v2810
        %v2815 = vmul.f32 %v2810, %v2814
        %v2816 = vsub.f32 1.0, %v2815
        %v2817 = vmul.f32 %v2814, %v2816
        %v2818 = vadd.f32 %v2814, %v2817
        %vm2819 = vweird.f32 %v2810
        %vm2820 = vweird.f32 %v2814
        %vm2821 = vmor %vm2819, %vm2820
        %v2822 = vsel %vm2821, %v2814, %v2818
        %v2823 = vand.u32 2147483647, %v2810
        %vm2824 = vcmp.eq.f32.partialorder %v2823, 8.507059e+37
        %v2825 = vand.u32 %v2810, 2147483648
        %v2826 = vor.u32 1.1754944e-38, %v2825
        %v2827 = vsel %vm2824, %v2826, %v2822
        %v2828 = vmul.f32 1.0, %v2827
        %v2829 = vrcp.pop %v2811
        %v2830 = vmul.f32 %v2811, %v2829
        %v2831 = vsub.f32 1.0, %v2830
        %v2832 = vmul.f32 %v2829, %v2831
        %v2833 = vadd.f32 %v2829, %v2832
        %vm2834 = vweird.f32 %v2811
        %vm2835 = vweird.f32 %v2829
        %vm2836 = vmor %vm2834, %vm2835
        %v2837 = vsel %vm2836, %v2829, %v2833
        %v2838 = vand.u32 2147483647, %v2811
        %vm2839 = vcmp.eq.f32.partialorder %v2838, 8.507059e+37
        %v2840 = vand.u32 %v2811, 2147483648
        %v2841 = vor.u32 1.1754944e-38, %v2840
        %v2842 = vsel %vm2839, %v2841, %v2837
        %v2843 = vmul.f32 1.0, %v2842
        %v2844 = vrcp.pop %v2812
        %v2845 = vmul.f32 %v2812, %v2844
        %v2846 = vsub.f32 1.0, %v2845
        %v2847 = vmul.f32 %v2844, %v2846
        %v2848 = vadd.f32 %v2844, %v2847
        %vm2849 = vweird.f32 %v2812
        %vm2850 = vweird.f32 %v2844
        %vm2851 = vmor %vm2849, %vm2850
        %v2852 = vsel %vm2851, %v2844, %v2848
        %v2853 = vand.u32 2147483647, %v2812
        %vm2854 = vcmp.eq.f32.partialorder %v2853, 8.507059e+37
        %v2855 = vand.u32 %v2812, 2147483648
        %v2856 = vor.u32 1.1754944e-38, %v2855
        %v2857 = vsel %vm2854, %v2856, %v2852
        %v2858 = vmul.f32 1.0, %v2857
        %v2859 = vrcp.pop %v2813
        %v2860 = vmul.f32 %v2813, %v2859
        %v2861 = vsub.f32 1.0, %v2860
        %v2862 = vmul.f32 %v2859, %v2861
        %v2863 = vadd.f32 %v2859, %v2862
        %vm2864 = vweird.f32 %v2813
        %vm2865 = vweird.f32 %v2859
        %vm2866 = vmor %vm2864, %vm2865
        %v2867 = vsel %vm2866, %v2859, %v2863
        %v2868 = vand.u32 2147483647, %v2813
        %vm2869 = vcmp.eq.f32.partialorder %v2868, 8.507059e+37
        %v2870 = vand.u32 %v2813, 2147483648
        %v2871 = vor.u32 1.1754944e-38, %v2870
        %v2872 = vsel %vm2869, %v2871, %v2867
        %v2873 = vmul.f32 1.0, %v2872
        %v2874 = vmul.f32 %v2794, %v2828
        %v2875 = vmul.f32 %v2795, %v2843
        %v2876 = vmul.f32 %v2796, %v2858
        %v2877 = vmul.f32 %v2797, %v2873
        %v2878 = vmul.f32 %v2874, %v654
        %v2879 = vmul.f32 %v2875, %v654
        %v2880 = vmul.f32 %v2876, %v654
        %v2881 = vmul.f32 %v2877, %v654
        %v2882 = vadd.f32 %v2604, %v2878
        %v2883 = vadd.f32 %v2605, %v2879
        %v2884 = vadd.f32 %v2606, %v2880
        %v2885 = vadd.f32 %v2607, %v2881
        %v2886 = vmul.f32 %v2882, 0.5
        %v2887 = vmul.f32 %v2883, 0.5
        %v2888 = vmul.f32 %v2884, 0.5
        %v2889 = vmul.f32 %v2885, 0.5
        %v2890 = vxor.u32 %v2886, 2147483648
        %v2891 = vxor.u32 %v2887, 2147483648
        %v2892 = vxor.u32 %v2888, 2147483648
        %v2893 = vxor.u32 %v2889, 2147483648
        %v2894 = vmul.f32 %v2890, 1.442695
        %v2895 = vpow.pop %v2894
        %v2896 = vmul.f32 %v2891, 1.442695
        %v2897 = vpow.pop %v2896
        %v2898 = vmul.f32 %v2892, 1.442695
        %v2899 = vpow.pop %v2898
        %v2900 = vmul.f32 %v2893, 1.442695
        %v2901 = vpow.pop %v2900
        %v2902 = vadd.f32 %v2895, 1.0
        %v2903 = vadd.f32 %v2897, 1.0
        %v2904 = vadd.f32 %v2899, 1.0
        %v2905 = vadd.f32 %v2901, 1.0
        %v2906 = vrcp.pop %v2902
        %v2907 = vmul.f32 %v2902, %v2906
        %v2908 = vsub.f32 1.0, %v2907
        %v2909 = vmul.f32 %v2906, %v2908
        %v2910 = vadd.f32 %v2906, %v2909
        %vm2911 = vweird.f32 %v2902
        %vm2912 = vweird.f32 %v2906
        %vm2913 = vmor %vm2911, %vm2912
        %v2914 = vsel %vm2913, %v2906, %v2910
        %v2915 = vand.u32 2147483647, %v2902
        %vm2916 = vcmp.eq.f32.partialorder %v2915, 8.507059e+37
        %v2917 = vand.u32 %v2902, 2147483648
        %v2918 = vor.u32 1.1754944e-38, %v2917
        %v2919 = vsel %vm2916, %v2918, %v2914
        %v2920 = vmul.f32 1.0, %v2919
        %v2921 = vrcp.pop %v2903
        %v2922 = vmul.f32 %v2903, %v2921
        %v2923 = vsub.f32 1.0, %v2922
        %v2924 = vmul.f32 %v2921, %v2923
        %v2925 = vadd.f32 %v2921, %v2924
        %vm2926 = vweird.f32 %v2903
        %vm2927 = vweird.f32 %v2921
        %vm2928 = vmor %vm2926, %vm2927
        %v2929 = vsel %vm2928, %v2921, %v2925
        %v2930 = vand.u32 2147483647, %v2903
        %vm2931 = vcmp.eq.f32.partialorder %v2930, 8.507059e+37
        %v2932 = vand.u32 %v2903, 2147483648
        %v2933 = vor.u32 1.1754944e-38, %v2932
        %v2934 = vsel %vm2931, %v2933, %v2929
        %v2935 = vmul.f32 1.0, %v2934
        %v2936 = vrcp.pop %v2904
        %v2937 = vmul.f32 %v2904, %v2936
        %v2938 = vsub.f32 1.0, %v2937
        %v2939 = vmul.f32 %v2936, %v2938
        %v2940 = vadd.f32 %v2936, %v2939
        %vm2941 = vweird.f32 %v2904
        %vm2942 = vweird.f32 %v2936
        %vm2943 = vmor %vm2941, %vm2942
        %v2944 = vsel %vm2943, %v2936, %v2940
        %v2945 = vand.u32 2147483647, %v2904
        %vm2946 = vcmp.eq.f32.partialorder %v2945, 8.507059e+37
        %v2947 = vand.u32 %v2904, 2147483648
        %v2948 = vor.u32 1.1754944e-38, %v2947
        %v2949 = vsel %vm2946, %v2948, %v2944
        %v2950 = vmul.f32 1.0, %v2949
        %v2951 = vrcp.pop %v2905
        %v2952 = vmul.f32 %v2905, %v2951
        %v2953 = vsub.f32 1.0, %v2952
        %v2954 = vmul.f32 %v2951, %v2953
        %v2955 = vadd.f32 %v2951, %v2954
        %vm2956 = vweird.f32 %v2905
        %vm2957 = vweird.f32 %v2951
        %vm2958 = vmor %vm2956, %vm2957
        %v2959 = vsel %vm2958, %v2951, %v2955
        %v2960 = vand.u32 2147483647, %v2905
        %vm2961 = vcmp.eq.f32.partialorder %v2960, 8.507059e+37
        %v2962 = vand.u32 %v2905, 2147483648
        %v2963 = vor.u32 1.1754944e-38, %v2962
        %v2964 = vsel %vm2961, %v2963, %v2959
        %v2965 = vmul.f32 1.0, %v2964
        %v2966 = vmul.f32 %v2886, %v2920
        %v2967 = vmul.f32 %v2887, %v2935
        %v2968 = vmul.f32 %v2888, %v2950
        %v2969 = vmul.f32 %v2889, %v2965
        %v2970 = vld [vmem:[%s18] sm:$0xf]
        %v2971 = vpack.c.bf16 %v2967, %v2966
        %v2972 = vpack.c.bf16 %v2969, %v2968
        %v2973 = vld [vmem:[%s19] sm:$0xff]
        %2975 = vset.pattern.permute.xlu0 0
        %2976 = vperm.xlu0 %2975, %v2973
        %v2977 = vpop.permute.xlu0 %2976
        %v2980 = vsel %vm1155, %v2970, 0
        %2982 = vmatpush.bf16.msra.mxu0 0
        %2983 = vmatpush.bf16.msra.mxu0 0
        %2984 = vmatpush.bf16.msra.mxu0 0
        %2985 = vmatpush.bf16.msra.mxu0 0
        %2986 = vmatpush.bf16.msra.mxu0 0
        %2987 = vmatpush.bf16.msra.mxu0 0
        %2988 = vmatpush.bf16.msra.mxu0 %v2972
        %2989 = vmatpush.bf16.msra.mxu0 %v2971
        %2990 = vmatmul.bf16.gmra.mxu0 %v2980
        %v2991 = vpop.f32.mrf.mxu0
        %v2992 = vadd.f32 %v2977, %v2991
        %v2993 = vpop.f32.mrf.mxu0
        %2994 = vdwg.mxu0
        %v2995 = vmul.f32 %v2992, %v654
        %2996 = vst.msk [vmem:[%s632] sm:$0xff] %vm736, %v2995
        %s2997 = sand.u32 %s464, 1
        %s2998 = scalar_lea.sflag [#allocation7], %s2997
        %s2999 = sand.u32 %s464, 1
        %s3000 = smul.addr %s2999, 8
        %s3001 = scalar_lea.vmem [#allocation6], %s3000
        // Predicated region
        $region97: #{diffusion_network_forward.1} parent=95 // pred_check
          %p3002 = pneg %p474
        $region98: #{diffusion_network_forward.1} parent=95 // pred_check_branch
          %3004 = sbr.rel (%p3002) target = $region100
        $region99: #{diffusion_network_forward.1} parent=95 // pred_region
          %3006 = vsyncadd %s2998, 0
          %s3007 = smul.addr %s42, 8
          %s3008 = scalar_lea.hbm %s20, %s3007
          %s3010 = sshll.u32 %s3001, 4
          %s3011 = int_to_ptr.vmem [resolvable:$true] %s3010
          %s3012 = sshll.u32 %s3008, 4
          %s3013 = int_to_ptr.hbm [resolvable:$true] %s3012
          %3015 = dma.vmem_to_hbm [thread:$0]  %s3011, 128, %s3013, %s2998
        $region100: #{diffusion_network_forward.1} parent=95 // pred_fallthru
          _
      $region96: #{diffusion_network_forward.1} parent=5 // pred_fallthru
        _
      %p3016 = scmp.le.s32.totalorder 2, %s37
      // Predicated region
      $region101: #{diffusion_network_forward.1} parent=5 // pred_check
        %p3017 = pneg %p3016
      $region102: #{diffusion_network_forward.1} parent=5 // pred_check_branch
        %3019 = sbr.rel (%p3017) target = $region104
      $region103: #{diffusion_network_forward.1} parent=5 // pred_region
        %s3020 = ssub.s32 %s37, 2
        // Predicated region
        $region105: #{diffusion_network_forward.1} parent=103 // pred_check
          %p3021 = pneg %p480
        $region106: #{diffusion_network_forward.1} parent=103 // pred_check_branch
          %3023 = sbr.rel (%p3021) target = $region108
        $region107: #{diffusion_network_forward.1} parent=103 // pred_region
          %s3024 = sand.u32 %s465, 1
          %s3025 = scalar_lea.sflag [#allocation7], %s3024
          %s3026 = sand.u32 %s465, 1
          %s3027 = smul.addr %s3026, 8
          %s3028 = scalar_lea.vmem [#allocation6], %s3027
          %3030 = dma.done %s3025, 128
        $region108: #{diffusion_network_forward.1} parent=103 // pred_fallthru
          _
      $region104: #{diffusion_network_forward.1} parent=5 // pred_fallthru
        _
    $region6: #{diffusion_network_forward.1} parent=1 // loop_footer
      %s41 = sadd.s32 1, %s37
    $region7: #{diffusion_network_forward.1} parent=1 // loop_footer_branch
      %36 = sbr.rel target = $region3
    $region8: #{diffusion_network_forward.1} parent=1 // loop_exit
      _
    %3031 = vsyncpa [#allocation7], 1
    %s3032 = scalar_lea.sflag [#allocation7], 1
    %3033 = vsyncpa %s3032, 1

</llo_original>
